<compile_context>
chip_gen: v7x
topology: tpu7x:2x2x1
jax: 0.10.0
libtpu: 0.0.40
codegen_flags: <defaults>
</compile_context>

<pallas_src>
import jax
import jax.numpy as jnp
from jax.experimental import pallas as pl
from jax.experimental.pallas import tpu as pltpu

latent_size = 32          # module references a global `latent_size`
_LATENT_PAD = 128         # zero-pad the bottleneck to a full lane vreg (exact)
_FEAT = 784               # 28*28 MNIST features
_FEAT_PAD = 896           # 7 * 128: lane-dense feature axis (exact zero padding)


def _vmem_budget():
    """Pick (max batch tile, vmem limit) from the generation's VMEM capacity."""
    try:
        cap = pltpu.get_tpu_info().vmem_capacity_bytes
    except Exception:
        cap = 64 << 20
    if cap >= (96 << 20):            # v5e / v6e: 128 MiB physical VMEM
        return 2048, 96 << 20
    return 1024, 56 << 20            # v7x: 64 MiB per TensorCore


_TB_MAX, _VMEM_LIMIT = _vmem_budget()


def _ae_kernel(x_ref,
               w1_ref, b1_ref, w2_ref, b2_ref, w3_ref, b3_ref,
               w4_ref, b4_ref, w5_ref, b5_ref, w6_ref, b6_ref,
               out_ref):
    """Fused encoder+decoder MLP for one (TB, 896) batch tile (bf16 input)."""

    def dense(h_bf16, w_ref, b_ref):
        # bf16 x bf16 MXU matmul with f32 accumulation; bias add in f32.
        return jnp.dot(h_bf16, w_ref[...],
                       preferred_element_type=jnp.float32) + b_ref[...]

    def relu_bf16(acc_f32):
        # ReLU commutes exactly with the bf16 cast; keep activations bf16 so
        # the next MXU input needs no extra VPU cast and temporaries stay small.
        return jnp.maximum(acc_f32, 0.0).astype(jnp.bfloat16)

    h = x_ref[...]                                       # (TB, 896) bf16

    # ---- encoder ----
    h = relu_bf16(dense(h, w1_ref, b1_ref))              # 896 -> 512
    h = relu_bf16(dense(h, w2_ref, b2_ref))              # 512 -> 256
    z = dense(h, w3_ref, b3_ref).astype(jnp.bfloat16)    # 256 -> 128 (32 + pad)

    # ---- decoder ----
    h = relu_bf16(dense(z, w4_ref, b4_ref))              # 128 -> 256
    h = relu_bf16(dense(h, w5_ref, b5_ref))              # 256 -> 512
    logits = dense(h, w6_ref, b6_ref)                    # 512 -> 896, f32

    # Sigmoid via tanh: a single EUP op per element, f32 (works on v5e too).
    out_ref[...] = (0.5 * jnp.tanh(0.5 * logits) + 0.5).astype(out_ref.dtype)


def _round_up(x, m):
    return ((x + m - 1) // m) * m


@jax.jit
def ae_forward(x, params):
    """x: anything that flattens to [B, 784] (e.g. MNIST NCHW [B, 1, 28, 28])."""
    xf = x.reshape(-1, _FEAT)
    B = xf.shape[0]

    # Batch tile: multiple of 8 sublanes, capped by the per-generation budget.
    TB = min(_TB_MAX, _round_up(B, 8))
    B_pad = _round_up(B, TB)
    num_tiles = B_pad // TB

    # bf16 input, zero-padded batch rows and feature columns (both exact).
    xf = jnp.pad(xf.astype(jnp.bfloat16),
                 ((0, B_pad - B), (0, _FEAT_PAD - _FEAT)))

    (w1, b1), (w2, b2), (w3, b3), (w4, b4), (w5, b5), (w6, b6) = params

    # Feature padding 784 -> 896: zero rows of w1 / zero columns of w6, b6.
    w1 = jnp.pad(w1, ((0, _FEAT_PAD - _FEAT), (0, 0)))
    w6 = jnp.pad(w6, ((0, 0), (0, _FEAT_PAD - _FEAT)))
    b6 = jnp.pad(b6, ((0, 0), (0, _FEAT_PAD - _FEAT)))

    # Latent padding 32 -> 128 lanes (exact: zero columns/rows).
    lpad = _LATENT_PAD - latent_size
    w3 = jnp.pad(w3, ((0, 0), (0, lpad)))
    b3 = jnp.pad(b3, ((0, 0), (0, lpad)))
    w4 = jnp.pad(w4, ((0, lpad), (0, 0)))

    weights = [w.astype(jnp.bfloat16) for w in (w1, w2, w3, w4, w5, w6)]
    biases = [b.astype(jnp.float32) for b in (b1, b2, b3, b4, b5, b6)]

    operands = [xf]
    in_specs = [pl.BlockSpec((TB, _FEAT_PAD), lambda i: (i, 0))]

    def const_spec(shape):
        # Full-array block whose index does not depend on the grid step, so the
        # weight/bias stays VMEM-resident across batch tiles.
        return pl.BlockSpec(shape, lambda i: (0, 0))

    for w, b in zip(weights, biases):
        operands += [w, b]
        in_specs += [const_spec(w.shape), const_spec(b.shape)]

    out_spec = pl.BlockSpec((TB, _FEAT_PAD), lambda i: (i, 0))

    dims = [(_FEAT_PAD, 512), (512, 256), (256, _LATENT_PAD),
            (_LATENT_PAD, 256), (256, 512), (512, _FEAT_PAD)]
    flops = 2 * B_pad * sum(fi * fo for fi, fo in dims)
    bytes_accessed = (B_pad * _FEAT_PAD * (2 + 4)                # bf16 in + f32 out
                      + sum(w.size * 2 for w in weights)         # bf16 weights
                      + sum(b.size * 4 for b in biases))         # f32 biases
    cost = pl.CostEstimate(flops=flops,
                           transcendentals=B_pad * _FEAT_PAD,    # one tanh / elem
                           bytes_accessed=bytes_accessed)

    out = pl.pallas_call(
        _ae_kernel,
        out_shape=jax.ShapeDtypeStruct((B_pad, _FEAT_PAD), jnp.float32),
        grid=(num_tiles,),
        in_specs=in_specs,
        out_specs=out_spec,
        compiler_params=pltpu.CompilerParams(
            dimension_semantics=("parallel",),
            vmem_limit_bytes=_VMEM_LIMIT),
        cost_estimate=cost,
    )(*operands)
    return out[:B, :_FEAT]


def init_params(key):
    """PyTorch-style init: U(-1/sqrt(fan_in), 1/sqrt(fan_in)).
    Weights stored (in, out); biases stored (1, out) to stay 2-D on TPU."""
    dims = [(784, 512), (512, 256), (256, latent_size),
            (latent_size, 256), (256, 512), (512, 784)]
    params = []
    for (fan_in, fan_out) in dims:
        key, kw, kb = jax.random.split(key, 3)
        bound = 1.0 / jnp.sqrt(jnp.float32(fan_in))
        w = jax.random.uniform(kw, (fan_in, fan_out), jnp.float32, -bound, bound)
        b = jax.random.uniform(kb, (1, fan_out), jnp.float32, -bound, bound)
        params.append((w, b))
    return params


def _reference_forward(x, params):
    """Pure-JAX reference mirroring the kernel numerics (bf16 operands, f32
    accumulation, sigmoid epilogue)."""
    h = x.reshape(-1, 784).astype(jnp.float32)
    relu_after = (True, True, False, True, True, False)
    for (w, b), do_relu in zip(params, relu_after):
        h = jnp.dot(h.astype(jnp.bfloat16), w.astype(jnp.bfloat16),
                    preferred_element_type=jnp.float32) + b
        if do_relu:
            h = jnp.maximum(h, 0.0)
    return jax.nn.sigmoid(h)


if __name__ == "__main__":
    key = jax.random.PRNGKey(0)
    key, kx = jax.random.split(key)

    # MNIST-like NCHW input: batch=2, channels=1, 28x28 -> flattened to 784.
    x = jax.random.normal(kx, (2, 1, 28, 28), dtype=jnp.float32)

    params = init_params(key)

    out = ae_forward(x, params)
    out = jax.block_until_ready(out)

    ref = _reference_forward(x, params)
    assert out.shape == (2, 784)
    assert jnp.allclose(out, ref, atol=2e-3, rtol=2e-3)

    print("KERNEL_OK")
</pallas_src>

<mosaic_0001>
module attributes {stable_mosaic.version = 11 : i64} {
  func.func @_ae_kernel(%arg0: i32, %arg1: memref<8x896xbf16, #tpu.memory_space<vmem>>, %arg2: memref<896x512xbf16, #tpu.memory_space<vmem>>, %arg3: memref<1x512xf32, #tpu.memory_space<vmem>>, %arg4: memref<512x256xbf16, #tpu.memory_space<vmem>>, %arg5: memref<1x256xf32, #tpu.memory_space<vmem>>, %arg6: memref<256x128xbf16, #tpu.memory_space<vmem>>, %arg7: memref<1x128xf32, #tpu.memory_space<vmem>>, %arg8: memref<128x256xbf16, #tpu.memory_space<vmem>>, %arg9: memref<1x256xf32, #tpu.memory_space<vmem>>, %arg10: memref<256x512xbf16, #tpu.memory_space<vmem>>, %arg11: memref<1x512xf32, #tpu.memory_space<vmem>>, %arg12: memref<512x896xbf16, #tpu.memory_space<vmem>>, %arg13: memref<1x896xf32, #tpu.memory_space<vmem>>, %arg14: memref<8x896xf32, #tpu.memory_space<vmem>>) attributes {dimension_semantics = [#tpu.dimension_semantics<parallel>], iteration_bounds = array<i64: 1>, scalar_prefetch = 0 : i64, scratch_operands = 0 : i64, tpu.core_type = #tpu.core_type<tc>, window_params = [{transform_indices = @transform_0, window_bounds = array<i64: 8, 896>}, {pipeline_mode = #tpu.pipeline_mode<synchronous>, transform_indices = @transform_1, window_bounds = array<i64: 896, 512>}, {pipeline_mode = #tpu.pipeline_mode<synchronous>, transform_indices = @transform_2, window_bounds = array<i64: 1, 512>}, {pipeline_mode = #tpu.pipeline_mode<synchronous>, transform_indices = @transform_3, window_bounds = array<i64: 512, 256>}, {pipeline_mode = #tpu.pipeline_mode<synchronous>, transform_indices = @transform_4, window_bounds = array<i64: 1, 256>}, {pipeline_mode = #tpu.pipeline_mode<synchronous>, transform_indices = @transform_5, window_bounds = array<i64: 256, 128>}, {pipeline_mode = #tpu.pipeline_mode<synchronous>, transform_indices = @transform_6, window_bounds = array<i64: 1, 128>}, {pipeline_mode = #tpu.pipeline_mode<synchronous>, transform_indices = @transform_7, window_bounds = array<i64: 128, 256>}, {pipeline_mode = #tpu.pipeline_mode<synchronous>, transform_indices = @transform_8, window_bounds = array<i64: 1, 256>}, {pipeline_mode = #tpu.pipeline_mode<synchronous>, transform_indices = @transform_9, window_bounds = array<i64: 256, 512>}, {pipeline_mode = #tpu.pipeline_mode<synchronous>, transform_indices = @transform_10, window_bounds = array<i64: 1, 512>}, {pipeline_mode = #tpu.pipeline_mode<synchronous>, transform_indices = @transform_11, window_bounds = array<i64: 512, 896>}, {pipeline_mode = #tpu.pipeline_mode<synchronous>, transform_indices = @transform_12, window_bounds = array<i64: 1, 896>}, {transform_indices = @transform_13, window_bounds = array<i64: 8, 896>}]} {
    %c0 = arith.constant 0 : index
    %c0_0 = arith.constant 0 : index
    %0 = vector.load %arg1[%c0, %c0_0] : memref<8x896xbf16, #tpu.memory_space<vmem>>, vector<8x896xbf16>
    %c0_1 = arith.constant 0 : index
    %c0_2 = arith.constant 0 : index
    %1 = vector.load %arg2[%c0_1, %c0_2] : memref<896x512xbf16, #tpu.memory_space<vmem>>, vector<896x512xbf16>
    %cst = arith.constant dense<0.000000e+00> : vector<8x512xf32>
    %2 = tpu.matmul %0, %1, %cst {dimension_numbers = #tpu.dot_dimension_numbers<[1], [0], [0], [1], [0, 0, 1, 1], [], []>} : vector<8x896xbf16>, vector<896x512xbf16>, vector<8x512xf32> -> vector<8x512xf32>
    %c0_3 = arith.constant 0 : index
    %c0_4 = arith.constant 0 : index
    %3 = vector.load %arg3[%c0_3, %c0_4] : memref<1x512xf32, #tpu.memory_space<vmem>>, vector<1x512xf32>
    %4 = vector.broadcast %3 : vector<1x512xf32> to vector<8x512xf32>
    %5 = arith.addf %2, %4 : vector<8x512xf32>
    %cst_5 = arith.constant 0.000000e+00 : f32
    %6 = vector.broadcast %cst_5 : f32 to vector<8x512xf32>
    %7 = arith.maximumf %5, %6 : vector<8x512xf32>
    %8 = arith.truncf %7 : vector<8x512xf32> to vector<8x512xbf16>
    %c0_6 = arith.constant 0 : index
    %c0_7 = arith.constant 0 : index
    %9 = vector.load %arg4[%c0_6, %c0_7] : memref<512x256xbf16, #tpu.memory_space<vmem>>, vector<512x256xbf16>
    %cst_8 = arith.constant dense<0.000000e+00> : vector<8x256xf32>
    %10 = tpu.matmul %8, %9, %cst_8 {dimension_numbers = #tpu.dot_dimension_numbers<[1], [0], [0], [1], [0, 0, 1, 1], [], []>} : vector<8x512xbf16>, vector<512x256xbf16>, vector<8x256xf32> -> vector<8x256xf32>
    %c0_9 = arith.constant 0 : index
    %c0_10 = arith.constant 0 : index
    %11 = vector.load %arg5[%c0_9, %c0_10] : memref<1x256xf32, #tpu.memory_space<vmem>>, vector<1x256xf32>
    %12 = vector.broadcast %11 : vector<1x256xf32> to vector<8x256xf32>
    %13 = arith.addf %10, %12 : vector<8x256xf32>
    %cst_11 = arith.constant 0.000000e+00 : f32
    %14 = vector.broadcast %cst_11 : f32 to vector<8x256xf32>
    %15 = arith.maximumf %13, %14 : vector<8x256xf32>
    %16 = arith.truncf %15 : vector<8x256xf32> to vector<8x256xbf16>
    %c0_12 = arith.constant 0 : index
    %c0_13 = arith.constant 0 : index
    %17 = vector.load %arg6[%c0_12, %c0_13] : memref<256x128xbf16, #tpu.memory_space<vmem>>, vector<256x128xbf16>
    %cst_14 = arith.constant dense<0.000000e+00> : vector<8x128xf32>
    %18 = tpu.matmul %16, %17, %cst_14 {dimension_numbers = #tpu.dot_dimension_numbers<[1], [0], [0], [1], [0, 0, 1, 1], [], []>} : vector<8x256xbf16>, vector<256x128xbf16>, vector<8x128xf32> -> vector<8x128xf32>
    %c0_15 = arith.constant 0 : index
    %c0_16 = arith.constant 0 : index
    %19 = vector.load %arg7[%c0_15, %c0_16] : memref<1x128xf32, #tpu.memory_space<vmem>>, vector<1x128xf32>
    %20 = vector.broadcast %19 : vector<1x128xf32> to vector<8x128xf32>
    %21 = arith.addf %18, %20 : vector<8x128xf32>
    %22 = arith.truncf %21 : vector<8x128xf32> to vector<8x128xbf16>
    %c0_17 = arith.constant 0 : index
    %c0_18 = arith.constant 0 : index
    %23 = vector.load %arg8[%c0_17, %c0_18] : memref<128x256xbf16, #tpu.memory_space<vmem>>, vector<128x256xbf16>
    %cst_19 = arith.constant dense<0.000000e+00> : vector<8x256xf32>
    %24 = tpu.matmul %22, %23, %cst_19 {dimension_numbers = #tpu.dot_dimension_numbers<[1], [0], [0], [1], [0, 0, 1, 1], [], []>} : vector<8x128xbf16>, vector<128x256xbf16>, vector<8x256xf32> -> vector<8x256xf32>
    %c0_20 = arith.constant 0 : index
    %c0_21 = arith.constant 0 : index
    %25 = vector.load %arg9[%c0_20, %c0_21] : memref<1x256xf32, #tpu.memory_space<vmem>>, vector<1x256xf32>
    %26 = vector.broadcast %25 : vector<1x256xf32> to vector<8x256xf32>
    %27 = arith.addf %24, %26 : vector<8x256xf32>
    %cst_22 = arith.constant 0.000000e+00 : f32
    %28 = vector.broadcast %cst_22 : f32 to vector<8x256xf32>
    %29 = arith.maximumf %27, %28 : vector<8x256xf32>
    %30 = arith.truncf %29 : vector<8x256xf32> to vector<8x256xbf16>
    %c0_23 = arith.constant 0 : index
    %c0_24 = arith.constant 0 : index
    %31 = vector.load %arg10[%c0_23, %c0_24] : memref<256x512xbf16, #tpu.memory_space<vmem>>, vector<256x512xbf16>
    %cst_25 = arith.constant dense<0.000000e+00> : vector<8x512xf32>
    %32 = tpu.matmul %30, %31, %cst_25 {dimension_numbers = #tpu.dot_dimension_numbers<[1], [0], [0], [1], [0, 0, 1, 1], [], []>} : vector<8x256xbf16>, vector<256x512xbf16>, vector<8x512xf32> -> vector<8x512xf32>
    %c0_26 = arith.constant 0 : index
    %c0_27 = arith.constant 0 : index
    %33 = vector.load %arg11[%c0_26, %c0_27] : memref<1x512xf32, #tpu.memory_space<vmem>>, vector<1x512xf32>
    %34 = vector.broadcast %33 : vector<1x512xf32> to vector<8x512xf32>
    %35 = arith.addf %32, %34 : vector<8x512xf32>
    %cst_28 = arith.constant 0.000000e+00 : f32
    %36 = vector.broadcast %cst_28 : f32 to vector<8x512xf32>
    %37 = arith.maximumf %35, %36 : vector<8x512xf32>
    %38 = arith.truncf %37 : vector<8x512xf32> to vector<8x512xbf16>
    %c0_29 = arith.constant 0 : index
    %c0_30 = arith.constant 0 : index
    %39 = vector.load %arg12[%c0_29, %c0_30] : memref<512x896xbf16, #tpu.memory_space<vmem>>, vector<512x896xbf16>
    %cst_31 = arith.constant dense<0.000000e+00> : vector<8x896xf32>
    %40 = tpu.matmul %38, %39, %cst_31 {dimension_numbers = #tpu.dot_dimension_numbers<[1], [0], [0], [1], [0, 0, 1, 1], [], []>} : vector<8x512xbf16>, vector<512x896xbf16>, vector<8x896xf32> -> vector<8x896xf32>
    %c0_32 = arith.constant 0 : index
    %c0_33 = arith.constant 0 : index
    %41 = vector.load %arg13[%c0_32, %c0_33] : memref<1x896xf32, #tpu.memory_space<vmem>>, vector<1x896xf32>
    %42 = vector.broadcast %41 : vector<1x896xf32> to vector<8x896xf32>
    %43 = arith.addf %40, %42 : vector<8x896xf32>
    %cst_34 = arith.constant 5.000000e-01 : f32
    %44 = vector.broadcast %cst_34 : f32 to vector<8x896xf32>
    %45 = arith.mulf %44, %43 : vector<8x896xf32>
    %46 = math.tanh %45 : vector<8x896xf32>
    %cst_35 = arith.constant 5.000000e-01 : f32
    %47 = vector.broadcast %cst_35 : f32 to vector<8x896xf32>
    %48 = arith.mulf %47, %46 : vector<8x896xf32>
    %cst_36 = arith.constant 5.000000e-01 : f32
    %49 = vector.broadcast %cst_36 : f32 to vector<8x896xf32>
    %50 = arith.addf %48, %49 : vector<8x896xf32>
    %c0_37 = arith.constant 0 : index
    %c0_38 = arith.constant 0 : index
    %51 = vector.load %arg14[%c0_37, %c0_38] : memref<8x896xf32, #tpu.memory_space<vmem>>, vector<8x896xf32>
    tpu.vector_store %arg14[%c0_37, %c0_38], %50 {strides = array<i32>} : memref<8x896xf32, #tpu.memory_space<vmem>>, vector<8x896xf32>,
    return
  }
  func.func @transform_0(%arg0: i32) -> (i32, i32) {
    %c0_i32 = arith.constant 0 : i32
    %c0_i32_0 = arith.constant 0 : i32
    return %arg0, %c0_i32 : i32, i32
  }
  func.func @transform_1(%arg0: i32) -> (i32, i32) {
    %c0_i32 = arith.constant 0 : i32
    %c0_i32_0 = arith.constant 0 : i32
    %c0_i32_1 = arith.constant 0 : i32
    return %c0_i32, %c0_i32_0 : i32, i32
  }
  func.func @transform_2(%arg0: i32) -> (i32, i32) {
    %c0_i32 = arith.constant 0 : i32
    %c0_i32_0 = arith.constant 0 : i32
    %c0_i32_1 = arith.constant 0 : i32
    return %c0_i32, %c0_i32_0 : i32, i32
  }
  func.func @transform_3(%arg0: i32) -> (i32, i32) {
    %c0_i32 = arith.constant 0 : i32
    %c0_i32_0 = arith.constant 0 : i32
    %c0_i32_1 = arith.constant 0 : i32
    return %c0_i32, %c0_i32_0 : i32, i32
  }
  func.func @transform_4(%arg0: i32) -> (i32, i32) {
    %c0_i32 = arith.constant 0 : i32
    %c0_i32_0 = arith.constant 0 : i32
    %c0_i32_1 = arith.constant 0 : i32
    return %c0_i32, %c0_i32_0 : i32, i32
  }
  func.func @transform_5(%arg0: i32) -> (i32, i32) {
    %c0_i32 = arith.constant 0 : i32
    %c0_i32_0 = arith.constant 0 : i32
    %c0_i32_1 = arith.constant 0 : i32
    return %c0_i32, %c0_i32_0 : i32, i32
  }
  func.func @transform_6(%arg0: i32) -> (i32, i32) {
    %c0_i32 = arith.constant 0 : i32
    %c0_i32_0 = arith.constant 0 : i32
    %c0_i32_1 = arith.constant 0 : i32
    return %c0_i32, %c0_i32_0 : i32, i32
  }
  func.func @transform_7(%arg0: i32) -> (i32, i32) {
    %c0_i32 = arith.constant 0 : i32
    %c0_i32_0 = arith.constant 0 : i32
    %c0_i32_1 = arith.constant 0 : i32
    return %c0_i32, %c0_i32_0 : i32, i32
  }
  func.func @transform_8(%arg0: i32) -> (i32, i32) {
    %c0_i32 = arith.constant 0 : i32
    %c0_i32_0 = arith.constant 0 : i32
    %c0_i32_1 = arith.constant 0 : i32
    return %c0_i32, %c0_i32_0 : i32, i32
  }
  func.func @transform_9(%arg0: i32) -> (i32, i32) {
    %c0_i32 = arith.constant 0 : i32
    %c0_i32_0 = arith.constant 0 : i32
    %c0_i32_1 = arith.constant 0 : i32
    return %c0_i32, %c0_i32_0 : i32, i32
  }
  func.func @transform_10(%arg0: i32) -> (i32, i32) {
    %c0_i32 = arith.constant 0 : i32
    %c0_i32_0 = arith.constant 0 : i32
    %c0_i32_1 = arith.constant 0 : i32
    return %c0_i32, %c0_i32_0 : i32, i32
  }
  func.func @transform_11(%arg0: i32) -> (i32, i32) {
    %c0_i32 = arith.constant 0 : i32
    %c0_i32_0 = arith.constant 0 : i32
    %c0_i32_1 = arith.constant 0 : i32
    return %c0_i32, %c0_i32_0 : i32, i32
  }
  func.func @transform_12(%arg0: i32) -> (i32, i32) {
    %c0_i32 = arith.constant 0 : i32
    %c0_i32_0 = arith.constant 0 : i32
    %c0_i32_1 = arith.constant 0 : i32
    return %c0_i32, %c0_i32_0 : i32, i32
  }
  func.func @transform_13(%arg0: i32) -> (i32, i32) {
    %c0_i32 = arith.constant 0 : i32
    %c0_i32_0 = arith.constant 0 : i32
    return %arg0, %c0_i32 : i32, i32
  }
}

</mosaic_0001>

<llo_original>
// kernel: ae_forward.1
$region0: #{ae_forward.1}
  #allocation0 [shape = 'u32[]', space=smem, size = 0x4, offset = 0x4, fixed_abs, tag = 'smem constant byte address 0x4 - core index']
  #allocation1 [shape = 'u32[144,128]{1,0:T(1,128)}', space=vmem, size = 0x12000, scoped, tag = 'internal scratch']
  %s0 = inlined_call_operand.vmem [shape: bf16[8,896], index: 0, kind: input, shape index: {}]
  %s1 = inlined_call_operand.vmem [shape: bf16[896,512], index: 1, kind: input, shape index: {}]
  %s2 = inlined_call_operand.vmem [shape: f32[1,512], index: 2, kind: input, shape index: {}]
  %s3 = inlined_call_operand.vmem [shape: bf16[512,256], index: 3, kind: input, shape index: {}]
  %s4 = inlined_call_operand.vmem [shape: f32[1,256], index: 4, kind: input, shape index: {}]
  %s5 = inlined_call_operand.vmem [shape: bf16[256,128], index: 5, kind: input, shape index: {}]
  %s6 = inlined_call_operand.vmem [shape: f32[1,128], index: 6, kind: input, shape index: {}]
  %s7 = inlined_call_operand.vmem [shape: bf16[128,256], index: 7, kind: input, shape index: {}]
  %s8 = inlined_call_operand.vmem [shape: f32[1,256], index: 8, kind: input, shape index: {}]
  %s9 = inlined_call_operand.vmem [shape: bf16[256,512], index: 9, kind: input, shape index: {}]
  %s10 = inlined_call_operand.vmem [shape: f32[1,512], index: 10, kind: input, shape index: {}]
  %s11 = inlined_call_operand.vmem [shape: bf16[512,896], index: 11, kind: input, shape index: {}]
  %s12 = inlined_call_operand.vmem [shape: f32[1,896], index: 12, kind: input, shape index: {}]
  %s13 = inlined_call_operand.vmem [shape: f32[8,896], index: 13, kind: output, shape index: {}]
  %s14 = sld [smem:[#allocation0]]
  $region62: #{ae_forward.1} parent=0
    _
  %s16 = ssub.s32 1, %s14
  %s17 = scalar_select 0, %s16, %s14
  // Predicated region
  $region2: #{ae_forward.1} parent=0 // pred_check
    _
  $region3: #{ae_forward.1} parent=0 // pred_check_branch
    %19 = sbr.rel (0) target = $region5
  $region4: #{ae_forward.1} parent=0 // pred_region
    _
  $region5: #{ae_forward.1} parent=0 // pred_fallthru
    _
  // Predicated region
  $region6: #{ae_forward.1} parent=0 // pred_check
    _
  $region7: #{ae_forward.1} parent=0 // pred_check_branch
    %21 = sbr.rel (0) target = $region9
  $region8: #{ae_forward.1} parent=0 // pred_region
    _
  $region9: #{ae_forward.1} parent=0 // pred_fallthru
    _
  // Predicated region
  $region10: #{ae_forward.1} parent=0 // pred_check
    _
  $region11: #{ae_forward.1} parent=0 // pred_check_branch
    %23 = sbr.rel (0) target = $region13
  $region12: #{ae_forward.1} parent=0 // pred_region
    _
  $region13: #{ae_forward.1} parent=0 // pred_fallthru
    _
  // Predicated region
  $region14: #{ae_forward.1} parent=0 // pred_check
    _
  $region15: #{ae_forward.1} parent=0 // pred_check_branch
    %25 = sbr.rel (0) target = $region17
  $region16: #{ae_forward.1} parent=0 // pred_region
    _
  $region17: #{ae_forward.1} parent=0 // pred_fallthru
    _
  // Predicated region
  $region18: #{ae_forward.1} parent=0 // pred_check
    _
  $region19: #{ae_forward.1} parent=0 // pred_check_branch
    %27 = sbr.rel (0) target = $region21
  $region20: #{ae_forward.1} parent=0 // pred_region
    _
  $region21: #{ae_forward.1} parent=0 // pred_fallthru
    _
  // Predicated region
  $region22: #{ae_forward.1} parent=0 // pred_check
    _
  $region23: #{ae_forward.1} parent=0 // pred_check_branch
    %29 = sbr.rel (0) target = $region25
  $region24: #{ae_forward.1} parent=0 // pred_region
    _
  $region25: #{ae_forward.1} parent=0 // pred_fallthru
    _
  // Predicated region
  $region26: #{ae_forward.1} parent=0 // pred_check
    _
  $region27: #{ae_forward.1} parent=0 // pred_check_branch
    %31 = sbr.rel (0) target = $region29
  $region28: #{ae_forward.1} parent=0 // pred_region
    _
  $region29: #{ae_forward.1} parent=0 // pred_fallthru
    _
  // Predicated region
  $region30: #{ae_forward.1} parent=0 // pred_check
    _
  $region31: #{ae_forward.1} parent=0 // pred_check_branch
    %33 = sbr.rel (0) target = $region33
  $region32: #{ae_forward.1} parent=0 // pred_region
    _
  $region33: #{ae_forward.1} parent=0 // pred_fallthru
    _
  // Predicated region
  $region34: #{ae_forward.1} parent=0 // pred_check
    _
  $region35: #{ae_forward.1} parent=0 // pred_check_branch
    %35 = sbr.rel (0) target = $region37
  $region36: #{ae_forward.1} parent=0 // pred_region
    _
  $region37: #{ae_forward.1} parent=0 // pred_fallthru
    _
  // Predicated region
  $region38: #{ae_forward.1} parent=0 // pred_check
    _
  $region39: #{ae_forward.1} parent=0 // pred_check_branch
    %37 = sbr.rel (0) target = $region41
  $region40: #{ae_forward.1} parent=0 // pred_region
    _
  $region41: #{ae_forward.1} parent=0 // pred_fallthru
    _
  // Predicated region
  $region42: #{ae_forward.1} parent=0 // pred_check
    _
  $region43: #{ae_forward.1} parent=0 // pred_check_branch
    %39 = sbr.rel (0) target = $region45
  $region44: #{ae_forward.1} parent=0 // pred_region
    _
  $region45: #{ae_forward.1} parent=0 // pred_fallthru
    _
  // Predicated region
  $region46: #{ae_forward.1} parent=0 // pred_check
    _
  $region47: #{ae_forward.1} parent=0 // pred_check_branch
    %41 = sbr.rel (0) target = $region49
  $region48: #{ae_forward.1} parent=0 // pred_region
    _
  $region49: #{ae_forward.1} parent=0 // pred_fallthru
    _
  // Predicated region
  $region50: #{ae_forward.1} parent=0 // pred_check
    _
  $region51: #{ae_forward.1} parent=0 // pred_check_branch
    %43 = sbr.rel (0) target = $region53
  $region52: #{ae_forward.1} parent=0 // pred_region
    _
  $region53: #{ae_forward.1} parent=0 // pred_fallthru
    _
  %v45 = vld [vmem:[%s0] sm:$0xff]
  %v46 = vld [vmem:[%s0 + $0x8] sm:$0xff]
  %v47 = vld [vmem:[%s0 + $0x10] sm:$0xff]
  %v48 = vld [vmem:[%s0 + $0x18] sm:$0xf]
  %v49 = vld [vmem:[%s1] sm:$0xff]
  %v50 = vld [vmem:[%s1 + $0x8] sm:$0xff]
  %v51 = vld [vmem:[%s1 + $0x10] sm:$0xff]
  %v52 = vld [vmem:[%s1 + $0x18] sm:$0xff]
  %v53 = vld [vmem:[%s1 + $0x20] sm:$0xff]
  %v54 = vld [vmem:[%s1 + $0x28] sm:$0xff]
  %v55 = vld [vmem:[%s1 + $0x30] sm:$0xff]
  %v56 = vld [vmem:[%s1 + $0x38] sm:$0xff]
  %v57 = vld [vmem:[%s1 + $0x40] sm:$0xff]
  %v58 = vld [vmem:[%s1 + $0x48] sm:$0xff]
  %v59 = vld [vmem:[%s1 + $0x50] sm:$0xff]
  %v60 = vld [vmem:[%s1 + $0x58] sm:$0xff]
  %v61 = vld [vmem:[%s1 + $0x60] sm:$0xff]
  %v62 = vld [vmem:[%s1 + $0x68] sm:$0xff]
  %v63 = vld [vmem:[%s1 + $0x70] sm:$0xff]
  %v64 = vld [vmem:[%s1 + $0x78] sm:$0xff]
  %v65 = vld [vmem:[%s1 + $0x80] sm:$0xff]
  %v66 = vld [vmem:[%s1 + $0x88] sm:$0xff]
  %v67 = vld [vmem:[%s1 + $0x90] sm:$0xff]
  %v68 = vld [vmem:[%s1 + $0x98] sm:$0xff]
  %v69 = vld [vmem:[%s1 + $0xa0] sm:$0xff]
  %v70 = vld [vmem:[%s1 + $0xa8] sm:$0xff]
  %v71 = vld [vmem:[%s1 + $0xb0] sm:$0xff]
  %v72 = vld [vmem:[%s1 + $0xb8] sm:$0xff]
  %v73 = vld [vmem:[%s1 + $0xc0] sm:$0xff]
  %v74 = vld [vmem:[%s1 + $0xc8] sm:$0xff]
  %v75 = vld [vmem:[%s1 + $0xd0] sm:$0xff]
  %v76 = vld [vmem:[%s1 + $0xd8] sm:$0xff]
  %v77 = vld [vmem:[%s1 + $0xe0] sm:$0xff]
  %v78 = vld [vmem:[%s1 + $0xe8] sm:$0xff]
  %v79 = vld [vmem:[%s1 + $0xf0] sm:$0xff]
  %v80 = vld [vmem:[%s1 + $0xf8] sm:$0xff]
  %v81 = vld [vmem:[%s1 + $0x100] sm:$0xff]
  %v82 = vld [vmem:[%s1 + $0x108] sm:$0xff]
  %v83 = vld [vmem:[%s1 + $0x110] sm:$0xff]
  %v84 = vld [vmem:[%s1 + $0x118] sm:$0xff]
  %v85 = vld [vmem:[%s1 + $0x120] sm:$0xff]
  %v86 = vld [vmem:[%s1 + $0x128] sm:$0xff]
  %v87 = vld [vmem:[%s1 + $0x130] sm:$0xff]
  %v88 = vld [vmem:[%s1 + $0x138] sm:$0xff]
  %v89 = vld [vmem:[%s1 + $0x140] sm:$0xff]
  %v90 = vld [vmem:[%s1 + $0x148] sm:$0xff]
  %v91 = vld [vmem:[%s1 + $0x150] sm:$0xff]
  %v92 = vld [vmem:[%s1 + $0x158] sm:$0xff]
  %v93 = vld [vmem:[%s1 + $0x160] sm:$0xff]
  %v94 = vld [vmem:[%s1 + $0x168] sm:$0xff]
  %v95 = vld [vmem:[%s1 + $0x170] sm:$0xff]
  %v96 = vld [vmem:[%s1 + $0x178] sm:$0xff]
  %v97 = vld [vmem:[%s1 + $0x180] sm:$0xff]
  %v98 = vld [vmem:[%s1 + $0x188] sm:$0xff]
  %v99 = vld [vmem:[%s1 + $0x190] sm:$0xff]
  %v100 = vld [vmem:[%s1 + $0x198] sm:$0xff]
  %v101 = vld [vmem:[%s1 + $0x1a0] sm:$0xff]
  %v102 = vld [vmem:[%s1 + $0x1a8] sm:$0xff]
  %v103 = vld [vmem:[%s1 + $0x1b0] sm:$0xff]
  %v104 = vld [vmem:[%s1 + $0x1b8] sm:$0xff]
  %v105 = vld [vmem:[%s1 + $0x1c0] sm:$0xff]
  %v106 = vld [vmem:[%s1 + $0x1c8] sm:$0xff]
  %v107 = vld [vmem:[%s1 + $0x1d0] sm:$0xff]
  %v108 = vld [vmem:[%s1 + $0x1d8] sm:$0xff]
  %v109 = vld [vmem:[%s1 + $0x1e0] sm:$0xff]
  %v110 = vld [vmem:[%s1 + $0x1e8] sm:$0xff]
  %v111 = vld [vmem:[%s1 + $0x1f0] sm:$0xff]
  %v112 = vld [vmem:[%s1 + $0x1f8] sm:$0xff]
  %v113 = vld [vmem:[%s1 + $0x200] sm:$0xff]
  %v114 = vld [vmem:[%s1 + $0x208] sm:$0xff]
  %v115 = vld [vmem:[%s1 + $0x210] sm:$0xff]
  %v116 = vld [vmem:[%s1 + $0x218] sm:$0xff]
  %v117 = vld [vmem:[%s1 + $0x220] sm:$0xff]
  %v118 = vld [vmem:[%s1 + $0x228] sm:$0xff]
  %v119 = vld [vmem:[%s1 + $0x230] sm:$0xff]
  %v120 = vld [vmem:[%s1 + $0x238] sm:$0xff]
  %v121 = vld [vmem:[%s1 + $0x240] sm:$0xff]
  %v122 = vld [vmem:[%s1 + $0x248] sm:$0xff]
  %v123 = vld [vmem:[%s1 + $0x250] sm:$0xff]
  %v124 = vld [vmem:[%s1 + $0x258] sm:$0xff]
  %v125 = vld [vmem:[%s1 + $0x260] sm:$0xff]
  %v126 = vld [vmem:[%s1 + $0x268] sm:$0xff]
  %v127 = vld [vmem:[%s1 + $0x270] sm:$0xff]
  %v128 = vld [vmem:[%s1 + $0x278] sm:$0xff]
  %v129 = vld [vmem:[%s1 + $0x280] sm:$0xff]
  %v130 = vld [vmem:[%s1 + $0x288] sm:$0xff]
  %v131 = vld [vmem:[%s1 + $0x290] sm:$0xff]
  %v132 = vld [vmem:[%s1 + $0x298] sm:$0xff]
  %v133 = vld [vmem:[%s1 + $0x2a0] sm:$0xff]
  %v134 = vld [vmem:[%s1 + $0x2a8] sm:$0xff]
  %v135 = vld [vmem:[%s1 + $0x2b0] sm:$0xff]
  %v136 = vld [vmem:[%s1 + $0x2b8] sm:$0xff]
  %v137 = vld [vmem:[%s1 + $0x2c0] sm:$0xff]
  %v138 = vld [vmem:[%s1 + $0x2c8] sm:$0xff]
  %v139 = vld [vmem:[%s1 + $0x2d0] sm:$0xff]
  %v140 = vld [vmem:[%s1 + $0x2d8] sm:$0xff]
  %v141 = vld [vmem:[%s1 + $0x2e0] sm:$0xff]
  %v142 = vld [vmem:[%s1 + $0x2e8] sm:$0xff]
  %v143 = vld [vmem:[%s1 + $0x2f0] sm:$0xff]
  %v144 = vld [vmem:[%s1 + $0x2f8] sm:$0xff]
  %v145 = vld [vmem:[%s1 + $0x300] sm:$0xff]
  %v146 = vld [vmem:[%s1 + $0x308] sm:$0xff]
  %v147 = vld [vmem:[%s1 + $0x310] sm:$0xff]
  %v148 = vld [vmem:[%s1 + $0x318] sm:$0xff]
  %v149 = vld [vmem:[%s1 + $0x320] sm:$0xff]
  %v150 = vld [vmem:[%s1 + $0x328] sm:$0xff]
  %v151 = vld [vmem:[%s1 + $0x330] sm:$0xff]
  %v152 = vld [vmem:[%s1 + $0x338] sm:$0xff]
  %v153 = vld [vmem:[%s1 + $0x340] sm:$0xff]
  %v154 = vld [vmem:[%s1 + $0x348] sm:$0xff]
  %v155 = vld [vmem:[%s1 + $0x350] sm:$0xff]
  %v156 = vld [vmem:[%s1 + $0x358] sm:$0xff]
  %v157 = vld [vmem:[%s1 + $0x360] sm:$0xff]
  %v158 = vld [vmem:[%s1 + $0x368] sm:$0xff]
  %v159 = vld [vmem:[%s1 + $0x370] sm:$0xff]
  %v160 = vld [vmem:[%s1 + $0x378] sm:$0xff]
  %v161 = vld [vmem:[%s1 + $0x380] sm:$0xff]
  %v162 = vld [vmem:[%s1 + $0x388] sm:$0xff]
  %v163 = vld [vmem:[%s1 + $0x390] sm:$0xff]
  %v164 = vld [vmem:[%s1 + $0x398] sm:$0xff]
  %v165 = vld [vmem:[%s1 + $0x3a0] sm:$0xff]
  %v166 = vld [vmem:[%s1 + $0x3a8] sm:$0xff]
  %v167 = vld [vmem:[%s1 + $0x3b0] sm:$0xff]
  %v168 = vld [vmem:[%s1 + $0x3b8] sm:$0xff]
  %v169 = vld [vmem:[%s1 + $0x3c0] sm:$0xff]
  %v170 = vld [vmem:[%s1 + $0x3c8] sm:$0xff]
  %v171 = vld [vmem:[%s1 + $0x3d0] sm:$0xff]
  %v172 = vld [vmem:[%s1 + $0x3d8] sm:$0xff]
  %v173 = vld [vmem:[%s1 + $0x3e0] sm:$0xff]
  %v174 = vld [vmem:[%s1 + $0x3e8] sm:$0xff]
  %v175 = vld [vmem:[%s1 + $0x3f0] sm:$0xff]
  %v176 = vld [vmem:[%s1 + $0x3f8] sm:$0xff]
  %v177 = vld [vmem:[%s1 + $0x400] sm:$0xff]
  %v178 = vld [vmem:[%s1 + $0x408] sm:$0xff]
  %v179 = vld [vmem:[%s1 + $0x410] sm:$0xff]
  %v180 = vld [vmem:[%s1 + $0x418] sm:$0xff]
  %v181 = vld [vmem:[%s1 + $0x420] sm:$0xff]
  %v182 = vld [vmem:[%s1 + $0x428] sm:$0xff]
  %v183 = vld [vmem:[%s1 + $0x430] sm:$0xff]
  %v184 = vld [vmem:[%s1 + $0x438] sm:$0xff]
  %v185 = vld [vmem:[%s1 + $0x440] sm:$0xff]
  %v186 = vld [vmem:[%s1 + $0x448] sm:$0xff]
  %v187 = vld [vmem:[%s1 + $0x450] sm:$0xff]
  %v188 = vld [vmem:[%s1 + $0x458] sm:$0xff]
  %v189 = vld [vmem:[%s1 + $0x460] sm:$0xff]
  %v190 = vld [vmem:[%s1 + $0x468] sm:$0xff]
  %v191 = vld [vmem:[%s1 + $0x470] sm:$0xff]
  %v192 = vld [vmem:[%s1 + $0x478] sm:$0xff]
  %v193 = vld [vmem:[%s1 + $0x480] sm:$0xff]
  %v194 = vld [vmem:[%s1 + $0x488] sm:$0xff]
  %v195 = vld [vmem:[%s1 + $0x490] sm:$0xff]
  %v196 = vld [vmem:[%s1 + $0x498] sm:$0xff]
  %v197 = vld [vmem:[%s1 + $0x4a0] sm:$0xff]
  %v198 = vld [vmem:[%s1 + $0x4a8] sm:$0xff]
  %v199 = vld [vmem:[%s1 + $0x4b0] sm:$0xff]
  %v200 = vld [vmem:[%s1 + $0x4b8] sm:$0xff]
  %v201 = vld [vmem:[%s1 + $0x4c0] sm:$0xff]
  %v202 = vld [vmem:[%s1 + $0x4c8] sm:$0xff]
  %v203 = vld [vmem:[%s1 + $0x4d0] sm:$0xff]
  %v204 = vld [vmem:[%s1 + $0x4d8] sm:$0xff]
  %v205 = vld [vmem:[%s1 + $0x4e0] sm:$0xff]
  %v206 = vld [vmem:[%s1 + $0x4e8] sm:$0xff]
  %v207 = vld [vmem:[%s1 + $0x4f0] sm:$0xff]
  %v208 = vld [vmem:[%s1 + $0x4f8] sm:$0xff]
  %v209 = vld [vmem:[%s1 + $0x500] sm:$0xff]
  %v210 = vld [vmem:[%s1 + $0x508] sm:$0xff]
  %v211 = vld [vmem:[%s1 + $0x510] sm:$0xff]
  %v212 = vld [vmem:[%s1 + $0x518] sm:$0xff]
  %v213 = vld [vmem:[%s1 + $0x520] sm:$0xff]
  %v214 = vld [vmem:[%s1 + $0x528] sm:$0xff]
  %v215 = vld [vmem:[%s1 + $0x530] sm:$0xff]
  %v216 = vld [vmem:[%s1 + $0x538] sm:$0xff]
  %v217 = vld [vmem:[%s1 + $0x540] sm:$0xff]
  %v218 = vld [vmem:[%s1 + $0x548] sm:$0xff]
  %v219 = vld [vmem:[%s1 + $0x550] sm:$0xff]
  %v220 = vld [vmem:[%s1 + $0x558] sm:$0xff]
  %v221 = vld [vmem:[%s1 + $0x560] sm:$0xff]
  %v222 = vld [vmem:[%s1 + $0x568] sm:$0xff]
  %v223 = vld [vmem:[%s1 + $0x570] sm:$0xff]
  %v224 = vld [vmem:[%s1 + $0x578] sm:$0xff]
  %v225 = vld [vmem:[%s1 + $0x580] sm:$0xff]
  %v226 = vld [vmem:[%s1 + $0x588] sm:$0xff]
  %v227 = vld [vmem:[%s1 + $0x590] sm:$0xff]
  %v228 = vld [vmem:[%s1 + $0x598] sm:$0xff]
  %v229 = vld [vmem:[%s1 + $0x5a0] sm:$0xff]
  %v230 = vld [vmem:[%s1 + $0x5a8] sm:$0xff]
  %v231 = vld [vmem:[%s1 + $0x5b0] sm:$0xff]
  %v232 = vld [vmem:[%s1 + $0x5b8] sm:$0xff]
  %v233 = vld [vmem:[%s1 + $0x5c0] sm:$0xff]
  %v234 = vld [vmem:[%s1 + $0x5c8] sm:$0xff]
  %v235 = vld [vmem:[%s1 + $0x5d0] sm:$0xff]
  %v236 = vld [vmem:[%s1 + $0x5d8] sm:$0xff]
  %v237 = vld [vmem:[%s1 + $0x5e0] sm:$0xff]
  %v238 = vld [vmem:[%s1 + $0x5e8] sm:$0xff]
  %v239 = vld [vmem:[%s1 + $0x5f0] sm:$0xff]
  %v240 = vld [vmem:[%s1 + $0x5f8] sm:$0xff]
  %v241 = vld [vmem:[%s1 + $0x600] sm:$0xff]
  %v242 = vld [vmem:[%s1 + $0x608] sm:$0xff]
  %v243 = vld [vmem:[%s1 + $0x610] sm:$0xff]
  %v244 = vld [vmem:[%s1 + $0x618] sm:$0xff]
  %v245 = vld [vmem:[%s1 + $0x620] sm:$0xff]
  %v246 = vld [vmem:[%s1 + $0x628] sm:$0xff]
  %v247 = vld [vmem:[%s1 + $0x630] sm:$0xff]
  %v248 = vld [vmem:[%s1 + $0x638] sm:$0xff]
  %v249 = vld [vmem:[%s1 + $0x640] sm:$0xff]
  %v250 = vld [vmem:[%s1 + $0x648] sm:$0xff]
  %v251 = vld [vmem:[%s1 + $0x650] sm:$0xff]
  %v252 = vld [vmem:[%s1 + $0x658] sm:$0xff]
  %v253 = vld [vmem:[%s1 + $0x660] sm:$0xff]
  %v254 = vld [vmem:[%s1 + $0x668] sm:$0xff]
  %v255 = vld [vmem:[%s1 + $0x670] sm:$0xff]
  %v256 = vld [vmem:[%s1 + $0x678] sm:$0xff]
  %v257 = vld [vmem:[%s1 + $0x680] sm:$0xff]
  %v258 = vld [vmem:[%s1 + $0x688] sm:$0xff]
  %v259 = vld [vmem:[%s1 + $0x690] sm:$0xff]
  %v260 = vld [vmem:[%s1 + $0x698] sm:$0xff]
  %v261 = vld [vmem:[%s1 + $0x6a0] sm:$0xff]
  %v262 = vld [vmem:[%s1 + $0x6a8] sm:$0xff]
  %v263 = vld [vmem:[%s1 + $0x6b0] sm:$0xff]
  %v264 = vld [vmem:[%s1 + $0x6b8] sm:$0xff]
  %v265 = vld [vmem:[%s1 + $0x6c0] sm:$0xff]
  %v266 = vld [vmem:[%s1 + $0x6c8] sm:$0xff]
  %v267 = vld [vmem:[%s1 + $0x6d0] sm:$0xff]
  %v268 = vld [vmem:[%s1 + $0x6d8] sm:$0xff]
  %v269 = vld [vmem:[%s1 + $0x6e0] sm:$0xff]
  %v270 = vld [vmem:[%s1 + $0x6e8] sm:$0xff]
  %v271 = vld [vmem:[%s1 + $0x6f0] sm:$0xff]
  %v272 = vld [vmem:[%s1 + $0x6f8] sm:$0xff]
  %v273 = vld [vmem:[%s2] sm:$0xf]
  %v275 = vlaneseq
  %v276 = vshrl.u32 %v275, 7
  %v277 = vsub.s32 0, %v276
  %v278 = vrot.slane %v273, %v277
  %v279 = vlaneseq
  %v280 = vshrl.u32 %v279, 7
  %v281 = vsub.s32 1, %v280
  %v282 = vrot.slane %v273, %v281
  %v283 = vlaneseq
  %v284 = vshrl.u32 %v283, 7
  %v285 = vsub.s32 2, %v284
  %v286 = vrot.slane %v273, %v285
  %v287 = vlaneseq
  %v288 = vshrl.u32 %v287, 7
  %v289 = vsub.s32 3, %v288
  %v290 = vrot.slane %v273, %v289
  %v299 = vunpack.c.l.b16 %v45
  %v300 = vunpack.c.h.b16 %v45
  %v301 = vunpack.c.l.b16 %v46
  %v302 = vunpack.c.h.b16 %v46
  %v303 = vunpack.c.l.b16 %v47
  %v304 = vunpack.c.h.b16 %v47
  %v305 = vunpack.c.l.b16 %v48
  %v306 = vpack.c.b16 %v299, %v299
  %v307 = vpack.c.b16 %v300, %v300
  %v308 = vpack.c.b16 %v301, %v301
  %v309 = vpack.c.b16 %v302, %v302
  %v310 = vpack.c.b16 %v303, %v303
  %v311 = vpack.c.b16 %v304, %v304
  %v312 = vpack.c.b16 %v305, %v305
  %v544 = vunpack.c.l.b16 %v49
  %v545 = vunpack.c.h.b16 %v49
  %v546 = vunpack.c.l.b16 %v50
  %v547 = vunpack.c.h.b16 %v50
  %v548 = vunpack.c.l.b16 %v51
  %v549 = vunpack.c.h.b16 %v51
  %v550 = vunpack.c.l.b16 %v52
  %v551 = vunpack.c.h.b16 %v52
  %v552 = vunpack.c.l.b16 %v53
  %v553 = vunpack.c.h.b16 %v53
  %v554 = vunpack.c.l.b16 %v54
  %v555 = vunpack.c.h.b16 %v54
  %v556 = vunpack.c.l.b16 %v55
  %v557 = vunpack.c.h.b16 %v55
  %v558 = vunpack.c.l.b16 %v56
  %v559 = vunpack.c.h.b16 %v56
  %v560 = vunpack.c.l.b16 %v57
  %v561 = vunpack.c.h.b16 %v57
  %v562 = vunpack.c.l.b16 %v58
  %v563 = vunpack.c.h.b16 %v58
  %v564 = vunpack.c.l.b16 %v59
  %v565 = vunpack.c.h.b16 %v59
  %v566 = vunpack.c.l.b16 %v60
  %v567 = vunpack.c.h.b16 %v60
  %v568 = vunpack.c.l.b16 %v61
  %v569 = vunpack.c.h.b16 %v61
  %v570 = vunpack.c.l.b16 %v62
  %v571 = vunpack.c.h.b16 %v62
  %v572 = vunpack.c.l.b16 %v63
  %v573 = vunpack.c.h.b16 %v63
  %v574 = vunpack.c.l.b16 %v64
  %v575 = vunpack.c.h.b16 %v64
  %v576 = vunpack.c.l.b16 %v65
  %v577 = vunpack.c.h.b16 %v65
  %v578 = vunpack.c.l.b16 %v66
  %v579 = vunpack.c.h.b16 %v66
  %v580 = vunpack.c.l.b16 %v67
  %v581 = vunpack.c.h.b16 %v67
  %v582 = vunpack.c.l.b16 %v68
  %v583 = vunpack.c.h.b16 %v68
  %v584 = vunpack.c.l.b16 %v69
  %v585 = vunpack.c.h.b16 %v69
  %v586 = vunpack.c.l.b16 %v70
  %v587 = vunpack.c.h.b16 %v70
  %v588 = vunpack.c.l.b16 %v71
  %v589 = vunpack.c.h.b16 %v71
  %v590 = vunpack.c.l.b16 %v72
  %v591 = vunpack.c.h.b16 %v72
  %v592 = vunpack.c.l.b16 %v73
  %v593 = vunpack.c.h.b16 %v73
  %v594 = vunpack.c.l.b16 %v74
  %v595 = vunpack.c.h.b16 %v74
  %v596 = vunpack.c.l.b16 %v75
  %v597 = vunpack.c.h.b16 %v75
  %v598 = vunpack.c.l.b16 %v76
  %v599 = vunpack.c.h.b16 %v76
  %v600 = vunpack.c.l.b16 %v77
  %v601 = vunpack.c.h.b16 %v77
  %v602 = vunpack.c.l.b16 %v78
  %v603 = vunpack.c.h.b16 %v78
  %v604 = vunpack.c.l.b16 %v79
  %v605 = vunpack.c.h.b16 %v79
  %v606 = vunpack.c.l.b16 %v80
  %v607 = vunpack.c.h.b16 %v80
  %v608 = vunpack.c.l.b16 %v81
  %v609 = vunpack.c.h.b16 %v81
  %v610 = vunpack.c.l.b16 %v82
  %v611 = vunpack.c.h.b16 %v82
  %v612 = vunpack.c.l.b16 %v83
  %v613 = vunpack.c.h.b16 %v83
  %v614 = vunpack.c.l.b16 %v84
  %v615 = vunpack.c.h.b16 %v84
  %v616 = vunpack.c.l.b16 %v85
  %v617 = vunpack.c.h.b16 %v85
  %v618 = vunpack.c.l.b16 %v86
  %v619 = vunpack.c.h.b16 %v86
  %v620 = vunpack.c.l.b16 %v87
  %v621 = vunpack.c.h.b16 %v87
  %v622 = vunpack.c.l.b16 %v88
  %v623 = vunpack.c.h.b16 %v88
  %v624 = vunpack.c.l.b16 %v89
  %v625 = vunpack.c.h.b16 %v89
  %v626 = vunpack.c.l.b16 %v90
  %v627 = vunpack.c.h.b16 %v90
  %v628 = vunpack.c.l.b16 %v91
  %v629 = vunpack.c.h.b16 %v91
  %v630 = vunpack.c.l.b16 %v92
  %v631 = vunpack.c.h.b16 %v92
  %v632 = vunpack.c.l.b16 %v93
  %v633 = vunpack.c.h.b16 %v93
  %v634 = vunpack.c.l.b16 %v94
  %v635 = vunpack.c.h.b16 %v94
  %v636 = vunpack.c.l.b16 %v95
  %v637 = vunpack.c.h.b16 %v95
  %v638 = vunpack.c.l.b16 %v96
  %v639 = vunpack.c.h.b16 %v96
  %v640 = vunpack.c.l.b16 %v97
  %v641 = vunpack.c.h.b16 %v97
  %v642 = vunpack.c.l.b16 %v98
  %v643 = vunpack.c.h.b16 %v98
  %v644 = vunpack.c.l.b16 %v99
  %v645 = vunpack.c.h.b16 %v99
  %v646 = vunpack.c.l.b16 %v100
  %v647 = vunpack.c.h.b16 %v100
  %v648 = vunpack.c.l.b16 %v101
  %v649 = vunpack.c.h.b16 %v101
  %v650 = vunpack.c.l.b16 %v102
  %v651 = vunpack.c.h.b16 %v102
  %v652 = vunpack.c.l.b16 %v103
  %v653 = vunpack.c.h.b16 %v103
  %v654 = vunpack.c.l.b16 %v104
  %v655 = vunpack.c.h.b16 %v104
  %v656 = vunpack.c.l.b16 %v105
  %v657 = vunpack.c.h.b16 %v105
  %v658 = vunpack.c.l.b16 %v106
  %v659 = vunpack.c.h.b16 %v106
  %v660 = vunpack.c.l.b16 %v107
  %v661 = vunpack.c.h.b16 %v107
  %v662 = vunpack.c.l.b16 %v108
  %v663 = vunpack.c.h.b16 %v108
  %v664 = vunpack.c.l.b16 %v109
  %v665 = vunpack.c.h.b16 %v109
  %v666 = vunpack.c.l.b16 %v110
  %v667 = vunpack.c.h.b16 %v110
  %v668 = vunpack.c.l.b16 %v111
  %v669 = vunpack.c.h.b16 %v111
  %v670 = vunpack.c.l.b16 %v112
  %v671 = vunpack.c.h.b16 %v112
  %v672 = vunpack.c.l.b16 %v113
  %v673 = vunpack.c.h.b16 %v113
  %v674 = vunpack.c.l.b16 %v114
  %v675 = vunpack.c.h.b16 %v114
  %v676 = vunpack.c.l.b16 %v115
  %v677 = vunpack.c.h.b16 %v115
  %v678 = vunpack.c.l.b16 %v116
  %v679 = vunpack.c.h.b16 %v116
  %v680 = vunpack.c.l.b16 %v117
  %v681 = vunpack.c.h.b16 %v117
  %v682 = vunpack.c.l.b16 %v118
  %v683 = vunpack.c.h.b16 %v118
  %v684 = vunpack.c.l.b16 %v119
  %v685 = vunpack.c.h.b16 %v119
  %v686 = vunpack.c.l.b16 %v120
  %v687 = vunpack.c.h.b16 %v120
  %v688 = vunpack.c.l.b16 %v121
  %v689 = vunpack.c.h.b16 %v121
  %v690 = vunpack.c.l.b16 %v122
  %v691 = vunpack.c.h.b16 %v122
  %v692 = vunpack.c.l.b16 %v123
  %v693 = vunpack.c.h.b16 %v123
  %v694 = vunpack.c.l.b16 %v124
  %v695 = vunpack.c.h.b16 %v124
  %v696 = vunpack.c.l.b16 %v125
  %v697 = vunpack.c.h.b16 %v125
  %v698 = vunpack.c.l.b16 %v126
  %v699 = vunpack.c.h.b16 %v126
  %v700 = vunpack.c.l.b16 %v127
  %v701 = vunpack.c.h.b16 %v127
  %v702 = vunpack.c.l.b16 %v128
  %v703 = vunpack.c.h.b16 %v128
  %v704 = vunpack.c.l.b16 %v129
  %v705 = vunpack.c.h.b16 %v129
  %v706 = vunpack.c.l.b16 %v130
  %v707 = vunpack.c.h.b16 %v130
  %v708 = vunpack.c.l.b16 %v131
  %v709 = vunpack.c.h.b16 %v131
  %v710 = vunpack.c.l.b16 %v132
  %v711 = vunpack.c.h.b16 %v132
  %v712 = vunpack.c.l.b16 %v133
  %v713 = vunpack.c.h.b16 %v133
  %v714 = vunpack.c.l.b16 %v134
  %v715 = vunpack.c.h.b16 %v134
  %v716 = vunpack.c.l.b16 %v135
  %v717 = vunpack.c.h.b16 %v135
  %v718 = vunpack.c.l.b16 %v136
  %v719 = vunpack.c.h.b16 %v136
  %v720 = vunpack.c.l.b16 %v137
  %v721 = vunpack.c.h.b16 %v137
  %v722 = vunpack.c.l.b16 %v138
  %v723 = vunpack.c.h.b16 %v138
  %v724 = vunpack.c.l.b16 %v139
  %v725 = vunpack.c.h.b16 %v139
  %v726 = vunpack.c.l.b16 %v140
  %v727 = vunpack.c.h.b16 %v140
  %v728 = vunpack.c.l.b16 %v141
  %v729 = vunpack.c.h.b16 %v141
  %v730 = vunpack.c.l.b16 %v142
  %v731 = vunpack.c.h.b16 %v142
  %v732 = vunpack.c.l.b16 %v143
  %v733 = vunpack.c.h.b16 %v143
  %v734 = vunpack.c.l.b16 %v144
  %v735 = vunpack.c.h.b16 %v144
  %v736 = vunpack.c.l.b16 %v145
  %v737 = vunpack.c.h.b16 %v145
  %v738 = vunpack.c.l.b16 %v146
  %v739 = vunpack.c.h.b16 %v146
  %v740 = vunpack.c.l.b16 %v147
  %v741 = vunpack.c.h.b16 %v147
  %v742 = vunpack.c.l.b16 %v148
  %v743 = vunpack.c.h.b16 %v148
  %v744 = vunpack.c.l.b16 %v149
  %v745 = vunpack.c.h.b16 %v149
  %v746 = vunpack.c.l.b16 %v150
  %v747 = vunpack.c.h.b16 %v150
  %v748 = vunpack.c.l.b16 %v151
  %v749 = vunpack.c.h.b16 %v151
  %v750 = vunpack.c.l.b16 %v152
  %v751 = vunpack.c.h.b16 %v152
  %v752 = vunpack.c.l.b16 %v153
  %v753 = vunpack.c.h.b16 %v153
  %v754 = vunpack.c.l.b16 %v154
  %v755 = vunpack.c.h.b16 %v154
  %v756 = vunpack.c.l.b16 %v155
  %v757 = vunpack.c.h.b16 %v155
  %v758 = vunpack.c.l.b16 %v156
  %v759 = vunpack.c.h.b16 %v156
  %v760 = vunpack.c.l.b16 %v157
  %v761 = vunpack.c.h.b16 %v157
  %v762 = vunpack.c.l.b16 %v158
  %v763 = vunpack.c.h.b16 %v158
  %v764 = vunpack.c.l.b16 %v159
  %v765 = vunpack.c.h.b16 %v159
  %v766 = vunpack.c.l.b16 %v160
  %v767 = vunpack.c.h.b16 %v160
  %v768 = vunpack.c.l.b16 %v161
  %v769 = vunpack.c.h.b16 %v161
  %v770 = vunpack.c.l.b16 %v162
  %v771 = vunpack.c.h.b16 %v162
  %v772 = vunpack.c.l.b16 %v163
  %v773 = vunpack.c.h.b16 %v163
  %v774 = vunpack.c.l.b16 %v164
  %v775 = vunpack.c.h.b16 %v164
  %v776 = vunpack.c.l.b16 %v165
  %v777 = vunpack.c.h.b16 %v165
  %v778 = vunpack.c.l.b16 %v166
  %v779 = vunpack.c.h.b16 %v166
  %v780 = vunpack.c.l.b16 %v167
  %v781 = vunpack.c.h.b16 %v167
  %v782 = vunpack.c.l.b16 %v168
  %v783 = vunpack.c.h.b16 %v168
  %v784 = vunpack.c.l.b16 %v169
  %v785 = vunpack.c.h.b16 %v169
  %v786 = vunpack.c.l.b16 %v170
  %v787 = vunpack.c.h.b16 %v170
  %v788 = vunpack.c.l.b16 %v171
  %v789 = vunpack.c.h.b16 %v171
  %v790 = vunpack.c.l.b16 %v172
  %v791 = vunpack.c.h.b16 %v172
  %v792 = vunpack.c.l.b16 %v173
  %v793 = vunpack.c.h.b16 %v173
  %v794 = vunpack.c.l.b16 %v174
  %v795 = vunpack.c.h.b16 %v174
  %v796 = vunpack.c.l.b16 %v175
  %v797 = vunpack.c.h.b16 %v175
  %v798 = vunpack.c.l.b16 %v176
  %v799 = vunpack.c.h.b16 %v176
  %v800 = vunpack.c.l.b16 %v177
  %v801 = vunpack.c.h.b16 %v177
  %v802 = vunpack.c.l.b16 %v178
  %v803 = vunpack.c.h.b16 %v178
  %v804 = vunpack.c.l.b16 %v179
  %v805 = vunpack.c.h.b16 %v179
  %v806 = vunpack.c.l.b16 %v180
  %v807 = vunpack.c.h.b16 %v180
  %v808 = vunpack.c.l.b16 %v181
  %v809 = vunpack.c.h.b16 %v181
  %v810 = vunpack.c.l.b16 %v182
  %v811 = vunpack.c.h.b16 %v182
  %v812 = vunpack.c.l.b16 %v183
  %v813 = vunpack.c.h.b16 %v183
  %v814 = vunpack.c.l.b16 %v184
  %v815 = vunpack.c.h.b16 %v184
  %v816 = vunpack.c.l.b16 %v185
  %v817 = vunpack.c.h.b16 %v185
  %v818 = vunpack.c.l.b16 %v186
  %v819 = vunpack.c.h.b16 %v186
  %v820 = vunpack.c.l.b16 %v187
  %v821 = vunpack.c.h.b16 %v187
  %v822 = vunpack.c.l.b16 %v188
  %v823 = vunpack.c.h.b16 %v188
  %v824 = vunpack.c.l.b16 %v189
  %v825 = vunpack.c.h.b16 %v189
  %v826 = vunpack.c.l.b16 %v190
  %v827 = vunpack.c.h.b16 %v190
  %v828 = vunpack.c.l.b16 %v191
  %v829 = vunpack.c.h.b16 %v191
  %v830 = vunpack.c.l.b16 %v192
  %v831 = vunpack.c.h.b16 %v192
  %v832 = vunpack.c.l.b16 %v193
  %v833 = vunpack.c.h.b16 %v193
  %v834 = vunpack.c.l.b16 %v194
  %v835 = vunpack.c.h.b16 %v194
  %v836 = vunpack.c.l.b16 %v195
  %v837 = vunpack.c.h.b16 %v195
  %v838 = vunpack.c.l.b16 %v196
  %v839 = vunpack.c.h.b16 %v196
  %v840 = vunpack.c.l.b16 %v197
  %v841 = vunpack.c.h.b16 %v197
  %v842 = vunpack.c.l.b16 %v198
  %v843 = vunpack.c.h.b16 %v198
  %v844 = vunpack.c.l.b16 %v199
  %v845 = vunpack.c.h.b16 %v199
  %v846 = vunpack.c.l.b16 %v200
  %v847 = vunpack.c.h.b16 %v200
  %v848 = vunpack.c.l.b16 %v201
  %v849 = vunpack.c.h.b16 %v201
  %v850 = vunpack.c.l.b16 %v202
  %v851 = vunpack.c.h.b16 %v202
  %v852 = vunpack.c.l.b16 %v203
  %v853 = vunpack.c.h.b16 %v203
  %v854 = vunpack.c.l.b16 %v204
  %v855 = vunpack.c.h.b16 %v204
  %v856 = vunpack.c.l.b16 %v205
  %v857 = vunpack.c.h.b16 %v205
  %v858 = vunpack.c.l.b16 %v206
  %v859 = vunpack.c.h.b16 %v206
  %v860 = vunpack.c.l.b16 %v207
  %v861 = vunpack.c.h.b16 %v207
  %v862 = vunpack.c.l.b16 %v208
  %v863 = vunpack.c.h.b16 %v208
  %v864 = vunpack.c.l.b16 %v209
  %v865 = vunpack.c.h.b16 %v209
  %v866 = vunpack.c.l.b16 %v210
  %v867 = vunpack.c.h.b16 %v210
  %v868 = vunpack.c.l.b16 %v211
  %v869 = vunpack.c.h.b16 %v211
  %v870 = vunpack.c.l.b16 %v212
  %v871 = vunpack.c.h.b16 %v212
  %v872 = vunpack.c.l.b16 %v213
  %v873 = vunpack.c.h.b16 %v213
  %v874 = vunpack.c.l.b16 %v214
  %v875 = vunpack.c.h.b16 %v214
  %v876 = vunpack.c.l.b16 %v215
  %v877 = vunpack.c.h.b16 %v215
  %v878 = vunpack.c.l.b16 %v216
  %v879 = vunpack.c.h.b16 %v216
  %v880 = vunpack.c.l.b16 %v217
  %v881 = vunpack.c.h.b16 %v217
  %v882 = vunpack.c.l.b16 %v218
  %v883 = vunpack.c.h.b16 %v218
  %v884 = vunpack.c.l.b16 %v219
  %v885 = vunpack.c.h.b16 %v219
  %v886 = vunpack.c.l.b16 %v220
  %v887 = vunpack.c.h.b16 %v220
  %v888 = vunpack.c.l.b16 %v221
  %v889 = vunpack.c.h.b16 %v221
  %v890 = vunpack.c.l.b16 %v222
  %v891 = vunpack.c.h.b16 %v222
  %v892 = vunpack.c.l.b16 %v223
  %v893 = vunpack.c.h.b16 %v223
  %v894 = vunpack.c.l.b16 %v224
  %v895 = vunpack.c.h.b16 %v224
  %v896 = vunpack.c.l.b16 %v225
  %v897 = vunpack.c.h.b16 %v225
  %v898 = vunpack.c.l.b16 %v226
  %v899 = vunpack.c.h.b16 %v226
  %v900 = vunpack.c.l.b16 %v227
  %v901 = vunpack.c.h.b16 %v227
  %v902 = vunpack.c.l.b16 %v228
  %v903 = vunpack.c.h.b16 %v228
  %v904 = vunpack.c.l.b16 %v229
  %v905 = vunpack.c.h.b16 %v229
  %v906 = vunpack.c.l.b16 %v230
  %v907 = vunpack.c.h.b16 %v230
  %v908 = vunpack.c.l.b16 %v231
  %v909 = vunpack.c.h.b16 %v231
  %v910 = vunpack.c.l.b16 %v232
  %v911 = vunpack.c.h.b16 %v232
  %v912 = vunpack.c.l.b16 %v233
  %v913 = vunpack.c.h.b16 %v233
  %v914 = vunpack.c.l.b16 %v234
  %v915 = vunpack.c.h.b16 %v234
  %v916 = vunpack.c.l.b16 %v235
  %v917 = vunpack.c.h.b16 %v235
  %v918 = vunpack.c.l.b16 %v236
  %v919 = vunpack.c.h.b16 %v236
  %v920 = vunpack.c.l.b16 %v237
  %v921 = vunpack.c.h.b16 %v237
  %v922 = vunpack.c.l.b16 %v238
  %v923 = vunpack.c.h.b16 %v238
  %v924 = vunpack.c.l.b16 %v239
  %v925 = vunpack.c.h.b16 %v239
  %v926 = vunpack.c.l.b16 %v240
  %v927 = vunpack.c.h.b16 %v240
  %v928 = vunpack.c.l.b16 %v241
  %v929 = vunpack.c.h.b16 %v241
  %v930 = vunpack.c.l.b16 %v242
  %v931 = vunpack.c.h.b16 %v242
  %v932 = vunpack.c.l.b16 %v243
  %v933 = vunpack.c.h.b16 %v243
  %v934 = vunpack.c.l.b16 %v244
  %v935 = vunpack.c.h.b16 %v244
  %v936 = vunpack.c.l.b16 %v245
  %v937 = vunpack.c.h.b16 %v245
  %v938 = vunpack.c.l.b16 %v246
  %v939 = vunpack.c.h.b16 %v246
  %v940 = vunpack.c.l.b16 %v247
  %v941 = vunpack.c.h.b16 %v247
  %v942 = vunpack.c.l.b16 %v248
  %v943 = vunpack.c.h.b16 %v248
  %v944 = vunpack.c.l.b16 %v249
  %v945 = vunpack.c.h.b16 %v249
  %v946 = vunpack.c.l.b16 %v250
  %v947 = vunpack.c.h.b16 %v250
  %v948 = vunpack.c.l.b16 %v251
  %v949 = vunpack.c.h.b16 %v251
  %v950 = vunpack.c.l.b16 %v252
  %v951 = vunpack.c.h.b16 %v252
  %v952 = vunpack.c.l.b16 %v253
  %v953 = vunpack.c.h.b16 %v253
  %v954 = vunpack.c.l.b16 %v254
  %v955 = vunpack.c.h.b16 %v254
  %v956 = vunpack.c.l.b16 %v255
  %v957 = vunpack.c.h.b16 %v255
  %v958 = vunpack.c.l.b16 %v256
  %v959 = vunpack.c.h.b16 %v256
  %v960 = vunpack.c.l.b16 %v257
  %v961 = vunpack.c.h.b16 %v257
  %v962 = vunpack.c.l.b16 %v258
  %v963 = vunpack.c.h.b16 %v258
  %v964 = vunpack.c.l.b16 %v259
  %v965 = vunpack.c.h.b16 %v259
  %v966 = vunpack.c.l.b16 %v260
  %v967 = vunpack.c.h.b16 %v260
  %v968 = vunpack.c.l.b16 %v261
  %v969 = vunpack.c.h.b16 %v261
  %v970 = vunpack.c.l.b16 %v262
  %v971 = vunpack.c.h.b16 %v262
  %v972 = vunpack.c.l.b16 %v263
  %v973 = vunpack.c.h.b16 %v263
  %v974 = vunpack.c.l.b16 %v264
  %v975 = vunpack.c.h.b16 %v264
  %v976 = vunpack.c.l.b16 %v265
  %v977 = vunpack.c.h.b16 %v265
  %v978 = vunpack.c.l.b16 %v266
  %v979 = vunpack.c.h.b16 %v266
  %v980 = vunpack.c.l.b16 %v267
  %v981 = vunpack.c.h.b16 %v267
  %v982 = vunpack.c.l.b16 %v268
  %v983 = vunpack.c.h.b16 %v268
  %v984 = vunpack.c.l.b16 %v269
  %v985 = vunpack.c.h.b16 %v269
  %v986 = vunpack.c.l.b16 %v270
  %v987 = vunpack.c.h.b16 %v270
  %v988 = vunpack.c.l.b16 %v271
  %v989 = vunpack.c.h.b16 %v271
  %v990 = vunpack.c.l.b16 %v272
  %v991 = vunpack.c.h.b16 %v272
  %v992 = vpack.c.b16 %v548, %v544
  %v993 = vpack.c.b16 %v549, %v545
  %v994 = vpack.c.b16 %v550, %v546
  %v995 = vpack.c.b16 %v551, %v547
  %v996 = vpack.c.b16 %v556, %v552
  %v997 = vpack.c.b16 %v557, %v553
  %v998 = vpack.c.b16 %v558, %v554
  %v999 = vpack.c.b16 %v559, %v555
  %v1000 = vpack.c.b16 %v564, %v560
  %v1001 = vpack.c.b16 %v565, %v561
  %v1002 = vpack.c.b16 %v566, %v562
  %v1003 = vpack.c.b16 %v567, %v563
  %v1004 = vpack.c.b16 %v572, %v568
  %v1005 = vpack.c.b16 %v573, %v569
  %v1006 = vpack.c.b16 %v574, %v570
  %v1007 = vpack.c.b16 %v575, %v571
  %v1008 = vpack.c.b16 %v580, %v576
  %v1009 = vpack.c.b16 %v581, %v577
  %v1010 = vpack.c.b16 %v582, %v578
  %v1011 = vpack.c.b16 %v583, %v579
  %v1012 = vpack.c.b16 %v588, %v584
  %v1013 = vpack.c.b16 %v589, %v585
  %v1014 = vpack.c.b16 %v590, %v586
  %v1015 = vpack.c.b16 %v591, %v587
  %v1016 = vpack.c.b16 %v596, %v592
  %v1017 = vpack.c.b16 %v597, %v593
  %v1018 = vpack.c.b16 %v598, %v594
  %v1019 = vpack.c.b16 %v599, %v595
  %v1020 = vpack.c.b16 %v604, %v600
  %v1021 = vpack.c.b16 %v605, %v601
  %v1022 = vpack.c.b16 %v606, %v602
  %v1023 = vpack.c.b16 %v607, %v603
  %v1024 = vpack.c.b16 %v612, %v608
  %v1025 = vpack.c.b16 %v613, %v609
  %v1026 = vpack.c.b16 %v614, %v610
  %v1027 = vpack.c.b16 %v615, %v611
  %v1028 = vpack.c.b16 %v620, %v616
  %v1029 = vpack.c.b16 %v621, %v617
  %v1030 = vpack.c.b16 %v622, %v618
  %v1031 = vpack.c.b16 %v623, %v619
  %v1032 = vpack.c.b16 %v628, %v624
  %v1033 = vpack.c.b16 %v629, %v625
  %v1034 = vpack.c.b16 %v630, %v626
  %v1035 = vpack.c.b16 %v631, %v627
  %v1036 = vpack.c.b16 %v636, %v632
  %v1037 = vpack.c.b16 %v637, %v633
  %v1038 = vpack.c.b16 %v638, %v634
  %v1039 = vpack.c.b16 %v639, %v635
  %v1040 = vpack.c.b16 %v644, %v640
  %v1041 = vpack.c.b16 %v645, %v641
  %v1042 = vpack.c.b16 %v646, %v642
  %v1043 = vpack.c.b16 %v647, %v643
  %v1044 = vpack.c.b16 %v652, %v648
  %v1045 = vpack.c.b16 %v653, %v649
  %v1046 = vpack.c.b16 %v654, %v650
  %v1047 = vpack.c.b16 %v655, %v651
  %v1048 = vpack.c.b16 %v660, %v656
  %v1049 = vpack.c.b16 %v661, %v657
  %v1050 = vpack.c.b16 %v662, %v658
  %v1051 = vpack.c.b16 %v663, %v659
  %v1052 = vpack.c.b16 %v668, %v664
  %v1053 = vpack.c.b16 %v669, %v665
  %v1054 = vpack.c.b16 %v670, %v666
  %v1055 = vpack.c.b16 %v671, %v667
  %v1056 = vpack.c.b16 %v676, %v672
  %v1057 = vpack.c.b16 %v677, %v673
  %v1058 = vpack.c.b16 %v678, %v674
  %v1059 = vpack.c.b16 %v679, %v675
  %v1060 = vpack.c.b16 %v684, %v680
  %v1061 = vpack.c.b16 %v685, %v681
  %v1062 = vpack.c.b16 %v686, %v682
  %v1063 = vpack.c.b16 %v687, %v683
  %v1064 = vpack.c.b16 %v692, %v688
  %v1065 = vpack.c.b16 %v693, %v689
  %v1066 = vpack.c.b16 %v694, %v690
  %v1067 = vpack.c.b16 %v695, %v691
  %v1068 = vpack.c.b16 %v700, %v696
  %v1069 = vpack.c.b16 %v701, %v697
  %v1070 = vpack.c.b16 %v702, %v698
  %v1071 = vpack.c.b16 %v703, %v699
  %v1072 = vpack.c.b16 %v708, %v704
  %v1073 = vpack.c.b16 %v709, %v705
  %v1074 = vpack.c.b16 %v710, %v706
  %v1075 = vpack.c.b16 %v711, %v707
  %v1076 = vpack.c.b16 %v716, %v712
  %v1077 = vpack.c.b16 %v717, %v713
  %v1078 = vpack.c.b16 %v718, %v714
  %v1079 = vpack.c.b16 %v719, %v715
  %v1080 = vpack.c.b16 %v724, %v720
  %v1081 = vpack.c.b16 %v725, %v721
  %v1082 = vpack.c.b16 %v726, %v722
  %v1083 = vpack.c.b16 %v727, %v723
  %v1084 = vpack.c.b16 %v732, %v728
  %v1085 = vpack.c.b16 %v733, %v729
  %v1086 = vpack.c.b16 %v734, %v730
  %v1087 = vpack.c.b16 %v735, %v731
  %v1088 = vpack.c.b16 %v740, %v736
  %v1089 = vpack.c.b16 %v741, %v737
  %v1090 = vpack.c.b16 %v742, %v738
  %v1091 = vpack.c.b16 %v743, %v739
  %v1092 = vpack.c.b16 %v748, %v744
  %v1093 = vpack.c.b16 %v749, %v745
  %v1094 = vpack.c.b16 %v750, %v746
  %v1095 = vpack.c.b16 %v751, %v747
  %v1096 = vpack.c.b16 %v756, %v752
  %v1097 = vpack.c.b16 %v757, %v753
  %v1098 = vpack.c.b16 %v758, %v754
  %v1099 = vpack.c.b16 %v759, %v755
  %v1100 = vpack.c.b16 %v764, %v760
  %v1101 = vpack.c.b16 %v765, %v761
  %v1102 = vpack.c.b16 %v766, %v762
  %v1103 = vpack.c.b16 %v767, %v763
  %v1104 = vpack.c.b16 %v772, %v768
  %v1105 = vpack.c.b16 %v773, %v769
  %v1106 = vpack.c.b16 %v774, %v770
  %v1107 = vpack.c.b16 %v775, %v771
  %v1108 = vpack.c.b16 %v780, %v776
  %v1109 = vpack.c.b16 %v781, %v777
  %v1110 = vpack.c.b16 %v782, %v778
  %v1111 = vpack.c.b16 %v783, %v779
  %v1112 = vpack.c.b16 %v788, %v784
  %v1113 = vpack.c.b16 %v789, %v785
  %v1114 = vpack.c.b16 %v790, %v786
  %v1115 = vpack.c.b16 %v791, %v787
  %v1116 = vpack.c.b16 %v796, %v792
  %v1117 = vpack.c.b16 %v797, %v793
  %v1118 = vpack.c.b16 %v798, %v794
  %v1119 = vpack.c.b16 %v799, %v795
  %v1120 = vpack.c.b16 %v804, %v800
  %v1121 = vpack.c.b16 %v805, %v801
  %v1122 = vpack.c.b16 %v806, %v802
  %v1123 = vpack.c.b16 %v807, %v803
  %v1124 = vpack.c.b16 %v812, %v808
  %v1125 = vpack.c.b16 %v813, %v809
  %v1126 = vpack.c.b16 %v814, %v810
  %v1127 = vpack.c.b16 %v815, %v811
  %v1128 = vpack.c.b16 %v820, %v816
  %v1129 = vpack.c.b16 %v821, %v817
  %v1130 = vpack.c.b16 %v822, %v818
  %v1131 = vpack.c.b16 %v823, %v819
  %v1132 = vpack.c.b16 %v828, %v824
  %v1133 = vpack.c.b16 %v829, %v825
  %v1134 = vpack.c.b16 %v830, %v826
  %v1135 = vpack.c.b16 %v831, %v827
  %v1136 = vpack.c.b16 %v836, %v832
  %v1137 = vpack.c.b16 %v837, %v833
  %v1138 = vpack.c.b16 %v838, %v834
  %v1139 = vpack.c.b16 %v839, %v835
  %v1140 = vpack.c.b16 %v844, %v840
  %v1141 = vpack.c.b16 %v845, %v841
  %v1142 = vpack.c.b16 %v846, %v842
  %v1143 = vpack.c.b16 %v847, %v843
  %v1144 = vpack.c.b16 %v852, %v848
  %v1145 = vpack.c.b16 %v853, %v849
  %v1146 = vpack.c.b16 %v854, %v850
  %v1147 = vpack.c.b16 %v855, %v851
  %v1148 = vpack.c.b16 %v860, %v856
  %v1149 = vpack.c.b16 %v861, %v857
  %v1150 = vpack.c.b16 %v862, %v858
  %v1151 = vpack.c.b16 %v863, %v859
  %v1152 = vpack.c.b16 %v868, %v864
  %v1153 = vpack.c.b16 %v869, %v865
  %v1154 = vpack.c.b16 %v870, %v866
  %v1155 = vpack.c.b16 %v871, %v867
  %v1156 = vpack.c.b16 %v876, %v872
  %v1157 = vpack.c.b16 %v877, %v873
  %v1158 = vpack.c.b16 %v878, %v874
  %v1159 = vpack.c.b16 %v879, %v875
  %v1160 = vpack.c.b16 %v884, %v880
  %v1161 = vpack.c.b16 %v885, %v881
  %v1162 = vpack.c.b16 %v886, %v882
  %v1163 = vpack.c.b16 %v887, %v883
  %v1164 = vpack.c.b16 %v892, %v888
  %v1165 = vpack.c.b16 %v893, %v889
  %v1166 = vpack.c.b16 %v894, %v890
  %v1167 = vpack.c.b16 %v895, %v891
  %v1168 = vpack.c.b16 %v900, %v896
  %v1169 = vpack.c.b16 %v901, %v897
  %v1170 = vpack.c.b16 %v902, %v898
  %v1171 = vpack.c.b16 %v903, %v899
  %v1172 = vpack.c.b16 %v908, %v904
  %v1173 = vpack.c.b16 %v909, %v905
  %v1174 = vpack.c.b16 %v910, %v906
  %v1175 = vpack.c.b16 %v911, %v907
  %v1176 = vpack.c.b16 %v916, %v912
  %v1177 = vpack.c.b16 %v917, %v913
  %v1178 = vpack.c.b16 %v918, %v914
  %v1179 = vpack.c.b16 %v919, %v915
  %v1180 = vpack.c.b16 %v924, %v920
  %v1181 = vpack.c.b16 %v925, %v921
  %v1182 = vpack.c.b16 %v926, %v922
  %v1183 = vpack.c.b16 %v927, %v923
  %v1184 = vpack.c.b16 %v932, %v928
  %v1185 = vpack.c.b16 %v933, %v929
  %v1186 = vpack.c.b16 %v934, %v930
  %v1187 = vpack.c.b16 %v935, %v931
  %v1188 = vpack.c.b16 %v940, %v936
  %v1189 = vpack.c.b16 %v941, %v937
  %v1190 = vpack.c.b16 %v942, %v938
  %v1191 = vpack.c.b16 %v943, %v939
  %v1192 = vpack.c.b16 %v948, %v944
  %v1193 = vpack.c.b16 %v949, %v945
  %v1194 = vpack.c.b16 %v950, %v946
  %v1195 = vpack.c.b16 %v951, %v947
  %v1196 = vpack.c.b16 %v956, %v952
  %v1197 = vpack.c.b16 %v957, %v953
  %v1198 = vpack.c.b16 %v958, %v954
  %v1199 = vpack.c.b16 %v959, %v955
  %v1200 = vpack.c.b16 %v964, %v960
  %v1201 = vpack.c.b16 %v965, %v961
  %v1202 = vpack.c.b16 %v966, %v962
  %v1203 = vpack.c.b16 %v967, %v963
  %v1204 = vpack.c.b16 %v972, %v968
  %v1205 = vpack.c.b16 %v973, %v969
  %v1206 = vpack.c.b16 %v974, %v970
  %v1207 = vpack.c.b16 %v975, %v971
  %v1208 = vpack.c.b16 %v980, %v976
  %v1209 = vpack.c.b16 %v981, %v977
  %v1210 = vpack.c.b16 %v982, %v978
  %v1211 = vpack.c.b16 %v983, %v979
  %v1212 = vpack.c.b16 %v988, %v984
  %v1213 = vpack.c.b16 %v989, %v985
  %v1214 = vpack.c.b16 %v990, %v986
  %v1215 = vpack.c.b16 %v991, %v987
  %1440 = vmatprep.subr.bf16.mxu0 %v993
  %1441 = vmatpush1.bf16.msra.mxu0 %v992
  %1442 = vmatprep.subr.bf16.mxu0 %v997
  %1443 = vmatpush1.bf16.msra.mxu0 %v996
  %1444 = vmatprep.subr.bf16.mxu0 %v1001
  %1445 = vmatpush1.bf16.msra.mxu0 %v1000
  %1446 = vmatprep.subr.bf16.mxu0 %v1005
  %1447 = vmatpush1.bf16.msra.mxu0 %v1004
  %1448 = vmatprep.subr.bf16.mxu0 %v1009
  %1449 = vmatpush1.bf16.msra.mxu0 %v1008
  %1450 = vmatprep.subr.bf16.mxu0 %v1013
  %1451 = vmatpush1.bf16.msra.mxu0 %v1012
  %1452 = vmatprep.subr.bf16.mxu0 %v1017
  %1453 = vmatpush1.bf16.msra.mxu0 %v1016
  %1454 = vmatprep.subr.bf16.mxu0 %v1021
  %1455 = vmatpush1.bf16.msra.mxu0 %v1020
  %1456 = vmatprep.subr.bf16.mxu0 %v1025
  %1457 = vmatpush1.bf16.msra.mxu0 %v1024
  %1458 = vmatprep.subr.bf16.mxu0 %v1029
  %1459 = vmatpush1.bf16.msra.mxu0 %v1028
  %1460 = vmatprep.subr.bf16.mxu0 %v1033
  %1461 = vmatpush1.bf16.msra.mxu0 %v1032
  %1462 = vmatprep.subr.bf16.mxu0 %v1037
  %1463 = vmatpush1.bf16.msra.mxu0 %v1036
  %1464 = vmatprep.subr.bf16.mxu0 %v1041
  %1465 = vmatpush1.bf16.msra.mxu0 %v1040
  %1466 = vmatprep.subr.bf16.mxu0 %v1045
  %1467 = vmatpush1.bf16.msra.mxu0 %v1044
  %1468 = vmatprep.subr.bf16.mxu0 %v1049
  %1469 = vmatpush1.bf16.msra.mxu0 %v1048
  %1470 = vmatprep.subr.bf16.mxu0 %v1053
  %1471 = vmatpush1.bf16.msra.mxu0 %v1052
  %1472 = vmatprep.mubr.bf16.mxu0 %v307
  %1473 = vmatmul.mubr.bf16.gmra.mrb[0].mxu0 %v306
  %v1474 = vpop.f32.mrb[0].mxu0
  %v1475 = vadd.f32 %v278, %v1474
  %v1476 = vpop.f32.mrb[0].mxu0
  %v1477 = vadd.f32 %v282, %v1476
  %v1478 = vpop.f32.mrb[0].mxu0
  %v1479 = vpop.f32.mrb[0].mxu0
  %1480 = vdwg.mxu0
  %1481 = vmatprep.subr.bf16.mxu0 %v1057
  %1482 = vmatpush1.bf16.msra.mxu0 %v1056
  %1483 = vmatprep.subr.bf16.mxu0 %v1061
  %1484 = vmatpush1.bf16.msra.mxu0 %v1060
  %1485 = vmatprep.subr.bf16.mxu0 %v1065
  %1486 = vmatpush1.bf16.msra.mxu0 %v1064
  %1487 = vmatprep.subr.bf16.mxu0 %v1069
  %1488 = vmatpush1.bf16.msra.mxu0 %v1068
  %1489 = vmatprep.subr.bf16.mxu0 %v1073
  %1490 = vmatpush1.bf16.msra.mxu0 %v1072
  %1491 = vmatprep.subr.bf16.mxu0 %v1077
  %1492 = vmatpush1.bf16.msra.mxu0 %v1076
  %1493 = vmatprep.subr.bf16.mxu0 %v1081
  %1494 = vmatpush1.bf16.msra.mxu0 %v1080
  %1495 = vmatprep.subr.bf16.mxu0 %v1085
  %1496 = vmatpush1.bf16.msra.mxu0 %v1084
  %1497 = vmatprep.subr.bf16.mxu0 %v1089
  %1498 = vmatpush1.bf16.msra.mxu0 %v1088
  %1499 = vmatprep.subr.bf16.mxu0 %v1093
  %1500 = vmatpush1.bf16.msra.mxu0 %v1092
  %1501 = vmatprep.subr.bf16.mxu0 %v1097
  %1502 = vmatpush1.bf16.msra.mxu0 %v1096
  %1503 = vmatprep.subr.bf16.mxu0 %v1101
  %1504 = vmatpush1.bf16.msra.mxu0 %v1100
  %1505 = vmatprep.subr.bf16.mxu0 %v1105
  %1506 = vmatpush1.bf16.msra.mxu0 %v1104
  %1507 = vmatprep.subr.bf16.mxu0 %v1109
  %1508 = vmatpush1.bf16.msra.mxu0 %v1108
  %1509 = vmatprep.subr.bf16.mxu0 %v1113
  %1510 = vmatpush1.bf16.msra.mxu0 %v1112
  %1511 = vmatprep.subr.bf16.mxu0 %v1117
  %1512 = vmatpush1.bf16.msra.mxu0 %v1116
  %1513 = vmatprep.mubr.bf16.mxu0 %v309
  %1514 = vmatmul.mubr.bf16.gmra.mrb[0].mxu0 %v308
  %v1515 = vpop.f32.mrb[0].mxu0
  %v1516 = vadd.f32 %v1475, %v1515
  %v1517 = vpop.f32.mrb[0].mxu0
  %v1518 = vadd.f32 %v1477, %v1517
  %v1519 = vpop.f32.mrb[0].mxu0
  %v1520 = vpop.f32.mrb[0].mxu0
  %1521 = vdwg.mxu0
  %1522 = vmatprep.subr.bf16.mxu0 %v1121
  %1523 = vmatpush1.bf16.msra.mxu0 %v1120
  %1524 = vmatprep.subr.bf16.mxu0 %v1125
  %1525 = vmatpush1.bf16.msra.mxu0 %v1124
  %1526 = vmatprep.subr.bf16.mxu0 %v1129
  %1527 = vmatpush1.bf16.msra.mxu0 %v1128
  %1528 = vmatprep.subr.bf16.mxu0 %v1133
  %1529 = vmatpush1.bf16.msra.mxu0 %v1132
  %1530 = vmatprep.subr.bf16.mxu0 %v1137
  %1531 = vmatpush1.bf16.msra.mxu0 %v1136
  %1532 = vmatprep.subr.bf16.mxu0 %v1141
  %1533 = vmatpush1.bf16.msra.mxu0 %v1140
  %1534 = vmatprep.subr.bf16.mxu0 %v1145
  %1535 = vmatpush1.bf16.msra.mxu0 %v1144
  %1536 = vmatprep.subr.bf16.mxu0 %v1149
  %1537 = vmatpush1.bf16.msra.mxu0 %v1148
  %1538 = vmatprep.subr.bf16.mxu0 %v1153
  %1539 = vmatpush1.bf16.msra.mxu0 %v1152
  %1540 = vmatprep.subr.bf16.mxu0 %v1157
  %1541 = vmatpush1.bf16.msra.mxu0 %v1156
  %1542 = vmatprep.subr.bf16.mxu0 %v1161
  %1543 = vmatpush1.bf16.msra.mxu0 %v1160
  %1544 = vmatprep.subr.bf16.mxu0 %v1165
  %1545 = vmatpush1.bf16.msra.mxu0 %v1164
  %1546 = vmatprep.subr.bf16.mxu0 %v1169
  %1547 = vmatpush1.bf16.msra.mxu0 %v1168
  %1548 = vmatprep.subr.bf16.mxu0 %v1173
  %1549 = vmatpush1.bf16.msra.mxu0 %v1172
  %1550 = vmatprep.subr.bf16.mxu0 %v1177
  %1551 = vmatpush1.bf16.msra.mxu0 %v1176
  %1552 = vmatprep.subr.bf16.mxu0 %v1181
  %1553 = vmatpush1.bf16.msra.mxu0 %v1180
  %1554 = vmatprep.mubr.bf16.mxu0 %v311
  %1555 = vmatmul.mubr.bf16.gmra.mrb[0].mxu0 %v310
  %v1556 = vpop.f32.mrb[0].mxu0
  %v1557 = vadd.f32 %v1516, %v1556
  %v1558 = vpop.f32.mrb[0].mxu0
  %v1559 = vadd.f32 %v1518, %v1558
  %v1560 = vpop.f32.mrb[0].mxu0
  %v1561 = vpop.f32.mrb[0].mxu0
  %1562 = vdwg.mxu0
  %1563 = vmatprep.subr.bf16.mxu0 %v1185
  %1564 = vmatpush1.bf16.msra.mxu0 %v1184
  %1565 = vmatprep.subr.bf16.mxu0 %v1189
  %1566 = vmatpush1.bf16.msra.mxu0 %v1188
  %1567 = vmatprep.subr.bf16.mxu0 %v1193
  %1568 = vmatpush1.bf16.msra.mxu0 %v1192
  %1569 = vmatprep.subr.bf16.mxu0 %v1197
  %1570 = vmatpush1.bf16.msra.mxu0 %v1196
  %1571 = vmatprep.subr.bf16.mxu0 %v1201
  %1572 = vmatpush1.bf16.msra.mxu0 %v1200
  %1573 = vmatprep.subr.bf16.mxu0 %v1205
  %1574 = vmatpush1.bf16.msra.mxu0 %v1204
  %1575 = vmatprep.subr.bf16.mxu0 %v1209
  %1576 = vmatpush1.bf16.msra.mxu0 %v1208
  %1577 = vmatprep.subr.bf16.mxu0 %v1213
  %1578 = vmatpush1.bf16.msra.mxu0 %v1212
  %1579 = vmatprep.subr.bf16.mxu0 0
  %1580 = vmatpush1.bf16.msra.mxu0 0
  %1581 = vmatprep.subr.bf16.mxu0 0
  %1582 = vmatpush1.bf16.msra.mxu0 0
  %1583 = vmatprep.subr.bf16.mxu0 0
  %1584 = vmatpush1.bf16.msra.mxu0 0
  %1585 = vmatprep.subr.bf16.mxu0 0
  %1586 = vmatpush1.bf16.msra.mxu0 0
  %1587 = vmatprep.subr.bf16.mxu0 0
  %1588 = vmatpush1.bf16.msra.mxu0 0
  %1589 = vmatprep.subr.bf16.mxu0 0
  %1590 = vmatpush1.bf16.msra.mxu0 0
  %1591 = vmatprep.subr.bf16.mxu0 0
  %1592 = vmatpush1.bf16.msra.mxu0 0
  %1593 = vmatprep.subr.bf16.mxu0 0
  %1594 = vmatpush1.bf16.msra.mxu0 0
  %1595 = vmatprep.mubr.bf16.mxu0 0
  %1596 = vmatmul.mubr.bf16.gmra.mrb[0].mxu0 %v312
  %v1597 = vpop.f32.mrb[0].mxu0
  %v1598 = vadd.f32 %v1557, %v1597
  %v1599 = vpop.f32.mrb[0].mxu0
  %v1600 = vadd.f32 %v1559, %v1599
  %v1601 = vpop.f32.mrb[0].mxu0
  %v1602 = vpop.f32.mrb[0].mxu0
  %1603 = vdwg.mxu0
  %1604 = vmatprep.subr.bf16.mxu0 %v995
  %1605 = vmatpush1.bf16.msra.mxu0 %v994
  %1606 = vmatprep.subr.bf16.mxu0 %v999
  %1607 = vmatpush1.bf16.msra.mxu0 %v998
  %1608 = vmatprep.subr.bf16.mxu0 %v1003
  %1609 = vmatpush1.bf16.msra.mxu0 %v1002
  %1610 = vmatprep.subr.bf16.mxu0 %v1007
  %1611 = vmatpush1.bf16.msra.mxu0 %v1006
  %1612 = vmatprep.subr.bf16.mxu0 %v1011
  %1613 = vmatpush1.bf16.msra.mxu0 %v1010
  %1614 = vmatprep.subr.bf16.mxu0 %v1015
  %1615 = vmatpush1.bf16.msra.mxu0 %v1014
  %1616 = vmatprep.subr.bf16.mxu0 %v1019
  %1617 = vmatpush1.bf16.msra.mxu0 %v1018
  %1618 = vmatprep.subr.bf16.mxu0 %v1023
  %1619 = vmatpush1.bf16.msra.mxu0 %v1022
  %1620 = vmatprep.subr.bf16.mxu0 %v1027
  %1621 = vmatpush1.bf16.msra.mxu0 %v1026
  %1622 = vmatprep.subr.bf16.mxu0 %v1031
  %1623 = vmatpush1.bf16.msra.mxu0 %v1030
  %1624 = vmatprep.subr.bf16.mxu0 %v1035
  %1625 = vmatpush1.bf16.msra.mxu0 %v1034
  %1626 = vmatprep.subr.bf16.mxu0 %v1039
  %1627 = vmatpush1.bf16.msra.mxu0 %v1038
  %1628 = vmatprep.subr.bf16.mxu0 %v1043
  %1629 = vmatpush1.bf16.msra.mxu0 %v1042
  %1630 = vmatprep.subr.bf16.mxu0 %v1047
  %1631 = vmatpush1.bf16.msra.mxu0 %v1046
  %1632 = vmatprep.subr.bf16.mxu0 %v1051
  %1633 = vmatpush1.bf16.msra.mxu0 %v1050
  %1634 = vmatprep.subr.bf16.mxu0 %v1055
  %1635 = vmatpush1.bf16.msra.mxu0 %v1054
  %1636 = vmatprep.mubr.bf16.mxu0 %v307
  %1637 = vmatmul.mubr.bf16.gmra.mrb[0].mxu0 %v306
  %v1638 = vpop.f32.mrb[0].mxu0
  %v1639 = vadd.f32 %v286, %v1638
  %v1640 = vpop.f32.mrb[0].mxu0
  %v1641 = vadd.f32 %v290, %v1640
  %v1642 = vpop.f32.mrb[0].mxu0
  %v1643 = vpop.f32.mrb[0].mxu0
  %1644 = vdwg.mxu0
  %1645 = vmatprep.subr.bf16.mxu0 %v1059
  %1646 = vmatpush1.bf16.msra.mxu0 %v1058
  %1647 = vmatprep.subr.bf16.mxu0 %v1063
  %1648 = vmatpush1.bf16.msra.mxu0 %v1062
  %1649 = vmatprep.subr.bf16.mxu0 %v1067
  %1650 = vmatpush1.bf16.msra.mxu0 %v1066
  %1651 = vmatprep.subr.bf16.mxu0 %v1071
  %1652 = vmatpush1.bf16.msra.mxu0 %v1070
  %1653 = vmatprep.subr.bf16.mxu0 %v1075
  %1654 = vmatpush1.bf16.msra.mxu0 %v1074
  %1655 = vmatprep.subr.bf16.mxu0 %v1079
  %1656 = vmatpush1.bf16.msra.mxu0 %v1078
  %1657 = vmatprep.subr.bf16.mxu0 %v1083
  %1658 = vmatpush1.bf16.msra.mxu0 %v1082
  %1659 = vmatprep.subr.bf16.mxu0 %v1087
  %1660 = vmatpush1.bf16.msra.mxu0 %v1086
  %1661 = vmatprep.subr.bf16.mxu0 %v1091
  %1662 = vmatpush1.bf16.msra.mxu0 %v1090
  %1663 = vmatprep.subr.bf16.mxu0 %v1095
  %1664 = vmatpush1.bf16.msra.mxu0 %v1094
  %1665 = vmatprep.subr.bf16.mxu0 %v1099
  %1666 = vmatpush1.bf16.msra.mxu0 %v1098
  %1667 = vmatprep.subr.bf16.mxu0 %v1103
  %1668 = vmatpush1.bf16.msra.mxu0 %v1102
  %1669 = vmatprep.subr.bf16.mxu0 %v1107
  %1670 = vmatpush1.bf16.msra.mxu0 %v1106
  %1671 = vmatprep.subr.bf16.mxu0 %v1111
  %1672 = vmatpush1.bf16.msra.mxu0 %v1110
  %1673 = vmatprep.subr.bf16.mxu0 %v1115
  %1674 = vmatpush1.bf16.msra.mxu0 %v1114
  %1675 = vmatprep.subr.bf16.mxu0 %v1119
  %1676 = vmatpush1.bf16.msra.mxu0 %v1118
  %1677 = vmatprep.mubr.bf16.mxu0 %v309
  %1678 = vmatmul.mubr.bf16.gmra.mrb[0].mxu0 %v308
  %v1679 = vpop.f32.mrb[0].mxu0
  %v1680 = vadd.f32 %v1639, %v1679
  %v1681 = vpop.f32.mrb[0].mxu0
  %v1682 = vadd.f32 %v1641, %v1681
  %v1683 = vpop.f32.mrb[0].mxu0
  %v1684 = vpop.f32.mrb[0].mxu0
  %1685 = vdwg.mxu0
  %1686 = vmatprep.subr.bf16.mxu0 %v1123
  %1687 = vmatpush1.bf16.msra.mxu0 %v1122
  %1688 = vmatprep.subr.bf16.mxu0 %v1127
  %1689 = vmatpush1.bf16.msra.mxu0 %v1126
  %1690 = vmatprep.subr.bf16.mxu0 %v1131
  %1691 = vmatpush1.bf16.msra.mxu0 %v1130
  %1692 = vmatprep.subr.bf16.mxu0 %v1135
  %1693 = vmatpush1.bf16.msra.mxu0 %v1134
  %1694 = vmatprep.subr.bf16.mxu0 %v1139
  %1695 = vmatpush1.bf16.msra.mxu0 %v1138
  %1696 = vmatprep.subr.bf16.mxu0 %v1143
  %1697 = vmatpush1.bf16.msra.mxu0 %v1142
  %1698 = vmatprep.subr.bf16.mxu0 %v1147
  %1699 = vmatpush1.bf16.msra.mxu0 %v1146
  %1700 = vmatprep.subr.bf16.mxu0 %v1151
  %1701 = vmatpush1.bf16.msra.mxu0 %v1150
  %1702 = vmatprep.subr.bf16.mxu0 %v1155
  %1703 = vmatpush1.bf16.msra.mxu0 %v1154
  %1704 = vmatprep.subr.bf16.mxu0 %v1159
  %1705 = vmatpush1.bf16.msra.mxu0 %v1158
  %1706 = vmatprep.subr.bf16.mxu0 %v1163
  %1707 = vmatpush1.bf16.msra.mxu0 %v1162
  %1708 = vmatprep.subr.bf16.mxu0 %v1167
  %1709 = vmatpush1.bf16.msra.mxu0 %v1166
  %1710 = vmatprep.subr.bf16.mxu0 %v1171
  %1711 = vmatpush1.bf16.msra.mxu0 %v1170
  %1712 = vmatprep.subr.bf16.mxu0 %v1175
  %1713 = vmatpush1.bf16.msra.mxu0 %v1174
  %1714 = vmatprep.subr.bf16.mxu0 %v1179
  %1715 = vmatpush1.bf16.msra.mxu0 %v1178
  %1716 = vmatprep.subr.bf16.mxu0 %v1183
  %1717 = vmatpush1.bf16.msra.mxu0 %v1182
  %1718 = vmatprep.mubr.bf16.mxu0 %v311
  %1719 = vmatmul.mubr.bf16.gmra.mrb[0].mxu0 %v310
  %v1720 = vpop.f32.mrb[0].mxu0
  %v1721 = vadd.f32 %v1680, %v1720
  %v1722 = vpop.f32.mrb[0].mxu0
  %v1723 = vadd.f32 %v1682, %v1722
  %v1724 = vpop.f32.mrb[0].mxu0
  %v1725 = vpop.f32.mrb[0].mxu0
  %1726 = vdwg.mxu0
  %1727 = vmatprep.subr.bf16.mxu0 %v1187
  %1728 = vmatpush1.bf16.msra.mxu0 %v1186
  %1729 = vmatprep.subr.bf16.mxu0 %v1191
  %1730 = vmatpush1.bf16.msra.mxu0 %v1190
  %1731 = vmatprep.subr.bf16.mxu0 %v1195
  %1732 = vmatpush1.bf16.msra.mxu0 %v1194
  %1733 = vmatprep.subr.bf16.mxu0 %v1199
  %1734 = vmatpush1.bf16.msra.mxu0 %v1198
  %1735 = vmatprep.subr.bf16.mxu0 %v1203
  %1736 = vmatpush1.bf16.msra.mxu0 %v1202
  %1737 = vmatprep.subr.bf16.mxu0 %v1207
  %1738 = vmatpush1.bf16.msra.mxu0 %v1206
  %1739 = vmatprep.subr.bf16.mxu0 %v1211
  %1740 = vmatpush1.bf16.msra.mxu0 %v1210
  %1741 = vmatprep.subr.bf16.mxu0 %v1215
  %1742 = vmatpush1.bf16.msra.mxu0 %v1214
  %1743 = vmatprep.subr.bf16.mxu0 0
  %1744 = vmatpush1.bf16.msra.mxu0 0
  %1745 = vmatprep.subr.bf16.mxu0 0
  %1746 = vmatpush1.bf16.msra.mxu0 0
  %1747 = vmatprep.subr.bf16.mxu0 0
  %1748 = vmatpush1.bf16.msra.mxu0 0
  %1749 = vmatprep.subr.bf16.mxu0 0
  %1750 = vmatpush1.bf16.msra.mxu0 0
  %1751 = vmatprep.subr.bf16.mxu0 0
  %1752 = vmatpush1.bf16.msra.mxu0 0
  %1753 = vmatprep.subr.bf16.mxu0 0
  %1754 = vmatpush1.bf16.msra.mxu0 0
  %1755 = vmatprep.subr.bf16.mxu0 0
  %1756 = vmatpush1.bf16.msra.mxu0 0
  %1757 = vmatprep.subr.bf16.mxu0 0
  %1758 = vmatpush1.bf16.msra.mxu0 0
  %1759 = vmatprep.mubr.bf16.mxu0 0
  %1760 = vmatmul.mubr.bf16.gmra.mrb[0].mxu0 %v312
  %v1761 = vpop.f32.mrb[0].mxu0
  %v1762 = vadd.f32 %v1721, %v1761
  %v1763 = vpop.f32.mrb[0].mxu0
  %v1764 = vadd.f32 %v1723, %v1763
  %v1765 = vpop.f32.mrb[0].mxu0
  %v1766 = vpop.f32.mrb[0].mxu0
  %1767 = vdwg.mxu0
  %v1768 = vmax.f32 %v1598, 0.0
  %v1769 = vmax.f32 %v1600, 0.0
  %v1770 = vmax.f32 %v1762, 0.0
  %v1771 = vmax.f32 %v1764, 0.0
  %v1772 = vpack.c.bf16 %v1768, %v1768
  %v1773 = vpack.c.bf16 %v1769, %v1769
  %v1774 = vpack.c.bf16 %v1770, %v1770
  %v1775 = vpack.c.bf16 %v1771, %v1771
  %v1776 = vld [vmem:[%s3] sm:$0xff]
  %v1777 = vld [vmem:[%s3 + $0x8] sm:$0xff]
  %v1778 = vld [vmem:[%s3 + $0x10] sm:$0xff]
  %v1779 = vld [vmem:[%s3 + $0x18] sm:$0xff]
  %v1780 = vld [vmem:[%s3 + $0x20] sm:$0xff]
  %v1781 = vld [vmem:[%s3 + $0x28] sm:$0xff]
  %v1782 = vld [vmem:[%s3 + $0x30] sm:$0xff]
  %v1783 = vld [vmem:[%s3 + $0x38] sm:$0xff]
  %v1784 = vld [vmem:[%s3 + $0x40] sm:$0xff]
  %v1785 = vld [vmem:[%s3 + $0x48] sm:$0xff]
  %v1786 = vld [vmem:[%s3 + $0x50] sm:$0xff]
  %v1787 = vld [vmem:[%s3 + $0x58] sm:$0xff]
  %v1788 = vld [vmem:[%s3 + $0x60] sm:$0xff]
  %v1789 = vld [vmem:[%s3 + $0x68] sm:$0xff]
  %v1790 = vld [vmem:[%s3 + $0x70] sm:$0xff]
  %v1791 = vld [vmem:[%s3 + $0x78] sm:$0xff]
  %v1792 = vld [vmem:[%s3 + $0x80] sm:$0xff]
  %v1793 = vld [vmem:[%s3 + $0x88] sm:$0xff]
  %v1794 = vld [vmem:[%s3 + $0x90] sm:$0xff]
  %v1795 = vld [vmem:[%s3 + $0x98] sm:$0xff]
  %v1796 = vld [vmem:[%s3 + $0xa0] sm:$0xff]
  %v1797 = vld [vmem:[%s3 + $0xa8] sm:$0xff]
  %v1798 = vld [vmem:[%s3 + $0xb0] sm:$0xff]
  %v1799 = vld [vmem:[%s3 + $0xb8] sm:$0xff]
  %v1800 = vld [vmem:[%s3 + $0xc0] sm:$0xff]
  %v1801 = vld [vmem:[%s3 + $0xc8] sm:$0xff]
  %v1802 = vld [vmem:[%s3 + $0xd0] sm:$0xff]
  %v1803 = vld [vmem:[%s3 + $0xd8] sm:$0xff]
  %v1804 = vld [vmem:[%s3 + $0xe0] sm:$0xff]
  %v1805 = vld [vmem:[%s3 + $0xe8] sm:$0xff]
  %v1806 = vld [vmem:[%s3 + $0xf0] sm:$0xff]
  %v1807 = vld [vmem:[%s3 + $0xf8] sm:$0xff]
  %v1808 = vld [vmem:[%s3 + $0x100] sm:$0xff]
  %v1809 = vld [vmem:[%s3 + $0x108] sm:$0xff]
  %v1810 = vld [vmem:[%s3 + $0x110] sm:$0xff]
  %v1811 = vld [vmem:[%s3 + $0x118] sm:$0xff]
  %v1812 = vld [vmem:[%s3 + $0x120] sm:$0xff]
  %v1813 = vld [vmem:[%s3 + $0x128] sm:$0xff]
  %v1814 = vld [vmem:[%s3 + $0x130] sm:$0xff]
  %v1815 = vld [vmem:[%s3 + $0x138] sm:$0xff]
  %v1816 = vld [vmem:[%s3 + $0x140] sm:$0xff]
  %v1817 = vld [vmem:[%s3 + $0x148] sm:$0xff]
  %v1818 = vld [vmem:[%s3 + $0x150] sm:$0xff]
  %v1819 = vld [vmem:[%s3 + $0x158] sm:$0xff]
  %v1820 = vld [vmem:[%s3 + $0x160] sm:$0xff]
  %v1821 = vld [vmem:[%s3 + $0x168] sm:$0xff]
  %v1822 = vld [vmem:[%s3 + $0x170] sm:$0xff]
  %v1823 = vld [vmem:[%s3 + $0x178] sm:$0xff]
  %v1824 = vld [vmem:[%s3 + $0x180] sm:$0xff]
  %v1825 = vld [vmem:[%s3 + $0x188] sm:$0xff]
  %v1826 = vld [vmem:[%s3 + $0x190] sm:$0xff]
  %v1827 = vld [vmem:[%s3 + $0x198] sm:$0xff]
  %v1828 = vld [vmem:[%s3 + $0x1a0] sm:$0xff]
  %v1829 = vld [vmem:[%s3 + $0x1a8] sm:$0xff]
  %v1830 = vld [vmem:[%s3 + $0x1b0] sm:$0xff]
  %v1831 = vld [vmem:[%s3 + $0x1b8] sm:$0xff]
  %v1832 = vld [vmem:[%s3 + $0x1c0] sm:$0xff]
  %v1833 = vld [vmem:[%s3 + $0x1c8] sm:$0xff]
  %v1834 = vld [vmem:[%s3 + $0x1d0] sm:$0xff]
  %v1835 = vld [vmem:[%s3 + $0x1d8] sm:$0xff]
  %v1836 = vld [vmem:[%s3 + $0x1e0] sm:$0xff]
  %v1837 = vld [vmem:[%s3 + $0x1e8] sm:$0xff]
  %v1838 = vld [vmem:[%s3 + $0x1f0] sm:$0xff]
  %v1839 = vld [vmem:[%s3 + $0x1f8] sm:$0xff]
  %v1840 = vld [vmem:[%s4] sm:$0x3]
  %v1842 = vlaneseq
  %v1843 = vshrl.u32 %v1842, 7
  %v1844 = vsub.s32 0, %v1843
  %v1845 = vrot.slane %v1840, %v1844
  %v1846 = vlaneseq
  %v1847 = vshrl.u32 %v1846, 7
  %v1848 = vsub.s32 1, %v1847
  %v1849 = vrot.slane %v1840, %v1848
  %v1916 = vunpack.c.l.b16 %v1776
  %v1917 = vunpack.c.h.b16 %v1776
  %v1918 = vunpack.c.l.b16 %v1777
  %v1919 = vunpack.c.h.b16 %v1777
  %v1920 = vunpack.c.l.b16 %v1778
  %v1921 = vunpack.c.h.b16 %v1778
  %v1922 = vunpack.c.l.b16 %v1779
  %v1923 = vunpack.c.h.b16 %v1779
  %v1924 = vunpack.c.l.b16 %v1780
  %v1925 = vunpack.c.h.b16 %v1780
  %v1926 = vunpack.c.l.b16 %v1781
  %v1927 = vunpack.c.h.b16 %v1781
  %v1928 = vunpack.c.l.b16 %v1782
  %v1929 = vunpack.c.h.b16 %v1782
  %v1930 = vunpack.c.l.b16 %v1783
  %v1931 = vunpack.c.h.b16 %v1783
  %v1932 = vunpack.c.l.b16 %v1784
  %v1933 = vunpack.c.h.b16 %v1784
  %v1934 = vunpack.c.l.b16 %v1785
  %v1935 = vunpack.c.h.b16 %v1785
  %v1936 = vunpack.c.l.b16 %v1786
  %v1937 = vunpack.c.h.b16 %v1786
  %v1938 = vunpack.c.l.b16 %v1787
  %v1939 = vunpack.c.h.b16 %v1787
  %v1940 = vunpack.c.l.b16 %v1788
  %v1941 = vunpack.c.h.b16 %v1788
  %v1942 = vunpack.c.l.b16 %v1789
  %v1943 = vunpack.c.h.b16 %v1789
  %v1944 = vunpack.c.l.b16 %v1790
  %v1945 = vunpack.c.h.b16 %v1790
  %v1946 = vunpack.c.l.b16 %v1791
  %v1947 = vunpack.c.h.b16 %v1791
  %v1948 = vunpack.c.l.b16 %v1792
  %v1949 = vunpack.c.h.b16 %v1792
  %v1950 = vunpack.c.l.b16 %v1793
  %v1951 = vunpack.c.h.b16 %v1793
  %v1952 = vunpack.c.l.b16 %v1794
  %v1953 = vunpack.c.h.b16 %v1794
  %v1954 = vunpack.c.l.b16 %v1795
  %v1955 = vunpack.c.h.b16 %v1795
  %v1956 = vunpack.c.l.b16 %v1796
  %v1957 = vunpack.c.h.b16 %v1796
  %v1958 = vunpack.c.l.b16 %v1797
  %v1959 = vunpack.c.h.b16 %v1797
  %v1960 = vunpack.c.l.b16 %v1798
  %v1961 = vunpack.c.h.b16 %v1798
  %v1962 = vunpack.c.l.b16 %v1799
  %v1963 = vunpack.c.h.b16 %v1799
  %v1964 = vunpack.c.l.b16 %v1800
  %v1965 = vunpack.c.h.b16 %v1800
  %v1966 = vunpack.c.l.b16 %v1801
  %v1967 = vunpack.c.h.b16 %v1801
  %v1968 = vunpack.c.l.b16 %v1802
  %v1969 = vunpack.c.h.b16 %v1802
  %v1970 = vunpack.c.l.b16 %v1803
  %v1971 = vunpack.c.h.b16 %v1803
  %v1972 = vunpack.c.l.b16 %v1804
  %v1973 = vunpack.c.h.b16 %v1804
  %v1974 = vunpack.c.l.b16 %v1805
  %v1975 = vunpack.c.h.b16 %v1805
  %v1976 = vunpack.c.l.b16 %v1806
  %v1977 = vunpack.c.h.b16 %v1806
  %v1978 = vunpack.c.l.b16 %v1807
  %v1979 = vunpack.c.h.b16 %v1807
  %v1980 = vunpack.c.l.b16 %v1808
  %v1981 = vunpack.c.h.b16 %v1808
  %v1982 = vunpack.c.l.b16 %v1809
  %v1983 = vunpack.c.h.b16 %v1809
  %v1984 = vunpack.c.l.b16 %v1810
  %v1985 = vunpack.c.h.b16 %v1810
  %v1986 = vunpack.c.l.b16 %v1811
  %v1987 = vunpack.c.h.b16 %v1811
  %v1988 = vunpack.c.l.b16 %v1812
  %v1989 = vunpack.c.h.b16 %v1812
  %v1990 = vunpack.c.l.b16 %v1813
  %v1991 = vunpack.c.h.b16 %v1813
  %v1992 = vunpack.c.l.b16 %v1814
  %v1993 = vunpack.c.h.b16 %v1814
  %v1994 = vunpack.c.l.b16 %v1815
  %v1995 = vunpack.c.h.b16 %v1815
  %v1996 = vunpack.c.l.b16 %v1816
  %v1997 = vunpack.c.h.b16 %v1816
  %v1998 = vunpack.c.l.b16 %v1817
  %v1999 = vunpack.c.h.b16 %v1817
  %v2000 = vunpack.c.l.b16 %v1818
  %v2001 = vunpack.c.h.b16 %v1818
  %v2002 = vunpack.c.l.b16 %v1819
  %v2003 = vunpack.c.h.b16 %v1819
  %v2004 = vunpack.c.l.b16 %v1820
  %v2005 = vunpack.c.h.b16 %v1820
  %v2006 = vunpack.c.l.b16 %v1821
  %v2007 = vunpack.c.h.b16 %v1821
  %v2008 = vunpack.c.l.b16 %v1822
  %v2009 = vunpack.c.h.b16 %v1822
  %v2010 = vunpack.c.l.b16 %v1823
  %v2011 = vunpack.c.h.b16 %v1823
  %v2012 = vunpack.c.l.b16 %v1824
  %v2013 = vunpack.c.h.b16 %v1824
  %v2014 = vunpack.c.l.b16 %v1825
  %v2015 = vunpack.c.h.b16 %v1825
  %v2016 = vunpack.c.l.b16 %v1826
  %v2017 = vunpack.c.h.b16 %v1826
  %v2018 = vunpack.c.l.b16 %v1827
  %v2019 = vunpack.c.h.b16 %v1827
  %v2020 = vunpack.c.l.b16 %v1828
  %v2021 = vunpack.c.h.b16 %v1828
  %v2022 = vunpack.c.l.b16 %v1829
  %v2023 = vunpack.c.h.b16 %v1829
  %v2024 = vunpack.c.l.b16 %v1830
  %v2025 = vunpack.c.h.b16 %v1830
  %v2026 = vunpack.c.l.b16 %v1831
  %v2027 = vunpack.c.h.b16 %v1831
  %v2028 = vunpack.c.l.b16 %v1832
  %v2029 = vunpack.c.h.b16 %v1832
  %v2030 = vunpack.c.l.b16 %v1833
  %v2031 = vunpack.c.h.b16 %v1833
  %v2032 = vunpack.c.l.b16 %v1834
  %v2033 = vunpack.c.h.b16 %v1834
  %v2034 = vunpack.c.l.b16 %v1835
  %v2035 = vunpack.c.h.b16 %v1835
  %v2036 = vunpack.c.l.b16 %v1836
  %v2037 = vunpack.c.h.b16 %v1836
  %v2038 = vunpack.c.l.b16 %v1837
  %v2039 = vunpack.c.h.b16 %v1837
  %v2040 = vunpack.c.l.b16 %v1838
  %v2041 = vunpack.c.h.b16 %v1838
  %v2042 = vunpack.c.l.b16 %v1839
  %v2043 = vunpack.c.h.b16 %v1839
  %v2044 = vpack.c.b16 %v1918, %v1916
  %v2045 = vpack.c.b16 %v1919, %v1917
  %v2046 = vpack.c.b16 %v1922, %v1920
  %v2047 = vpack.c.b16 %v1923, %v1921
  %v2048 = vpack.c.b16 %v1926, %v1924
  %v2049 = vpack.c.b16 %v1927, %v1925
  %v2050 = vpack.c.b16 %v1930, %v1928
  %v2051 = vpack.c.b16 %v1931, %v1929
  %v2052 = vpack.c.b16 %v1934, %v1932
  %v2053 = vpack.c.b16 %v1935, %v1933
  %v2054 = vpack.c.b16 %v1938, %v1936
  %v2055 = vpack.c.b16 %v1939, %v1937
  %v2056 = vpack.c.b16 %v1942, %v1940
  %v2057 = vpack.c.b16 %v1943, %v1941
  %v2058 = vpack.c.b16 %v1946, %v1944
  %v2059 = vpack.c.b16 %v1947, %v1945
  %v2060 = vpack.c.b16 %v1950, %v1948
  %v2061 = vpack.c.b16 %v1951, %v1949
  %v2062 = vpack.c.b16 %v1954, %v1952
  %v2063 = vpack.c.b16 %v1955, %v1953
  %v2064 = vpack.c.b16 %v1958, %v1956
  %v2065 = vpack.c.b16 %v1959, %v1957
  %v2066 = vpack.c.b16 %v1962, %v1960
  %v2067 = vpack.c.b16 %v1963, %v1961
  %v2068 = vpack.c.b16 %v1966, %v1964
  %v2069 = vpack.c.b16 %v1967, %v1965
  %v2070 = vpack.c.b16 %v1970, %v1968
  %v2071 = vpack.c.b16 %v1971, %v1969
  %v2072 = vpack.c.b16 %v1974, %v1972
  %v2073 = vpack.c.b16 %v1975, %v1973
  %v2074 = vpack.c.b16 %v1978, %v1976
  %v2075 = vpack.c.b16 %v1979, %v1977
  %v2076 = vpack.c.b16 %v1982, %v1980
  %v2077 = vpack.c.b16 %v1983, %v1981
  %v2078 = vpack.c.b16 %v1986, %v1984
  %v2079 = vpack.c.b16 %v1987, %v1985
  %v2080 = vpack.c.b16 %v1990, %v1988
  %v2081 = vpack.c.b16 %v1991, %v1989
  %v2082 = vpack.c.b16 %v1994, %v1992
  %v2083 = vpack.c.b16 %v1995, %v1993
  %v2084 = vpack.c.b16 %v1998, %v1996
  %v2085 = vpack.c.b16 %v1999, %v1997
  %v2086 = vpack.c.b16 %v2002, %v2000
  %v2087 = vpack.c.b16 %v2003, %v2001
  %v2088 = vpack.c.b16 %v2006, %v2004
  %v2089 = vpack.c.b16 %v2007, %v2005
  %v2090 = vpack.c.b16 %v2010, %v2008
  %v2091 = vpack.c.b16 %v2011, %v2009
  %v2092 = vpack.c.b16 %v2014, %v2012
  %v2093 = vpack.c.b16 %v2015, %v2013
  %v2094 = vpack.c.b16 %v2018, %v2016
  %v2095 = vpack.c.b16 %v2019, %v2017
  %v2096 = vpack.c.b16 %v2022, %v2020
  %v2097 = vpack.c.b16 %v2023, %v2021
  %v2098 = vpack.c.b16 %v2026, %v2024
  %v2099 = vpack.c.b16 %v2027, %v2025
  %v2100 = vpack.c.b16 %v2030, %v2028
  %v2101 = vpack.c.b16 %v2031, %v2029
  %v2102 = vpack.c.b16 %v2034, %v2032
  %v2103 = vpack.c.b16 %v2035, %v2033
  %v2104 = vpack.c.b16 %v2038, %v2036
  %v2105 = vpack.c.b16 %v2039, %v2037
  %v2106 = vpack.c.b16 %v2042, %v2040
  %v2107 = vpack.c.b16 %v2043, %v2041
  %2172 = vmatprep.subr.bf16.mxu0 %v2045
  %2173 = vmatpush1.bf16.msra.mxu0 %v2044
  %2174 = vmatprep.subr.bf16.mxu0 %v2047
  %2175 = vmatpush1.bf16.msra.mxu0 %v2046
  %2176 = vmatprep.subr.bf16.mxu0 %v2049
  %2177 = vmatpush1.bf16.msra.mxu0 %v2048
  %2178 = vmatprep.subr.bf16.mxu0 %v2051
  %2179 = vmatpush1.bf16.msra.mxu0 %v2050
  %2180 = vmatprep.subr.bf16.mxu0 %v2053
  %2181 = vmatpush1.bf16.msra.mxu0 %v2052
  %2182 = vmatprep.subr.bf16.mxu0 %v2055
  %2183 = vmatpush1.bf16.msra.mxu0 %v2054
  %2184 = vmatprep.subr.bf16.mxu0 %v2057
  %2185 = vmatpush1.bf16.msra.mxu0 %v2056
  %2186 = vmatprep.subr.bf16.mxu0 %v2059
  %2187 = vmatpush1.bf16.msra.mxu0 %v2058
  %2188 = vmatprep.subr.bf16.mxu0 %v2061
  %2189 = vmatpush1.bf16.msra.mxu0 %v2060
  %2190 = vmatprep.subr.bf16.mxu0 %v2063
  %2191 = vmatpush1.bf16.msra.mxu0 %v2062
  %2192 = vmatprep.subr.bf16.mxu0 %v2065
  %2193 = vmatpush1.bf16.msra.mxu0 %v2064
  %2194 = vmatprep.subr.bf16.mxu0 %v2067
  %2195 = vmatpush1.bf16.msra.mxu0 %v2066
  %2196 = vmatprep.subr.bf16.mxu0 %v2069
  %2197 = vmatpush1.bf16.msra.mxu0 %v2068
  %2198 = vmatprep.subr.bf16.mxu0 %v2071
  %2199 = vmatpush1.bf16.msra.mxu0 %v2070
  %2200 = vmatprep.subr.bf16.mxu0 %v2073
  %2201 = vmatpush1.bf16.msra.mxu0 %v2072
  %2202 = vmatprep.subr.bf16.mxu0 %v2075
  %2203 = vmatpush1.bf16.msra.mxu0 %v2074
  %2204 = vmatprep.mubr.bf16.mxu0 %v1773
  %2205 = vmatmul.mubr.bf16.gmra.mrb[0].mxu0 %v1772
  %v2206 = vpop.f32.mrb[0].mxu0
  %v2207 = vadd.f32 %v1845, %v2206
  %v2208 = vpop.f32.mrb[0].mxu0
  %v2209 = vadd.f32 %v1849, %v2208
  %v2210 = vpop.f32.mrb[0].mxu0
  %v2211 = vpop.f32.mrb[0].mxu0
  %2212 = vdwg.mxu0
  %2213 = vmatprep.subr.bf16.mxu0 %v2077
  %2214 = vmatpush1.bf16.msra.mxu0 %v2076
  %2215 = vmatprep.subr.bf16.mxu0 %v2079
  %2216 = vmatpush1.bf16.msra.mxu0 %v2078
  %2217 = vmatprep.subr.bf16.mxu0 %v2081
  %2218 = vmatpush1.bf16.msra.mxu0 %v2080
  %2219 = vmatprep.subr.bf16.mxu0 %v2083
  %2220 = vmatpush1.bf16.msra.mxu0 %v2082
  %2221 = vmatprep.subr.bf16.mxu0 %v2085
  %2222 = vmatpush1.bf16.msra.mxu0 %v2084
  %2223 = vmatprep.subr.bf16.mxu0 %v2087
  %2224 = vmatpush1.bf16.msra.mxu0 %v2086
  %2225 = vmatprep.subr.bf16.mxu0 %v2089
  %2226 = vmatpush1.bf16.msra.mxu0 %v2088
  %2227 = vmatprep.subr.bf16.mxu0 %v2091
  %2228 = vmatpush1.bf16.msra.mxu0 %v2090
  %2229 = vmatprep.subr.bf16.mxu0 %v2093
  %2230 = vmatpush1.bf16.msra.mxu0 %v2092
  %2231 = vmatprep.subr.bf16.mxu0 %v2095
  %2232 = vmatpush1.bf16.msra.mxu0 %v2094
  %2233 = vmatprep.subr.bf16.mxu0 %v2097
  %2234 = vmatpush1.bf16.msra.mxu0 %v2096
  %2235 = vmatprep.subr.bf16.mxu0 %v2099
  %2236 = vmatpush1.bf16.msra.mxu0 %v2098
  %2237 = vmatprep.subr.bf16.mxu0 %v2101
  %2238 = vmatpush1.bf16.msra.mxu0 %v2100
  %2239 = vmatprep.subr.bf16.mxu0 %v2103
  %2240 = vmatpush1.bf16.msra.mxu0 %v2102
  %2241 = vmatprep.subr.bf16.mxu0 %v2105
  %2242 = vmatpush1.bf16.msra.mxu0 %v2104
  %2243 = vmatprep.subr.bf16.mxu0 %v2107
  %2244 = vmatpush1.bf16.msra.mxu0 %v2106
  %2245 = vmatprep.mubr.bf16.mxu0 %v1775
  %2246 = vmatmul.mubr.bf16.gmra.mrb[0].mxu0 %v1774
  %v2247 = vpop.f32.mrb[0].mxu0
  %v2248 = vadd.f32 %v2207, %v2247
  %v2249 = vpop.f32.mrb[0].mxu0
  %v2250 = vadd.f32 %v2209, %v2249
  %v2251 = vpop.f32.mrb[0].mxu0
  %v2252 = vpop.f32.mrb[0].mxu0
  %2253 = vdwg.mxu0
  %v2254 = vmax.f32 %v2248, 0.0
  %v2255 = vmax.f32 %v2250, 0.0
  %v2256 = vpack.c.bf16 %v2254, %v2254
  %v2257 = vpack.c.bf16 %v2255, %v2255
  %v2258 = vld [vmem:[%s5] sm:$0xf]
  %v2259 = vld [vmem:[%s5 + $0x4] sm:$0xf]
  %v2260 = vld [vmem:[%s5 + $0x8] sm:$0xf]
  %v2261 = vld [vmem:[%s5 + $0xc] sm:$0xf]
  %v2262 = vld [vmem:[%s5 + $0x10] sm:$0xf]
  %v2263 = vld [vmem:[%s5 + $0x14] sm:$0xf]
  %v2264 = vld [vmem:[%s5 + $0x18] sm:$0xf]
  %v2265 = vld [vmem:[%s5 + $0x1c] sm:$0xf]
  %v2266 = vld [vmem:[%s5 + $0x20] sm:$0xf]
  %v2267 = vld [vmem:[%s5 + $0x24] sm:$0xf]
  %v2268 = vld [vmem:[%s5 + $0x28] sm:$0xf]
  %v2269 = vld [vmem:[%s5 + $0x2c] sm:$0xf]
  %v2270 = vld [vmem:[%s5 + $0x30] sm:$0xf]
  %v2271 = vld [vmem:[%s5 + $0x34] sm:$0xf]
  %v2272 = vld [vmem:[%s5 + $0x38] sm:$0xf]
  %v2273 = vld [vmem:[%s5 + $0x3c] sm:$0xf]
  %v2274 = vld [vmem:[%s5 + $0x40] sm:$0xf]
  %v2275 = vld [vmem:[%s5 + $0x44] sm:$0xf]
  %v2276 = vld [vmem:[%s5 + $0x48] sm:$0xf]
  %v2277 = vld [vmem:[%s5 + $0x4c] sm:$0xf]
  %v2278 = vld [vmem:[%s5 + $0x50] sm:$0xf]
  %v2279 = vld [vmem:[%s5 + $0x54] sm:$0xf]
  %v2280 = vld [vmem:[%s5 + $0x58] sm:$0xf]
  %v2281 = vld [vmem:[%s5 + $0x5c] sm:$0xf]
  %v2282 = vld [vmem:[%s5 + $0x60] sm:$0xf]
  %v2283 = vld [vmem:[%s5 + $0x64] sm:$0xf]
  %v2284 = vld [vmem:[%s5 + $0x68] sm:$0xf]
  %v2285 = vld [vmem:[%s5 + $0x6c] sm:$0xf]
  %v2286 = vld [vmem:[%s5 + $0x70] sm:$0xf]
  %v2287 = vld [vmem:[%s5 + $0x74] sm:$0xf]
  %v2288 = vld [vmem:[%s5 + $0x78] sm:$0xf]
  %v2289 = vld [vmem:[%s5 + $0x7c] sm:$0xf]
  %v2290 = vld [vmem:[%s6] sm:$0x1]
  %v2292 = vlaneseq
  %v2293 = vshrl.u32 %v2292, 7
  %v2294 = vsub.s32 0, %v2293
  %v2295 = vrot.slane %v2290, %v2294
  %v2329 = vunpack.c.l.b16 %v2258
  %v2330 = vunpack.c.l.b16 %v2259
  %v2331 = vunpack.c.l.b16 %v2260
  %v2332 = vunpack.c.l.b16 %v2261
  %v2333 = vunpack.c.l.b16 %v2262
  %v2334 = vunpack.c.l.b16 %v2263
  %v2335 = vunpack.c.l.b16 %v2264
  %v2336 = vunpack.c.l.b16 %v2265
  %v2337 = vunpack.c.l.b16 %v2266
  %v2338 = vunpack.c.l.b16 %v2267
  %v2339 = vunpack.c.l.b16 %v2268
  %v2340 = vunpack.c.l.b16 %v2269
  %v2341 = vunpack.c.l.b16 %v2270
  %v2342 = vunpack.c.l.b16 %v2271
  %v2343 = vunpack.c.l.b16 %v2272
  %v2344 = vunpack.c.l.b16 %v2273
  %v2345 = vunpack.c.l.b16 %v2274
  %v2346 = vunpack.c.l.b16 %v2275
  %v2347 = vunpack.c.l.b16 %v2276
  %v2348 = vunpack.c.l.b16 %v2277
  %v2349 = vunpack.c.l.b16 %v2278
  %v2350 = vunpack.c.l.b16 %v2279
  %v2351 = vunpack.c.l.b16 %v2280
  %v2352 = vunpack.c.l.b16 %v2281
  %v2353 = vunpack.c.l.b16 %v2282
  %v2354 = vunpack.c.l.b16 %v2283
  %v2355 = vunpack.c.l.b16 %v2284
  %v2356 = vunpack.c.l.b16 %v2285
  %v2357 = vunpack.c.l.b16 %v2286
  %v2358 = vunpack.c.l.b16 %v2287
  %v2359 = vunpack.c.l.b16 %v2288
  %v2360 = vunpack.c.l.b16 %v2289
  %v2361 = vpack.c.b16 %v2330, %v2329
  %v2362 = vpack.c.b16 %v2332, %v2331
  %v2363 = vpack.c.b16 %v2334, %v2333
  %v2364 = vpack.c.b16 %v2336, %v2335
  %v2365 = vpack.c.b16 %v2338, %v2337
  %v2366 = vpack.c.b16 %v2340, %v2339
  %v2367 = vpack.c.b16 %v2342, %v2341
  %v2368 = vpack.c.b16 %v2344, %v2343
  %v2369 = vpack.c.b16 %v2346, %v2345
  %v2370 = vpack.c.b16 %v2348, %v2347
  %v2371 = vpack.c.b16 %v2350, %v2349
  %v2372 = vpack.c.b16 %v2352, %v2351
  %v2373 = vpack.c.b16 %v2354, %v2353
  %v2374 = vpack.c.b16 %v2356, %v2355
  %v2375 = vpack.c.b16 %v2358, %v2357
  %v2376 = vpack.c.b16 %v2360, %v2359
  %2393 = vmatprep.subr.bf16.mxu0 0
  %2394 = vmatpush1.bf16.msra.mxu0 %v2361
  %2395 = vmatprep.subr.bf16.mxu0 0
  %2396 = vmatpush1.bf16.msra.mxu0 %v2362
  %2397 = vmatprep.subr.bf16.mxu0 0
  %2398 = vmatpush1.bf16.msra.mxu0 %v2363
  %2399 = vmatprep.subr.bf16.mxu0 0
  %2400 = vmatpush1.bf16.msra.mxu0 %v2364
  %2401 = vmatprep.subr.bf16.mxu0 0
  %2402 = vmatpush1.bf16.msra.mxu0 %v2365
  %2403 = vmatprep.subr.bf16.mxu0 0
  %2404 = vmatpush1.bf16.msra.mxu0 %v2366
  %2405 = vmatprep.subr.bf16.mxu0 0
  %2406 = vmatpush1.bf16.msra.mxu0 %v2367
  %2407 = vmatprep.subr.bf16.mxu0 0
  %2408 = vmatpush1.bf16.msra.mxu0 %v2368
  %2409 = vmatprep.subr.bf16.mxu0 0
  %2410 = vmatpush1.bf16.msra.mxu0 %v2369
  %2411 = vmatprep.subr.bf16.mxu0 0
  %2412 = vmatpush1.bf16.msra.mxu0 %v2370
  %2413 = vmatprep.subr.bf16.mxu0 0
  %2414 = vmatpush1.bf16.msra.mxu0 %v2371
  %2415 = vmatprep.subr.bf16.mxu0 0
  %2416 = vmatpush1.bf16.msra.mxu0 %v2372
  %2417 = vmatprep.subr.bf16.mxu0 0
  %2418 = vmatpush1.bf16.msra.mxu0 %v2373
  %2419 = vmatprep.subr.bf16.mxu0 0
  %2420 = vmatpush1.bf16.msra.mxu0 %v2374
  %2421 = vmatprep.subr.bf16.mxu0 0
  %2422 = vmatpush1.bf16.msra.mxu0 %v2375
  %2423 = vmatprep.subr.bf16.mxu0 0
  %2424 = vmatpush1.bf16.msra.mxu0 %v2376
  %2425 = vmatprep.mubr.bf16.mxu0 %v2257
  %2426 = vmatmul.mubr.bf16.gmra.mrb[0].mxu0 %v2256
  %v2427 = vpop.f32.mrb[0].mxu0
  %v2428 = vadd.f32 %v2295, %v2427
  %v2429 = vpop.f32.mrb[0].mxu0
  %v2430 = vpop.f32.mrb[0].mxu0
  %v2431 = vpop.f32.mrb[0].mxu0
  %2432 = vdwg.mxu0
  %v2433 = vpack.c.bf16 %v2428, %v2428
  %v2434 = vld [vmem:[%s7] sm:$0xff]
  %v2435 = vld [vmem:[%s7 + $0x8] sm:$0xff]
  %v2436 = vld [vmem:[%s7 + $0x10] sm:$0xff]
  %v2437 = vld [vmem:[%s7 + $0x18] sm:$0xff]
  %v2438 = vld [vmem:[%s7 + $0x20] sm:$0xff]
  %v2439 = vld [vmem:[%s7 + $0x28] sm:$0xff]
  %v2440 = vld [vmem:[%s7 + $0x30] sm:$0xff]
  %v2441 = vld [vmem:[%s7 + $0x38] sm:$0xff]
  %v2442 = vld [vmem:[%s7 + $0x40] sm:$0xff]
  %v2443 = vld [vmem:[%s7 + $0x48] sm:$0xff]
  %v2444 = vld [vmem:[%s7 + $0x50] sm:$0xff]
  %v2445 = vld [vmem:[%s7 + $0x58] sm:$0xff]
  %v2446 = vld [vmem:[%s7 + $0x60] sm:$0xff]
  %v2447 = vld [vmem:[%s7 + $0x68] sm:$0xff]
  %v2448 = vld [vmem:[%s7 + $0x70] sm:$0xff]
  %v2449 = vld [vmem:[%s7 + $0x78] sm:$0xff]
  %v2450 = vld [vmem:[%s8] sm:$0x3]
  %v2452 = vlaneseq
  %v2453 = vshrl.u32 %v2452, 7
  %v2454 = vsub.s32 0, %v2453
  %v2455 = vrot.slane %v2450, %v2454
  %v2456 = vlaneseq
  %v2457 = vshrl.u32 %v2456, 7
  %v2458 = vsub.s32 1, %v2457
  %v2459 = vrot.slane %v2450, %v2458
  %v2478 = vunpack.c.l.b16 %v2434
  %v2479 = vunpack.c.h.b16 %v2434
  %v2480 = vunpack.c.l.b16 %v2435
  %v2481 = vunpack.c.h.b16 %v2435
  %v2482 = vunpack.c.l.b16 %v2436
  %v2483 = vunpack.c.h.b16 %v2436
  %v2484 = vunpack.c.l.b16 %v2437
  %v2485 = vunpack.c.h.b16 %v2437
  %v2486 = vunpack.c.l.b16 %v2438
  %v2487 = vunpack.c.h.b16 %v2438
  %v2488 = vunpack.c.l.b16 %v2439
  %v2489 = vunpack.c.h.b16 %v2439
  %v2490 = vunpack.c.l.b16 %v2440
  %v2491 = vunpack.c.h.b16 %v2440
  %v2492 = vunpack.c.l.b16 %v2441
  %v2493 = vunpack.c.h.b16 %v2441
  %v2494 = vunpack.c.l.b16 %v2442
  %v2495 = vunpack.c.h.b16 %v2442
  %v2496 = vunpack.c.l.b16 %v2443
  %v2497 = vunpack.c.h.b16 %v2443
  %v2498 = vunpack.c.l.b16 %v2444
  %v2499 = vunpack.c.h.b16 %v2444
  %v2500 = vunpack.c.l.b16 %v2445
  %v2501 = vunpack.c.h.b16 %v2445
  %v2502 = vunpack.c.l.b16 %v2446
  %v2503 = vunpack.c.h.b16 %v2446
  %v2504 = vunpack.c.l.b16 %v2447
  %v2505 = vunpack.c.h.b16 %v2447
  %v2506 = vunpack.c.l.b16 %v2448
  %v2507 = vunpack.c.h.b16 %v2448
  %v2508 = vunpack.c.l.b16 %v2449
  %v2509 = vunpack.c.h.b16 %v2449
  %v2510 = vpack.c.b16 %v2480, %v2478
  %v2511 = vpack.c.b16 %v2481, %v2479
  %v2512 = vpack.c.b16 %v2484, %v2482
  %v2513 = vpack.c.b16 %v2485, %v2483
  %v2514 = vpack.c.b16 %v2488, %v2486
  %v2515 = vpack.c.b16 %v2489, %v2487
  %v2516 = vpack.c.b16 %v2492, %v2490
  %v2517 = vpack.c.b16 %v2493, %v2491
  %v2518 = vpack.c.b16 %v2496, %v2494
  %v2519 = vpack.c.b16 %v2497, %v2495
  %v2520 = vpack.c.b16 %v2500, %v2498
  %v2521 = vpack.c.b16 %v2501, %v2499
  %v2522 = vpack.c.b16 %v2504, %v2502
  %v2523 = vpack.c.b16 %v2505, %v2503
  %v2524 = vpack.c.b16 %v2508, %v2506
  %v2525 = vpack.c.b16 %v2509, %v2507
  %2542 = vmatprep.subr.bf16.mxu0 %v2511
  %2543 = vmatpush1.bf16.msra.mxu0 %v2510
  %2544 = vmatprep.subr.bf16.mxu0 %v2513
  %2545 = vmatpush1.bf16.msra.mxu0 %v2512
  %2546 = vmatprep.subr.bf16.mxu0 %v2515
  %2547 = vmatpush1.bf16.msra.mxu0 %v2514
  %2548 = vmatprep.subr.bf16.mxu0 %v2517
  %2549 = vmatpush1.bf16.msra.mxu0 %v2516
  %2550 = vmatprep.subr.bf16.mxu0 %v2519
  %2551 = vmatpush1.bf16.msra.mxu0 %v2518
  %2552 = vmatprep.subr.bf16.mxu0 %v2521
  %2553 = vmatpush1.bf16.msra.mxu0 %v2520
  %2554 = vmatprep.subr.bf16.mxu0 %v2523
  %2555 = vmatpush1.bf16.msra.mxu0 %v2522
  %2556 = vmatprep.subr.bf16.mxu0 %v2525
  %2557 = vmatpush1.bf16.msra.mxu0 %v2524
  %2558 = vmatprep.subr.bf16.mxu0 0
  %2559 = vmatpush1.bf16.msra.mxu0 0
  %2560 = vmatprep.subr.bf16.mxu0 0
  %2561 = vmatpush1.bf16.msra.mxu0 0
  %2562 = vmatprep.subr.bf16.mxu0 0
  %2563 = vmatpush1.bf16.msra.mxu0 0
  %2564 = vmatprep.subr.bf16.mxu0 0
  %2565 = vmatpush1.bf16.msra.mxu0 0
  %2566 = vmatprep.subr.bf16.mxu0 0
  %2567 = vmatpush1.bf16.msra.mxu0 0
  %2568 = vmatprep.subr.bf16.mxu0 0
  %2569 = vmatpush1.bf16.msra.mxu0 0
  %2570 = vmatprep.subr.bf16.mxu0 0
  %2571 = vmatpush1.bf16.msra.mxu0 0
  %2572 = vmatprep.subr.bf16.mxu0 0
  %2573 = vmatpush1.bf16.msra.mxu0 0
  %2574 = vmatprep.mubr.bf16.mxu0 0
  %2575 = vmatmul.mubr.bf16.gmra.mrb[0].mxu0 %v2433
  %v2576 = vpop.f32.mrb[0].mxu0
  %v2577 = vadd.f32 %v2455, %v2576
  %v2578 = vpop.f32.mrb[0].mxu0
  %v2579 = vadd.f32 %v2459, %v2578
  %v2580 = vpop.f32.mrb[0].mxu0
  %v2581 = vpop.f32.mrb[0].mxu0
  %2582 = vdwg.mxu0
  %v2583 = vmax.f32 %v2577, 0.0
  %v2584 = vmax.f32 %v2579, 0.0
  %v2585 = vpack.c.bf16 %v2583, %v2583
  %v2586 = vpack.c.bf16 %v2584, %v2584
  %v2587 = vld [vmem:[%s9] sm:$0xff]
  %v2588 = vld [vmem:[%s9 + $0x8] sm:$0xff]
  %v2589 = vld [vmem:[%s9 + $0x10] sm:$0xff]
  %v2590 = vld [vmem:[%s9 + $0x18] sm:$0xff]
  %v2591 = vld [vmem:[%s9 + $0x20] sm:$0xff]
  %v2592 = vld [vmem:[%s9 + $0x28] sm:$0xff]
  %v2593 = vld [vmem:[%s9 + $0x30] sm:$0xff]
  %v2594 = vld [vmem:[%s9 + $0x38] sm:$0xff]
  %v2595 = vld [vmem:[%s9 + $0x40] sm:$0xff]
  %v2596 = vld [vmem:[%s9 + $0x48] sm:$0xff]
  %v2597 = vld [vmem:[%s9 + $0x50] sm:$0xff]
  %v2598 = vld [vmem:[%s9 + $0x58] sm:$0xff]
  %v2599 = vld [vmem:[%s9 + $0x60] sm:$0xff]
  %v2600 = vld [vmem:[%s9 + $0x68] sm:$0xff]
  %v2601 = vld [vmem:[%s9 + $0x70] sm:$0xff]
  %v2602 = vld [vmem:[%s9 + $0x78] sm:$0xff]
  %v2603 = vld [vmem:[%s9 + $0x80] sm:$0xff]
  %v2604 = vld [vmem:[%s9 + $0x88] sm:$0xff]
  %v2605 = vld [vmem:[%s9 + $0x90] sm:$0xff]
  %v2606 = vld [vmem:[%s9 + $0x98] sm:$0xff]
  %v2607 = vld [vmem:[%s9 + $0xa0] sm:$0xff]
  %v2608 = vld [vmem:[%s9 + $0xa8] sm:$0xff]
  %v2609 = vld [vmem:[%s9 + $0xb0] sm:$0xff]
  %v2610 = vld [vmem:[%s9 + $0xb8] sm:$0xff]
  %v2611 = vld [vmem:[%s9 + $0xc0] sm:$0xff]
  %v2612 = vld [vmem:[%s9 + $0xc8] sm:$0xff]
  %v2613 = vld [vmem:[%s9 + $0xd0] sm:$0xff]
  %v2614 = vld [vmem:[%s9 + $0xd8] sm:$0xff]
  %v2615 = vld [vmem:[%s9 + $0xe0] sm:$0xff]
  %v2616 = vld [vmem:[%s9 + $0xe8] sm:$0xff]
  %v2617 = vld [vmem:[%s9 + $0xf0] sm:$0xff]
  %v2618 = vld [vmem:[%s9 + $0xf8] sm:$0xff]
  %v2619 = vld [vmem:[%s9 + $0x100] sm:$0xff]
  %v2620 = vld [vmem:[%s9 + $0x108] sm:$0xff]
  %v2621 = vld [vmem:[%s9 + $0x110] sm:$0xff]
  %v2622 = vld [vmem:[%s9 + $0x118] sm:$0xff]
  %v2623 = vld [vmem:[%s9 + $0x120] sm:$0xff]
  %v2624 = vld [vmem:[%s9 + $0x128] sm:$0xff]
  %v2625 = vld [vmem:[%s9 + $0x130] sm:$0xff]
  %v2626 = vld [vmem:[%s9 + $0x138] sm:$0xff]
  %v2627 = vld [vmem:[%s9 + $0x140] sm:$0xff]
  %v2628 = vld [vmem:[%s9 + $0x148] sm:$0xff]
  %v2629 = vld [vmem:[%s9 + $0x150] sm:$0xff]
  %v2630 = vld [vmem:[%s9 + $0x158] sm:$0xff]
  %v2631 = vld [vmem:[%s9 + $0x160] sm:$0xff]
  %v2632 = vld [vmem:[%s9 + $0x168] sm:$0xff]
  %v2633 = vld [vmem:[%s9 + $0x170] sm:$0xff]
  %v2634 = vld [vmem:[%s9 + $0x178] sm:$0xff]
  %v2635 = vld [vmem:[%s9 + $0x180] sm:$0xff]
  %v2636 = vld [vmem:[%s9 + $0x188] sm:$0xff]
  %v2637 = vld [vmem:[%s9 + $0x190] sm:$0xff]
  %v2638 = vld [vmem:[%s9 + $0x198] sm:$0xff]
  %v2639 = vld [vmem:[%s9 + $0x1a0] sm:$0xff]
  %v2640 = vld [vmem:[%s9 + $0x1a8] sm:$0xff]
  %v2641 = vld [vmem:[%s9 + $0x1b0] sm:$0xff]
  %v2642 = vld [vmem:[%s9 + $0x1b8] sm:$0xff]
  %v2643 = vld [vmem:[%s9 + $0x1c0] sm:$0xff]
  %v2644 = vld [vmem:[%s9 + $0x1c8] sm:$0xff]
  %v2645 = vld [vmem:[%s9 + $0x1d0] sm:$0xff]
  %v2646 = vld [vmem:[%s9 + $0x1d8] sm:$0xff]
  %v2647 = vld [vmem:[%s9 + $0x1e0] sm:$0xff]
  %v2648 = vld [vmem:[%s9 + $0x1e8] sm:$0xff]
  %v2649 = vld [vmem:[%s9 + $0x1f0] sm:$0xff]
  %v2650 = vld [vmem:[%s9 + $0x1f8] sm:$0xff]
  %v2651 = vld [vmem:[%s10] sm:$0xf]
  %v2653 = vlaneseq
  %v2654 = vshrl.u32 %v2653, 7
  %v2655 = vsub.s32 0, %v2654
  %v2656 = vrot.slane %v2651, %v2655
  %v2657 = vlaneseq
  %v2658 = vshrl.u32 %v2657, 7
  %v2659 = vsub.s32 1, %v2658
  %v2660 = vrot.slane %v2651, %v2659
  %v2661 = vlaneseq
  %v2662 = vshrl.u32 %v2661, 7
  %v2663 = vsub.s32 2, %v2662
  %v2664 = vrot.slane %v2651, %v2663
  %v2665 = vlaneseq
  %v2666 = vshrl.u32 %v2665, 7
  %v2667 = vsub.s32 3, %v2666
  %v2668 = vrot.slane %v2651, %v2667
  %v2737 = vunpack.c.l.b16 %v2587
  %v2738 = vunpack.c.h.b16 %v2587
  %v2739 = vunpack.c.l.b16 %v2588
  %v2740 = vunpack.c.h.b16 %v2588
  %v2741 = vunpack.c.l.b16 %v2589
  %v2742 = vunpack.c.h.b16 %v2589
  %v2743 = vunpack.c.l.b16 %v2590
  %v2744 = vunpack.c.h.b16 %v2590
  %v2745 = vunpack.c.l.b16 %v2591
  %v2746 = vunpack.c.h.b16 %v2591
  %v2747 = vunpack.c.l.b16 %v2592
  %v2748 = vunpack.c.h.b16 %v2592
  %v2749 = vunpack.c.l.b16 %v2593
  %v2750 = vunpack.c.h.b16 %v2593
  %v2751 = vunpack.c.l.b16 %v2594
  %v2752 = vunpack.c.h.b16 %v2594
  %v2753 = vunpack.c.l.b16 %v2595
  %v2754 = vunpack.c.h.b16 %v2595
  %v2755 = vunpack.c.l.b16 %v2596
  %v2756 = vunpack.c.h.b16 %v2596
  %v2757 = vunpack.c.l.b16 %v2597
  %v2758 = vunpack.c.h.b16 %v2597
  %v2759 = vunpack.c.l.b16 %v2598
  %v2760 = vunpack.c.h.b16 %v2598
  %v2761 = vunpack.c.l.b16 %v2599
  %v2762 = vunpack.c.h.b16 %v2599
  %v2763 = vunpack.c.l.b16 %v2600
  %v2764 = vunpack.c.h.b16 %v2600
  %v2765 = vunpack.c.l.b16 %v2601
  %v2766 = vunpack.c.h.b16 %v2601
  %v2767 = vunpack.c.l.b16 %v2602
  %v2768 = vunpack.c.h.b16 %v2602
  %v2769 = vunpack.c.l.b16 %v2603
  %v2770 = vunpack.c.h.b16 %v2603
  %v2771 = vunpack.c.l.b16 %v2604
  %v2772 = vunpack.c.h.b16 %v2604
  %v2773 = vunpack.c.l.b16 %v2605
  %v2774 = vunpack.c.h.b16 %v2605
  %v2775 = vunpack.c.l.b16 %v2606
  %v2776 = vunpack.c.h.b16 %v2606
  %v2777 = vunpack.c.l.b16 %v2607
  %v2778 = vunpack.c.h.b16 %v2607
  %v2779 = vunpack.c.l.b16 %v2608
  %v2780 = vunpack.c.h.b16 %v2608
  %v2781 = vunpack.c.l.b16 %v2609
  %v2782 = vunpack.c.h.b16 %v2609
  %v2783 = vunpack.c.l.b16 %v2610
  %v2784 = vunpack.c.h.b16 %v2610
  %v2785 = vunpack.c.l.b16 %v2611
  %v2786 = vunpack.c.h.b16 %v2611
  %v2787 = vunpack.c.l.b16 %v2612
  %v2788 = vunpack.c.h.b16 %v2612
  %v2789 = vunpack.c.l.b16 %v2613
  %v2790 = vunpack.c.h.b16 %v2613
  %v2791 = vunpack.c.l.b16 %v2614
  %v2792 = vunpack.c.h.b16 %v2614
  %v2793 = vunpack.c.l.b16 %v2615
  %v2794 = vunpack.c.h.b16 %v2615
  %v2795 = vunpack.c.l.b16 %v2616
  %v2796 = vunpack.c.h.b16 %v2616
  %v2797 = vunpack.c.l.b16 %v2617
  %v2798 = vunpack.c.h.b16 %v2617
  %v2799 = vunpack.c.l.b16 %v2618
  %v2800 = vunpack.c.h.b16 %v2618
  %v2801 = vunpack.c.l.b16 %v2619
  %v2802 = vunpack.c.h.b16 %v2619
  %v2803 = vunpack.c.l.b16 %v2620
  %v2804 = vunpack.c.h.b16 %v2620
  %v2805 = vunpack.c.l.b16 %v2621
  %v2806 = vunpack.c.h.b16 %v2621
  %v2807 = vunpack.c.l.b16 %v2622
  %v2808 = vunpack.c.h.b16 %v2622
  %v2809 = vunpack.c.l.b16 %v2623
  %v2810 = vunpack.c.h.b16 %v2623
  %v2811 = vunpack.c.l.b16 %v2624
  %v2812 = vunpack.c.h.b16 %v2624
  %v2813 = vunpack.c.l.b16 %v2625
  %v2814 = vunpack.c.h.b16 %v2625
  %v2815 = vunpack.c.l.b16 %v2626
  %v2816 = vunpack.c.h.b16 %v2626
  %v2817 = vunpack.c.l.b16 %v2627
  %v2818 = vunpack.c.h.b16 %v2627
  %v2819 = vunpack.c.l.b16 %v2628
  %v2820 = vunpack.c.h.b16 %v2628
  %v2821 = vunpack.c.l.b16 %v2629
  %v2822 = vunpack.c.h.b16 %v2629
  %v2823 = vunpack.c.l.b16 %v2630
  %v2824 = vunpack.c.h.b16 %v2630
  %v2825 = vunpack.c.l.b16 %v2631
  %v2826 = vunpack.c.h.b16 %v2631
  %v2827 = vunpack.c.l.b16 %v2632
  %v2828 = vunpack.c.h.b16 %v2632
  %v2829 = vunpack.c.l.b16 %v2633
  %v2830 = vunpack.c.h.b16 %v2633
  %v2831 = vunpack.c.l.b16 %v2634
  %v2832 = vunpack.c.h.b16 %v2634
  %v2833 = vunpack.c.l.b16 %v2635
  %v2834 = vunpack.c.h.b16 %v2635
  %v2835 = vunpack.c.l.b16 %v2636
  %v2836 = vunpack.c.h.b16 %v2636
  %v2837 = vunpack.c.l.b16 %v2637
  %v2838 = vunpack.c.h.b16 %v2637
  %v2839 = vunpack.c.l.b16 %v2638
  %v2840 = vunpack.c.h.b16 %v2638
  %v2841 = vunpack.c.l.b16 %v2639
  %v2842 = vunpack.c.h.b16 %v2639
  %v2843 = vunpack.c.l.b16 %v2640
  %v2844 = vunpack.c.h.b16 %v2640
  %v2845 = vunpack.c.l.b16 %v2641
  %v2846 = vunpack.c.h.b16 %v2641
  %v2847 = vunpack.c.l.b16 %v2642
  %v2848 = vunpack.c.h.b16 %v2642
  %v2849 = vunpack.c.l.b16 %v2643
  %v2850 = vunpack.c.h.b16 %v2643
  %v2851 = vunpack.c.l.b16 %v2644
  %v2852 = vunpack.c.h.b16 %v2644
  %v2853 = vunpack.c.l.b16 %v2645
  %v2854 = vunpack.c.h.b16 %v2645
  %v2855 = vunpack.c.l.b16 %v2646
  %v2856 = vunpack.c.h.b16 %v2646
  %v2857 = vunpack.c.l.b16 %v2647
  %v2858 = vunpack.c.h.b16 %v2647
  %v2859 = vunpack.c.l.b16 %v2648
  %v2860 = vunpack.c.h.b16 %v2648
  %v2861 = vunpack.c.l.b16 %v2649
  %v2862 = vunpack.c.h.b16 %v2649
  %v2863 = vunpack.c.l.b16 %v2650
  %v2864 = vunpack.c.h.b16 %v2650
  %v2865 = vpack.c.b16 %v2741, %v2737
  %v2866 = vpack.c.b16 %v2742, %v2738
  %v2867 = vpack.c.b16 %v2743, %v2739
  %v2868 = vpack.c.b16 %v2744, %v2740
  %v2869 = vpack.c.b16 %v2749, %v2745
  %v2870 = vpack.c.b16 %v2750, %v2746
  %v2871 = vpack.c.b16 %v2751, %v2747
  %v2872 = vpack.c.b16 %v2752, %v2748
  %v2873 = vpack.c.b16 %v2757, %v2753
  %v2874 = vpack.c.b16 %v2758, %v2754
  %v2875 = vpack.c.b16 %v2759, %v2755
  %v2876 = vpack.c.b16 %v2760, %v2756
  %v2877 = vpack.c.b16 %v2765, %v2761
  %v2878 = vpack.c.b16 %v2766, %v2762
  %v2879 = vpack.c.b16 %v2767, %v2763
  %v2880 = vpack.c.b16 %v2768, %v2764
  %v2881 = vpack.c.b16 %v2773, %v2769
  %v2882 = vpack.c.b16 %v2774, %v2770
  %v2883 = vpack.c.b16 %v2775, %v2771
  %v2884 = vpack.c.b16 %v2776, %v2772
  %v2885 = vpack.c.b16 %v2781, %v2777
  %v2886 = vpack.c.b16 %v2782, %v2778
  %v2887 = vpack.c.b16 %v2783, %v2779
  %v2888 = vpack.c.b16 %v2784, %v2780
  %v2889 = vpack.c.b16 %v2789, %v2785
  %v2890 = vpack.c.b16 %v2790, %v2786
  %v2891 = vpack.c.b16 %v2791, %v2787
  %v2892 = vpack.c.b16 %v2792, %v2788
  %v2893 = vpack.c.b16 %v2797, %v2793
  %v2894 = vpack.c.b16 %v2798, %v2794
  %v2895 = vpack.c.b16 %v2799, %v2795
  %v2896 = vpack.c.b16 %v2800, %v2796
  %v2897 = vpack.c.b16 %v2805, %v2801
  %v2898 = vpack.c.b16 %v2806, %v2802
  %v2899 = vpack.c.b16 %v2807, %v2803
  %v2900 = vpack.c.b16 %v2808, %v2804
  %v2901 = vpack.c.b16 %v2813, %v2809
  %v2902 = vpack.c.b16 %v2814, %v2810
  %v2903 = vpack.c.b16 %v2815, %v2811
  %v2904 = vpack.c.b16 %v2816, %v2812
  %v2905 = vpack.c.b16 %v2821, %v2817
  %v2906 = vpack.c.b16 %v2822, %v2818
  %v2907 = vpack.c.b16 %v2823, %v2819
  %v2908 = vpack.c.b16 %v2824, %v2820
  %v2909 = vpack.c.b16 %v2829, %v2825
  %v2910 = vpack.c.b16 %v2830, %v2826
  %v2911 = vpack.c.b16 %v2831, %v2827
  %v2912 = vpack.c.b16 %v2832, %v2828
  %v2913 = vpack.c.b16 %v2837, %v2833
  %v2914 = vpack.c.b16 %v2838, %v2834
  %v2915 = vpack.c.b16 %v2839, %v2835
  %v2916 = vpack.c.b16 %v2840, %v2836
  %v2917 = vpack.c.b16 %v2845, %v2841
  %v2918 = vpack.c.b16 %v2846, %v2842
  %v2919 = vpack.c.b16 %v2847, %v2843
  %v2920 = vpack.c.b16 %v2848, %v2844
  %v2921 = vpack.c.b16 %v2853, %v2849
  %v2922 = vpack.c.b16 %v2854, %v2850
  %v2923 = vpack.c.b16 %v2855, %v2851
  %v2924 = vpack.c.b16 %v2856, %v2852
  %v2925 = vpack.c.b16 %v2861, %v2857
  %v2926 = vpack.c.b16 %v2862, %v2858
  %v2927 = vpack.c.b16 %v2863, %v2859
  %v2928 = vpack.c.b16 %v2864, %v2860
  %2993 = vmatprep.subr.bf16.mxu0 %v2866
  %2994 = vmatpush1.bf16.msra.mxu0 %v2865
  %2995 = vmatprep.subr.bf16.mxu0 %v2870
  %2996 = vmatpush1.bf16.msra.mxu0 %v2869
  %2997 = vmatprep.subr.bf16.mxu0 %v2874
  %2998 = vmatpush1.bf16.msra.mxu0 %v2873
  %2999 = vmatprep.subr.bf16.mxu0 %v2878
  %3000 = vmatpush1.bf16.msra.mxu0 %v2877
  %3001 = vmatprep.subr.bf16.mxu0 %v2882
  %3002 = vmatpush1.bf16.msra.mxu0 %v2881
  %3003 = vmatprep.subr.bf16.mxu0 %v2886
  %3004 = vmatpush1.bf16.msra.mxu0 %v2885
  %3005 = vmatprep.subr.bf16.mxu0 %v2890
  %3006 = vmatpush1.bf16.msra.mxu0 %v2889
  %3007 = vmatprep.subr.bf16.mxu0 %v2894
  %3008 = vmatpush1.bf16.msra.mxu0 %v2893
  %3009 = vmatprep.subr.bf16.mxu0 %v2898
  %3010 = vmatpush1.bf16.msra.mxu0 %v2897
  %3011 = vmatprep.subr.bf16.mxu0 %v2902
  %3012 = vmatpush1.bf16.msra.mxu0 %v2901
  %3013 = vmatprep.subr.bf16.mxu0 %v2906
  %3014 = vmatpush1.bf16.msra.mxu0 %v2905
  %3015 = vmatprep.subr.bf16.mxu0 %v2910
  %3016 = vmatpush1.bf16.msra.mxu0 %v2909
  %3017 = vmatprep.subr.bf16.mxu0 %v2914
  %3018 = vmatpush1.bf16.msra.mxu0 %v2913
  %3019 = vmatprep.subr.bf16.mxu0 %v2918
  %3020 = vmatpush1.bf16.msra.mxu0 %v2917
  %3021 = vmatprep.subr.bf16.mxu0 %v2922
  %3022 = vmatpush1.bf16.msra.mxu0 %v2921
  %3023 = vmatprep.subr.bf16.mxu0 %v2926
  %3024 = vmatpush1.bf16.msra.mxu0 %v2925
  %3025 = vmatprep.mubr.bf16.mxu0 %v2586
  %3026 = vmatmul.mubr.bf16.gmra.mrb[0].mxu0 %v2585
  %v3027 = vpop.f32.mrb[0].mxu0
  %v3028 = vadd.f32 %v2656, %v3027
  %v3029 = vpop.f32.mrb[0].mxu0
  %v3030 = vadd.f32 %v2660, %v3029
  %v3031 = vpop.f32.mrb[0].mxu0
  %v3032 = vpop.f32.mrb[0].mxu0
  %3033 = vdwg.mxu0
  %3034 = vmatprep.subr.bf16.mxu0 %v2868
  %3035 = vmatpush1.bf16.msra.mxu0 %v2867
  %3036 = vmatprep.subr.bf16.mxu0 %v2872
  %3037 = vmatpush1.bf16.msra.mxu0 %v2871
  %3038 = vmatprep.subr.bf16.mxu0 %v2876
  %3039 = vmatpush1.bf16.msra.mxu0 %v2875
  %3040 = vmatprep.subr.bf16.mxu0 %v2880
  %3041 = vmatpush1.bf16.msra.mxu0 %v2879
  %3042 = vmatprep.subr.bf16.mxu0 %v2884
  %3043 = vmatpush1.bf16.msra.mxu0 %v2883
  %3044 = vmatprep.subr.bf16.mxu0 %v2888
  %3045 = vmatpush1.bf16.msra.mxu0 %v2887
  %3046 = vmatprep.subr.bf16.mxu0 %v2892
  %3047 = vmatpush1.bf16.msra.mxu0 %v2891
  %3048 = vmatprep.subr.bf16.mxu0 %v2896
  %3049 = vmatpush1.bf16.msra.mxu0 %v2895
  %3050 = vmatprep.subr.bf16.mxu0 %v2900
  %3051 = vmatpush1.bf16.msra.mxu0 %v2899
  %3052 = vmatprep.subr.bf16.mxu0 %v2904
  %3053 = vmatpush1.bf16.msra.mxu0 %v2903
  %3054 = vmatprep.subr.bf16.mxu0 %v2908
  %3055 = vmatpush1.bf16.msra.mxu0 %v2907
  %3056 = vmatprep.subr.bf16.mxu0 %v2912
  %3057 = vmatpush1.bf16.msra.mxu0 %v2911
  %3058 = vmatprep.subr.bf16.mxu0 %v2916
  %3059 = vmatpush1.bf16.msra.mxu0 %v2915
  %3060 = vmatprep.subr.bf16.mxu0 %v2920
  %3061 = vmatpush1.bf16.msra.mxu0 %v2919
  %3062 = vmatprep.subr.bf16.mxu0 %v2924
  %3063 = vmatpush1.bf16.msra.mxu0 %v2923
  %3064 = vmatprep.subr.bf16.mxu0 %v2928
  %3065 = vmatpush1.bf16.msra.mxu0 %v2927
  %3066 = vmatprep.mubr.bf16.mxu0 %v2586
  %3067 = vmatmul.mubr.bf16.gmra.mrb[0].mxu0 %v2585
  %v3068 = vpop.f32.mrb[0].mxu0
  %v3069 = vadd.f32 %v2664, %v3068
  %v3070 = vpop.f32.mrb[0].mxu0
  %v3071 = vadd.f32 %v2668, %v3070
  %v3072 = vpop.f32.mrb[0].mxu0
  %v3073 = vpop.f32.mrb[0].mxu0
  %3074 = vdwg.mxu0
  %v3075 = vmax.f32 %v3028, 0.0
  %v3076 = vmax.f32 %v3030, 0.0
  %v3077 = vmax.f32 %v3069, 0.0
  %v3078 = vmax.f32 %v3071, 0.0
  %v3079 = vpack.c.bf16 %v3075, %v3075
  %v3080 = vpack.c.bf16 %v3076, %v3076
  %v3081 = vpack.c.bf16 %v3077, %v3077
  %v3082 = vpack.c.bf16 %v3078, %v3078
  %v3083 = vld [vmem:[%s11] sm:$0xff]
  %v3084 = vld [vmem:[%s11 + $0x8] sm:$0xff]
  %v3085 = vld [vmem:[%s11 + $0x10] sm:$0xff]
  %v3086 = vld [vmem:[%s11 + $0x18] sm:$0xf]
  %v3087 = vld [vmem:[%s11 + $0x1c] sm:$0xff]
  %v3088 = vld [vmem:[%s11 + $0x24] sm:$0xff]
  %v3089 = vld [vmem:[%s11 + $0x2c] sm:$0xff]
  %v3090 = vld [vmem:[%s11 + $0x34] sm:$0xf]
  %v3091 = vld [vmem:[%s11 + $0x38] sm:$0xff]
  %v3092 = vld [vmem:[%s11 + $0x40] sm:$0xff]
  %v3093 = vld [vmem:[%s11 + $0x48] sm:$0xff]
  %v3094 = vld [vmem:[%s11 + $0x50] sm:$0xf]
  %v3095 = vld [vmem:[%s11 + $0x54] sm:$0xff]
  %v3096 = vld [vmem:[%s11 + $0x5c] sm:$0xff]
  %v3097 = vld [vmem:[%s11 + $0x64] sm:$0xff]
  %v3098 = vld [vmem:[%s11 + $0x6c] sm:$0xf]
  %v3099 = vld [vmem:[%s11 + $0x70] sm:$0xff]
  %v3100 = vld [vmem:[%s11 + $0x78] sm:$0xff]
  %v3101 = vld [vmem:[%s11 + $0x80] sm:$0xff]
  %v3102 = vld [vmem:[%s11 + $0x88] sm:$0xf]
  %v3103 = vld [vmem:[%s11 + $0x8c] sm:$0xff]
  %v3104 = vld [vmem:[%s11 + $0x94] sm:$0xff]
  %v3105 = vld [vmem:[%s11 + $0x9c] sm:$0xff]
  %v3106 = vld [vmem:[%s11 + $0xa4] sm:$0xf]
  %v3107 = vld [vmem:[%s11 + $0xa8] sm:$0xff]
  %v3108 = vld [vmem:[%s11 + $0xb0] sm:$0xff]
  %v3109 = vld [vmem:[%s11 + $0xb8] sm:$0xff]
  %v3110 = vld [vmem:[%s11 + $0xc0] sm:$0xf]
  %v3111 = vld [vmem:[%s11 + $0xc4] sm:$0xff]
  %v3112 = vld [vmem:[%s11 + $0xcc] sm:$0xff]
  %v3113 = vld [vmem:[%s11 + $0xd4] sm:$0xff]
  %v3114 = vld [vmem:[%s11 + $0xdc] sm:$0xf]
  %v3115 = vld [vmem:[%s11 + $0xe0] sm:$0xff]
  %v3116 = vld [vmem:[%s11 + $0xe8] sm:$0xff]
  %v3117 = vld [vmem:[%s11 + $0xf0] sm:$0xff]
  %v3118 = vld [vmem:[%s11 + $0xf8] sm:$0xf]
  %v3119 = vld [vmem:[%s11 + $0xfc] sm:$0xff]
  %v3120 = vld [vmem:[%s11 + $0x104] sm:$0xff]
  %v3121 = vld [vmem:[%s11 + $0x10c] sm:$0xff]
  %v3122 = vld [vmem:[%s11 + $0x114] sm:$0xf]
  %v3123 = vld [vmem:[%s11 + $0x118] sm:$0xff]
  %v3124 = vld [vmem:[%s11 + $0x120] sm:$0xff]
  %v3125 = vld [vmem:[%s11 + $0x128] sm:$0xff]
  %v3126 = vld [vmem:[%s11 + $0x130] sm:$0xf]
  %v3127 = vld [vmem:[%s11 + $0x134] sm:$0xff]
  %v3128 = vld [vmem:[%s11 + $0x13c] sm:$0xff]
  %v3129 = vld [vmem:[%s11 + $0x144] sm:$0xff]
  %v3130 = vld [vmem:[%s11 + $0x14c] sm:$0xf]
  %v3131 = vld [vmem:[%s11 + $0x150] sm:$0xff]
  %v3132 = vld [vmem:[%s11 + $0x158] sm:$0xff]
  %v3133 = vld [vmem:[%s11 + $0x160] sm:$0xff]
  %v3134 = vld [vmem:[%s11 + $0x168] sm:$0xf]
  %v3135 = vld [vmem:[%s11 + $0x16c] sm:$0xff]
  %v3136 = vld [vmem:[%s11 + $0x174] sm:$0xff]
  %v3137 = vld [vmem:[%s11 + $0x17c] sm:$0xff]
  %v3138 = vld [vmem:[%s11 + $0x184] sm:$0xf]
  %v3139 = vld [vmem:[%s11 + $0x188] sm:$0xff]
  %v3140 = vld [vmem:[%s11 + $0x190] sm:$0xff]
  %v3141 = vld [vmem:[%s11 + $0x198] sm:$0xff]
  %v3142 = vld [vmem:[%s11 + $0x1a0] sm:$0xf]
  %v3143 = vld [vmem:[%s11 + $0x1a4] sm:$0xff]
  %v3144 = vld [vmem:[%s11 + $0x1ac] sm:$0xff]
  %v3145 = vld [vmem:[%s11 + $0x1b4] sm:$0xff]
  %v3146 = vld [vmem:[%s11 + $0x1bc] sm:$0xf]
  %v3147 = vld [vmem:[%s11 + $0x1c0] sm:$0xff]
  %v3148 = vld [vmem:[%s11 + $0x1c8] sm:$0xff]
  %v3149 = vld [vmem:[%s11 + $0x1d0] sm:$0xff]
  %v3150 = vld [vmem:[%s11 + $0x1d8] sm:$0xf]
  %v3151 = vld [vmem:[%s11 + $0x1dc] sm:$0xff]
  %v3152 = vld [vmem:[%s11 + $0x1e4] sm:$0xff]
  %v3153 = vld [vmem:[%s11 + $0x1ec] sm:$0xff]
  %v3154 = vld [vmem:[%s11 + $0x1f4] sm:$0xf]
  %v3155 = vld [vmem:[%s11 + $0x1f8] sm:$0xff]
  %v3156 = vld [vmem:[%s11 + $0x200] sm:$0xff]
  %v3157 = vld [vmem:[%s11 + $0x208] sm:$0xff]
  %v3158 = vld [vmem:[%s11 + $0x210] sm:$0xf]
  %v3159 = vld [vmem:[%s11 + $0x214] sm:$0xff]
  %v3160 = vld [vmem:[%s11 + $0x21c] sm:$0xff]
  %v3161 = vld [vmem:[%s11 + $0x224] sm:$0xff]
  %v3162 = vld [vmem:[%s11 + $0x22c] sm:$0xf]
  %v3163 = vld [vmem:[%s11 + $0x230] sm:$0xff]
  %v3164 = vld [vmem:[%s11 + $0x238] sm:$0xff]
  %v3165 = vld [vmem:[%s11 + $0x240] sm:$0xff]
  %v3166 = vld [vmem:[%s11 + $0x248] sm:$0xf]
  %v3167 = vld [vmem:[%s11 + $0x24c] sm:$0xff]
  %v3168 = vld [vmem:[%s11 + $0x254] sm:$0xff]
  %v3169 = vld [vmem:[%s11 + $0x25c] sm:$0xff]
  %v3170 = vld [vmem:[%s11 + $0x264] sm:$0xf]
  %v3171 = vld [vmem:[%s11 + $0x268] sm:$0xff]
  %v3172 = vld [vmem:[%s11 + $0x270] sm:$0xff]
  %v3173 = vld [vmem:[%s11 + $0x278] sm:$0xff]
  %v3174 = vld [vmem:[%s11 + $0x280] sm:$0xf]
  %v3175 = vld [vmem:[%s11 + $0x284] sm:$0xff]
  %v3176 = vld [vmem:[%s11 + $0x28c] sm:$0xff]
  %v3177 = vld [vmem:[%s11 + $0x294] sm:$0xff]
  %v3178 = vld [vmem:[%s11 + $0x29c] sm:$0xf]
  %v3179 = vld [vmem:[%s11 + $0x2a0] sm:$0xff]
  %v3180 = vld [vmem:[%s11 + $0x2a8] sm:$0xff]
  %v3181 = vld [vmem:[%s11 + $0x2b0] sm:$0xff]
  %v3182 = vld [vmem:[%s11 + $0x2b8] sm:$0xf]
  %v3183 = vld [vmem:[%s11 + $0x2bc] sm:$0xff]
  %v3184 = vld [vmem:[%s11 + $0x2c4] sm:$0xff]
  %v3185 = vld [vmem:[%s11 + $0x2cc] sm:$0xff]
  %v3186 = vld [vmem:[%s11 + $0x2d4] sm:$0xf]
  %v3187 = vld [vmem:[%s11 + $0x2d8] sm:$0xff]
  %v3188 = vld [vmem:[%s11 + $0x2e0] sm:$0xff]
  %v3189 = vld [vmem:[%s11 + $0x2e8] sm:$0xff]
  %v3190 = vld [vmem:[%s11 + $0x2f0] sm:$0xf]
  %v3191 = vld [vmem:[%s11 + $0x2f4] sm:$0xff]
  %v3192 = vld [vmem:[%s11 + $0x2fc] sm:$0xff]
  %v3193 = vld [vmem:[%s11 + $0x304] sm:$0xff]
  %v3194 = vld [vmem:[%s11 + $0x30c] sm:$0xf]
  %v3195 = vld [vmem:[%s11 + $0x310] sm:$0xff]
  %v3196 = vld [vmem:[%s11 + $0x318] sm:$0xff]
  %v3197 = vld [vmem:[%s11 + $0x320] sm:$0xff]
  %v3198 = vld [vmem:[%s11 + $0x328] sm:$0xf]
  %v3199 = vld [vmem:[%s11 + $0x32c] sm:$0xff]
  %v3200 = vld [vmem:[%s11 + $0x334] sm:$0xff]
  %v3201 = vld [vmem:[%s11 + $0x33c] sm:$0xff]
  %v3202 = vld [vmem:[%s11 + $0x344] sm:$0xf]
  %v3203 = vld [vmem:[%s11 + $0x348] sm:$0xff]
  %v3204 = vld [vmem:[%s11 + $0x350] sm:$0xff]
  %v3205 = vld [vmem:[%s11 + $0x358] sm:$0xff]
  %v3206 = vld [vmem:[%s11 + $0x360] sm:$0xf]
  %v3207 = vld [vmem:[%s11 + $0x364] sm:$0xff]
  %v3208 = vld [vmem:[%s11 + $0x36c] sm:$0xff]
  %v3209 = vld [vmem:[%s11 + $0x374] sm:$0xff]
  %v3210 = vld [vmem:[%s11 + $0x37c] sm:$0xf]
  %v3211 = vld [vmem:[%s11 + $0x380] sm:$0xff]
  %v3212 = vld [vmem:[%s11 + $0x388] sm:$0xff]
  %v3213 = vld [vmem:[%s11 + $0x390] sm:$0xff]
  %v3214 = vld [vmem:[%s11 + $0x398] sm:$0xf]
  %v3215 = vld [vmem:[%s11 + $0x39c] sm:$0xff]
  %v3216 = vld [vmem:[%s11 + $0x3a4] sm:$0xff]
  %v3217 = vld [vmem:[%s11 + $0x3ac] sm:$0xff]
  %v3218 = vld [vmem:[%s11 + $0x3b4] sm:$0xf]
  %v3219 = vld [vmem:[%s11 + $0x3b8] sm:$0xff]
  %v3220 = vld [vmem:[%s11 + $0x3c0] sm:$0xff]
  %v3221 = vld [vmem:[%s11 + $0x3c8] sm:$0xff]
  %v3222 = vld [vmem:[%s11 + $0x3d0] sm:$0xf]
  %v3223 = vld [vmem:[%s11 + $0x3d4] sm:$0xff]
  %v3224 = vld [vmem:[%s11 + $0x3dc] sm:$0xff]
  %v3225 = vld [vmem:[%s11 + $0x3e4] sm:$0xff]
  %v3226 = vld [vmem:[%s11 + $0x3ec] sm:$0xf]
  %v3227 = vld [vmem:[%s11 + $0x3f0] sm:$0xff]
  %v3228 = vld [vmem:[%s11 + $0x3f8] sm:$0xff]
  %v3229 = vld [vmem:[%s11 + $0x400] sm:$0xff]
  %v3230 = vld [vmem:[%s11 + $0x408] sm:$0xf]
  %v3231 = vld [vmem:[%s11 + $0x40c] sm:$0xff]
  %v3232 = vld [vmem:[%s11 + $0x414] sm:$0xff]
  %v3233 = vld [vmem:[%s11 + $0x41c] sm:$0xff]
  %v3234 = vld [vmem:[%s11 + $0x424] sm:$0xf]
  %v3235 = vld [vmem:[%s11 + $0x428] sm:$0xff]
  %v3236 = vld [vmem:[%s11 + $0x430] sm:$0xff]
  %v3237 = vld [vmem:[%s11 + $0x438] sm:$0xff]
  %v3238 = vld [vmem:[%s11 + $0x440] sm:$0xf]
  %v3239 = vld [vmem:[%s11 + $0x444] sm:$0xff]
  %v3240 = vld [vmem:[%s11 + $0x44c] sm:$0xff]
  %v3241 = vld [vmem:[%s11 + $0x454] sm:$0xff]
  %v3242 = vld [vmem:[%s11 + $0x45c] sm:$0xf]
  %v3243 = vld [vmem:[%s11 + $0x460] sm:$0xff]
  %v3244 = vld [vmem:[%s11 + $0x468] sm:$0xff]
  %v3245 = vld [vmem:[%s11 + $0x470] sm:$0xff]
  %v3246 = vld [vmem:[%s11 + $0x478] sm:$0xf]
  %v3247 = vld [vmem:[%s11 + $0x47c] sm:$0xff]
  %v3248 = vld [vmem:[%s11 + $0x484] sm:$0xff]
  %v3249 = vld [vmem:[%s11 + $0x48c] sm:$0xff]
  %v3250 = vld [vmem:[%s11 + $0x494] sm:$0xf]
  %v3251 = vld [vmem:[%s11 + $0x498] sm:$0xff]
  %v3252 = vld [vmem:[%s11 + $0x4a0] sm:$0xff]
  %v3253 = vld [vmem:[%s11 + $0x4a8] sm:$0xff]
  %v3254 = vld [vmem:[%s11 + $0x4b0] sm:$0xf]
  %v3255 = vld [vmem:[%s11 + $0x4b4] sm:$0xff]
  %v3256 = vld [vmem:[%s11 + $0x4bc] sm:$0xff]
  %v3257 = vld [vmem:[%s11 + $0x4c4] sm:$0xff]
  %v3258 = vld [vmem:[%s11 + $0x4cc] sm:$0xf]
  %v3259 = vld [vmem:[%s11 + $0x4d0] sm:$0xff]
  %v3260 = vld [vmem:[%s11 + $0x4d8] sm:$0xff]
  %v3261 = vld [vmem:[%s11 + $0x4e0] sm:$0xff]
  %v3262 = vld [vmem:[%s11 + $0x4e8] sm:$0xf]
  %v3263 = vld [vmem:[%s11 + $0x4ec] sm:$0xff]
  %v3264 = vld [vmem:[%s11 + $0x4f4] sm:$0xff]
  %v3265 = vld [vmem:[%s11 + $0x4fc] sm:$0xff]
  %v3266 = vld [vmem:[%s11 + $0x504] sm:$0xf]
  %v3267 = vld [vmem:[%s11 + $0x508] sm:$0xff]
  %v3268 = vld [vmem:[%s11 + $0x510] sm:$0xff]
  %v3269 = vld [vmem:[%s11 + $0x518] sm:$0xff]
  %v3270 = vld [vmem:[%s11 + $0x520] sm:$0xf]
  %v3271 = vld [vmem:[%s11 + $0x524] sm:$0xff]
  %v3272 = vld [vmem:[%s11 + $0x52c] sm:$0xff]
  %v3273 = vld [vmem:[%s11 + $0x534] sm:$0xff]
  %v3274 = vld [vmem:[%s11 + $0x53c] sm:$0xf]
  %v3275 = vld [vmem:[%s11 + $0x540] sm:$0xff]
  %v3276 = vld [vmem:[%s11 + $0x548] sm:$0xff]
  %v3277 = vld [vmem:[%s11 + $0x550] sm:$0xff]
  %v3278 = vld [vmem:[%s11 + $0x558] sm:$0xf]
  %v3279 = vld [vmem:[%s11 + $0x55c] sm:$0xff]
  %v3280 = vld [vmem:[%s11 + $0x564] sm:$0xff]
  %v3281 = vld [vmem:[%s11 + $0x56c] sm:$0xff]
  %v3282 = vld [vmem:[%s11 + $0x574] sm:$0xf]
  %v3283 = vld [vmem:[%s11 + $0x578] sm:$0xff]
  %v3284 = vld [vmem:[%s11 + $0x580] sm:$0xff]
  %v3285 = vld [vmem:[%s11 + $0x588] sm:$0xff]
  %v3286 = vld [vmem:[%s11 + $0x590] sm:$0xf]
  %v3287 = vld [vmem:[%s11 + $0x594] sm:$0xff]
  %v3288 = vld [vmem:[%s11 + $0x59c] sm:$0xff]
  %v3289 = vld [vmem:[%s11 + $0x5a4] sm:$0xff]
  %v3290 = vld [vmem:[%s11 + $0x5ac] sm:$0xf]
  %v3291 = vld [vmem:[%s11 + $0x5b0] sm:$0xff]
  %v3292 = vld [vmem:[%s11 + $0x5b8] sm:$0xff]
  %v3293 = vld [vmem:[%s11 + $0x5c0] sm:$0xff]
  %v3294 = vld [vmem:[%s11 + $0x5c8] sm:$0xf]
  %v3295 = vld [vmem:[%s11 + $0x5cc] sm:$0xff]
  %v3296 = vld [vmem:[%s11 + $0x5d4] sm:$0xff]
  %v3297 = vld [vmem:[%s11 + $0x5dc] sm:$0xff]
  %v3298 = vld [vmem:[%s11 + $0x5e4] sm:$0xf]
  %v3299 = vld [vmem:[%s11 + $0x5e8] sm:$0xff]
  %v3300 = vld [vmem:[%s11 + $0x5f0] sm:$0xff]
  %v3301 = vld [vmem:[%s11 + $0x5f8] sm:$0xff]
  %v3302 = vld [vmem:[%s11 + $0x600] sm:$0xf]
  %v3303 = vld [vmem:[%s11 + $0x604] sm:$0xff]
  %v3304 = vld [vmem:[%s11 + $0x60c] sm:$0xff]
  %v3305 = vld [vmem:[%s11 + $0x614] sm:$0xff]
  %v3306 = vld [vmem:[%s11 + $0x61c] sm:$0xf]
  %v3307 = vld [vmem:[%s11 + $0x620] sm:$0xff]
  %v3308 = vld [vmem:[%s11 + $0x628] sm:$0xff]
  %v3309 = vld [vmem:[%s11 + $0x630] sm:$0xff]
  %v3310 = vld [vmem:[%s11 + $0x638] sm:$0xf]
  %v3311 = vld [vmem:[%s11 + $0x63c] sm:$0xff]
  %v3312 = vld [vmem:[%s11 + $0x644] sm:$0xff]
  %v3313 = vld [vmem:[%s11 + $0x64c] sm:$0xff]
  %v3314 = vld [vmem:[%s11 + $0x654] sm:$0xf]
  %v3315 = vld [vmem:[%s11 + $0x658] sm:$0xff]
  %v3316 = vld [vmem:[%s11 + $0x660] sm:$0xff]
  %v3317 = vld [vmem:[%s11 + $0x668] sm:$0xff]
  %v3318 = vld [vmem:[%s11 + $0x670] sm:$0xf]
  %v3319 = vld [vmem:[%s11 + $0x674] sm:$0xff]
  %v3320 = vld [vmem:[%s11 + $0x67c] sm:$0xff]
  %v3321 = vld [vmem:[%s11 + $0x684] sm:$0xff]
  %v3322 = vld [vmem:[%s11 + $0x68c] sm:$0xf]
  %v3323 = vld [vmem:[%s11 + $0x690] sm:$0xff]
  %v3324 = vld [vmem:[%s11 + $0x698] sm:$0xff]
  %v3325 = vld [vmem:[%s11 + $0x6a0] sm:$0xff]
  %v3326 = vld [vmem:[%s11 + $0x6a8] sm:$0xf]
  %v3327 = vld [vmem:[%s11 + $0x6ac] sm:$0xff]
  %v3328 = vld [vmem:[%s11 + $0x6b4] sm:$0xff]
  %v3329 = vld [vmem:[%s11 + $0x6bc] sm:$0xff]
  %v3330 = vld [vmem:[%s11 + $0x6c4] sm:$0xf]
  %v3331 = vld [vmem:[%s11 + $0x6c8] sm:$0xff]
  %v3332 = vld [vmem:[%s11 + $0x6d0] sm:$0xff]
  %v3333 = vld [vmem:[%s11 + $0x6d8] sm:$0xff]
  %v3334 = vld [vmem:[%s11 + $0x6e0] sm:$0xf]
  %v3335 = vld [vmem:[%s11 + $0x6e4] sm:$0xff]
  %v3336 = vld [vmem:[%s11 + $0x6ec] sm:$0xff]
  %v3337 = vld [vmem:[%s11 + $0x6f4] sm:$0xff]
  %v3338 = vld [vmem:[%s11 + $0x6fc] sm:$0xf]
  %v3339 = vld [vmem:[%s12] sm:$0xff]
  %v3341 = vlaneseq
  %v3342 = vshrl.u32 %v3341, 7
  %v3343 = vsub.s32 0, %v3342
  %v3344 = vrot.slane %v3339, %v3343
  %v3345 = vlaneseq
  %v3346 = vshrl.u32 %v3345, 7
  %v3347 = vsub.s32 1, %v3346
  %v3348 = vrot.slane %v3339, %v3347
  %v3349 = vlaneseq
  %v3350 = vshrl.u32 %v3349, 7
  %v3351 = vsub.s32 2, %v3350
  %v3352 = vrot.slane %v3339, %v3351
  %v3353 = vlaneseq
  %v3354 = vshrl.u32 %v3353, 7
  %v3355 = vsub.s32 3, %v3354
  %v3356 = vrot.slane %v3339, %v3355
  %v3357 = vlaneseq
  %v3358 = vshrl.u32 %v3357, 7
  %v3359 = vsub.s32 4, %v3358
  %v3360 = vrot.slane %v3339, %v3359
  %v3361 = vlaneseq
  %v3362 = vshrl.u32 %v3361, 7
  %v3363 = vsub.s32 5, %v3362
  %v3364 = vrot.slane %v3339, %v3363
  %v3365 = vlaneseq
  %v3366 = vshrl.u32 %v3365, 7
  %v3367 = vsub.s32 6, %v3366
  %v3368 = vrot.slane %v3339, %v3367
  %v3632 = vunpack.c.l.b16 %v3083
  %v3633 = vunpack.c.h.b16 %v3083
  %v3634 = vunpack.c.l.b16 %v3084
  %v3635 = vunpack.c.h.b16 %v3084
  %v3636 = vunpack.c.l.b16 %v3085
  %v3637 = vunpack.c.h.b16 %v3085
  %v3638 = vunpack.c.l.b16 %v3086
  %v3639 = vunpack.c.l.b16 %v3087
  %v3640 = vunpack.c.h.b16 %v3087
  %v3641 = vunpack.c.l.b16 %v3088
  %v3642 = vunpack.c.h.b16 %v3088
  %v3643 = vunpack.c.l.b16 %v3089
  %v3644 = vunpack.c.h.b16 %v3089
  %v3645 = vunpack.c.l.b16 %v3090
  %v3646 = vunpack.c.l.b16 %v3091
  %v3647 = vunpack.c.h.b16 %v3091
  %v3648 = vunpack.c.l.b16 %v3092
  %v3649 = vunpack.c.h.b16 %v3092
  %v3650 = vunpack.c.l.b16 %v3093
  %v3651 = vunpack.c.h.b16 %v3093
  %v3652 = vunpack.c.l.b16 %v3094
  %v3653 = vunpack.c.l.b16 %v3095
  %v3654 = vunpack.c.h.b16 %v3095
  %v3655 = vunpack.c.l.b16 %v3096
  %v3656 = vunpack.c.h.b16 %v3096
  %v3657 = vunpack.c.l.b16 %v3097
  %v3658 = vunpack.c.h.b16 %v3097
  %v3659 = vunpack.c.l.b16 %v3098
  %v3660 = vunpack.c.l.b16 %v3099
  %v3661 = vunpack.c.h.b16 %v3099
  %v3662 = vunpack.c.l.b16 %v3100
  %v3663 = vunpack.c.h.b16 %v3100
  %v3664 = vunpack.c.l.b16 %v3101
  %v3665 = vunpack.c.h.b16 %v3101
  %v3666 = vunpack.c.l.b16 %v3102
  %v3667 = vunpack.c.l.b16 %v3103
  %v3668 = vunpack.c.h.b16 %v3103
  %v3669 = vunpack.c.l.b16 %v3104
  %v3670 = vunpack.c.h.b16 %v3104
  %v3671 = vunpack.c.l.b16 %v3105
  %v3672 = vunpack.c.h.b16 %v3105
  %v3673 = vunpack.c.l.b16 %v3106
  %v3674 = vunpack.c.l.b16 %v3107
  %v3675 = vunpack.c.h.b16 %v3107
  %v3676 = vunpack.c.l.b16 %v3108
  %v3677 = vunpack.c.h.b16 %v3108
  %v3678 = vunpack.c.l.b16 %v3109
  %v3679 = vunpack.c.h.b16 %v3109
  %v3680 = vunpack.c.l.b16 %v3110
  %v3681 = vunpack.c.l.b16 %v3111
  %v3682 = vunpack.c.h.b16 %v3111
  %v3683 = vunpack.c.l.b16 %v3112
  %v3684 = vunpack.c.h.b16 %v3112
  %v3685 = vunpack.c.l.b16 %v3113
  %v3686 = vunpack.c.h.b16 %v3113
  %v3687 = vunpack.c.l.b16 %v3114
  %v3688 = vunpack.c.l.b16 %v3115
  %v3689 = vunpack.c.h.b16 %v3115
  %v3690 = vunpack.c.l.b16 %v3116
  %v3691 = vunpack.c.h.b16 %v3116
  %v3692 = vunpack.c.l.b16 %v3117
  %v3693 = vunpack.c.h.b16 %v3117
  %v3694 = vunpack.c.l.b16 %v3118
  %v3695 = vunpack.c.l.b16 %v3119
  %v3696 = vunpack.c.h.b16 %v3119
  %v3697 = vunpack.c.l.b16 %v3120
  %v3698 = vunpack.c.h.b16 %v3120
  %v3699 = vunpack.c.l.b16 %v3121
  %v3700 = vunpack.c.h.b16 %v3121
  %v3701 = vunpack.c.l.b16 %v3122
  %v3702 = vunpack.c.l.b16 %v3123
  %v3703 = vunpack.c.h.b16 %v3123
  %v3704 = vunpack.c.l.b16 %v3124
  %v3705 = vunpack.c.h.b16 %v3124
  %v3706 = vunpack.c.l.b16 %v3125
  %v3707 = vunpack.c.h.b16 %v3125
  %v3708 = vunpack.c.l.b16 %v3126
  %v3709 = vunpack.c.l.b16 %v3127
  %v3710 = vunpack.c.h.b16 %v3127
  %v3711 = vunpack.c.l.b16 %v3128
  %v3712 = vunpack.c.h.b16 %v3128
  %v3713 = vunpack.c.l.b16 %v3129
  %v3714 = vunpack.c.h.b16 %v3129
  %v3715 = vunpack.c.l.b16 %v3130
  %v3716 = vunpack.c.l.b16 %v3131
  %v3717 = vunpack.c.h.b16 %v3131
  %v3718 = vunpack.c.l.b16 %v3132
  %v3719 = vunpack.c.h.b16 %v3132
  %v3720 = vunpack.c.l.b16 %v3133
  %v3721 = vunpack.c.h.b16 %v3133
  %v3722 = vunpack.c.l.b16 %v3134
  %v3723 = vunpack.c.l.b16 %v3135
  %v3724 = vunpack.c.h.b16 %v3135
  %v3725 = vunpack.c.l.b16 %v3136
  %v3726 = vunpack.c.h.b16 %v3136
  %v3727 = vunpack.c.l.b16 %v3137
  %v3728 = vunpack.c.h.b16 %v3137
  %v3729 = vunpack.c.l.b16 %v3138
  %v3730 = vunpack.c.l.b16 %v3139
  %v3731 = vunpack.c.h.b16 %v3139
  %v3732 = vunpack.c.l.b16 %v3140
  %v3733 = vunpack.c.h.b16 %v3140
  %v3734 = vunpack.c.l.b16 %v3141
  %v3735 = vunpack.c.h.b16 %v3141
  %v3736 = vunpack.c.l.b16 %v3142
  %v3737 = vunpack.c.l.b16 %v3143
  %v3738 = vunpack.c.h.b16 %v3143
  %v3739 = vunpack.c.l.b16 %v3144
  %v3740 = vunpack.c.h.b16 %v3144
  %v3741 = vunpack.c.l.b16 %v3145
  %v3742 = vunpack.c.h.b16 %v3145
  %v3743 = vunpack.c.l.b16 %v3146
  %v3744 = vunpack.c.l.b16 %v3147
  %v3745 = vunpack.c.h.b16 %v3147
  %v3746 = vunpack.c.l.b16 %v3148
  %v3747 = vunpack.c.h.b16 %v3148
  %v3748 = vunpack.c.l.b16 %v3149
  %v3749 = vunpack.c.h.b16 %v3149
  %v3750 = vunpack.c.l.b16 %v3150
  %v3751 = vunpack.c.l.b16 %v3151
  %v3752 = vunpack.c.h.b16 %v3151
  %v3753 = vunpack.c.l.b16 %v3152
  %v3754 = vunpack.c.h.b16 %v3152
  %v3755 = vunpack.c.l.b16 %v3153
  %v3756 = vunpack.c.h.b16 %v3153
  %v3757 = vunpack.c.l.b16 %v3154
  %v3758 = vunpack.c.l.b16 %v3155
  %v3759 = vunpack.c.h.b16 %v3155
  %v3760 = vunpack.c.l.b16 %v3156
  %v3761 = vunpack.c.h.b16 %v3156
  %v3762 = vunpack.c.l.b16 %v3157
  %v3763 = vunpack.c.h.b16 %v3157
  %v3764 = vunpack.c.l.b16 %v3158
  %v3765 = vunpack.c.l.b16 %v3159
  %v3766 = vunpack.c.h.b16 %v3159
  %v3767 = vunpack.c.l.b16 %v3160
  %v3768 = vunpack.c.h.b16 %v3160
  %v3769 = vunpack.c.l.b16 %v3161
  %v3770 = vunpack.c.h.b16 %v3161
  %v3771 = vunpack.c.l.b16 %v3162
  %v3772 = vunpack.c.l.b16 %v3163
  %v3773 = vunpack.c.h.b16 %v3163
  %v3774 = vunpack.c.l.b16 %v3164
  %v3775 = vunpack.c.h.b16 %v3164
  %v3776 = vunpack.c.l.b16 %v3165
  %v3777 = vunpack.c.h.b16 %v3165
  %v3778 = vunpack.c.l.b16 %v3166
  %v3779 = vunpack.c.l.b16 %v3167
  %v3780 = vunpack.c.h.b16 %v3167
  %v3781 = vunpack.c.l.b16 %v3168
  %v3782 = vunpack.c.h.b16 %v3168
  %v3783 = vunpack.c.l.b16 %v3169
  %v3784 = vunpack.c.h.b16 %v3169
  %v3785 = vunpack.c.l.b16 %v3170
  %v3786 = vunpack.c.l.b16 %v3171
  %v3787 = vunpack.c.h.b16 %v3171
  %v3788 = vunpack.c.l.b16 %v3172
  %v3789 = vunpack.c.h.b16 %v3172
  %v3790 = vunpack.c.l.b16 %v3173
  %v3791 = vunpack.c.h.b16 %v3173
  %v3792 = vunpack.c.l.b16 %v3174
  %v3793 = vunpack.c.l.b16 %v3175
  %v3794 = vunpack.c.h.b16 %v3175
  %v3795 = vunpack.c.l.b16 %v3176
  %v3796 = vunpack.c.h.b16 %v3176
  %v3797 = vunpack.c.l.b16 %v3177
  %v3798 = vunpack.c.h.b16 %v3177
  %v3799 = vunpack.c.l.b16 %v3178
  %v3800 = vunpack.c.l.b16 %v3179
  %v3801 = vunpack.c.h.b16 %v3179
  %v3802 = vunpack.c.l.b16 %v3180
  %v3803 = vunpack.c.h.b16 %v3180
  %v3804 = vunpack.c.l.b16 %v3181
  %v3805 = vunpack.c.h.b16 %v3181
  %v3806 = vunpack.c.l.b16 %v3182
  %v3807 = vunpack.c.l.b16 %v3183
  %v3808 = vunpack.c.h.b16 %v3183
  %v3809 = vunpack.c.l.b16 %v3184
  %v3810 = vunpack.c.h.b16 %v3184
  %v3811 = vunpack.c.l.b16 %v3185
  %v3812 = vunpack.c.h.b16 %v3185
  %v3813 = vunpack.c.l.b16 %v3186
  %v3814 = vunpack.c.l.b16 %v3187
  %v3815 = vunpack.c.h.b16 %v3187
  %v3816 = vunpack.c.l.b16 %v3188
  %v3817 = vunpack.c.h.b16 %v3188
  %v3818 = vunpack.c.l.b16 %v3189
  %v3819 = vunpack.c.h.b16 %v3189
  %v3820 = vunpack.c.l.b16 %v3190
  %v3821 = vunpack.c.l.b16 %v3191
  %v3822 = vunpack.c.h.b16 %v3191
  %v3823 = vunpack.c.l.b16 %v3192
  %v3824 = vunpack.c.h.b16 %v3192
  %v3825 = vunpack.c.l.b16 %v3193
  %v3826 = vunpack.c.h.b16 %v3193
  %v3827 = vunpack.c.l.b16 %v3194
  %v3828 = vunpack.c.l.b16 %v3195
  %v3829 = vunpack.c.h.b16 %v3195
  %v3830 = vunpack.c.l.b16 %v3196
  %v3831 = vunpack.c.h.b16 %v3196
  %v3832 = vunpack.c.l.b16 %v3197
  %v3833 = vunpack.c.h.b16 %v3197
  %v3834 = vunpack.c.l.b16 %v3198
  %v3835 = vunpack.c.l.b16 %v3199
  %v3836 = vunpack.c.h.b16 %v3199
  %v3837 = vunpack.c.l.b16 %v3200
  %v3838 = vunpack.c.h.b16 %v3200
  %v3839 = vunpack.c.l.b16 %v3201
  %v3840 = vunpack.c.h.b16 %v3201
  %v3841 = vunpack.c.l.b16 %v3202
  %v3842 = vunpack.c.l.b16 %v3203
  %v3843 = vunpack.c.h.b16 %v3203
  %v3844 = vunpack.c.l.b16 %v3204
  %v3845 = vunpack.c.h.b16 %v3204
  %v3846 = vunpack.c.l.b16 %v3205
  %v3847 = vunpack.c.h.b16 %v3205
  %v3848 = vunpack.c.l.b16 %v3206
  %v3849 = vunpack.c.l.b16 %v3207
  %v3850 = vunpack.c.h.b16 %v3207
  %v3851 = vunpack.c.l.b16 %v3208
  %v3852 = vunpack.c.h.b16 %v3208
  %v3853 = vunpack.c.l.b16 %v3209
  %v3854 = vunpack.c.h.b16 %v3209
  %v3855 = vunpack.c.l.b16 %v3210
  %v3856 = vunpack.c.l.b16 %v3211
  %v3857 = vunpack.c.h.b16 %v3211
  %v3858 = vunpack.c.l.b16 %v3212
  %v3859 = vunpack.c.h.b16 %v3212
  %v3860 = vunpack.c.l.b16 %v3213
  %v3861 = vunpack.c.h.b16 %v3213
  %v3862 = vunpack.c.l.b16 %v3214
  %v3863 = vunpack.c.l.b16 %v3215
  %v3864 = vunpack.c.h.b16 %v3215
  %v3865 = vunpack.c.l.b16 %v3216
  %v3866 = vunpack.c.h.b16 %v3216
  %v3867 = vunpack.c.l.b16 %v3217
  %v3868 = vunpack.c.h.b16 %v3217
  %v3869 = vunpack.c.l.b16 %v3218
  %v3870 = vunpack.c.l.b16 %v3219
  %v3871 = vunpack.c.h.b16 %v3219
  %v3872 = vunpack.c.l.b16 %v3220
  %v3873 = vunpack.c.h.b16 %v3220
  %v3874 = vunpack.c.l.b16 %v3221
  %v3875 = vunpack.c.h.b16 %v3221
  %v3876 = vunpack.c.l.b16 %v3222
  %v3877 = vunpack.c.l.b16 %v3223
  %v3878 = vunpack.c.h.b16 %v3223
  %v3879 = vunpack.c.l.b16 %v3224
  %v3880 = vunpack.c.h.b16 %v3224
  %v3881 = vunpack.c.l.b16 %v3225
  %v3882 = vunpack.c.h.b16 %v3225
  %v3883 = vunpack.c.l.b16 %v3226
  %v3884 = vunpack.c.l.b16 %v3227
  %v3885 = vunpack.c.h.b16 %v3227
  %v3886 = vunpack.c.l.b16 %v3228
  %v3887 = vunpack.c.h.b16 %v3228
  %v3888 = vunpack.c.l.b16 %v3229
  %v3889 = vunpack.c.h.b16 %v3229
  %v3890 = vunpack.c.l.b16 %v3230
  %v3891 = vunpack.c.l.b16 %v3231
  %v3892 = vunpack.c.h.b16 %v3231
  %v3893 = vunpack.c.l.b16 %v3232
  %v3894 = vunpack.c.h.b16 %v3232
  %v3895 = vunpack.c.l.b16 %v3233
  %v3896 = vunpack.c.h.b16 %v3233
  %v3897 = vunpack.c.l.b16 %v3234
  %v3898 = vunpack.c.l.b16 %v3235
  %v3899 = vunpack.c.h.b16 %v3235
  %v3900 = vunpack.c.l.b16 %v3236
  %v3901 = vunpack.c.h.b16 %v3236
  %v3902 = vunpack.c.l.b16 %v3237
  %v3903 = vunpack.c.h.b16 %v3237
  %v3904 = vunpack.c.l.b16 %v3238
  %v3905 = vunpack.c.l.b16 %v3239
  %v3906 = vunpack.c.h.b16 %v3239
  %v3907 = vunpack.c.l.b16 %v3240
  %v3908 = vunpack.c.h.b16 %v3240
  %v3909 = vunpack.c.l.b16 %v3241
  %v3910 = vunpack.c.h.b16 %v3241
  %v3911 = vunpack.c.l.b16 %v3242
  %v3912 = vunpack.c.l.b16 %v3243
  %v3913 = vunpack.c.h.b16 %v3243
  %v3914 = vunpack.c.l.b16 %v3244
  %v3915 = vunpack.c.h.b16 %v3244
  %v3916 = vunpack.c.l.b16 %v3245
  %v3917 = vunpack.c.h.b16 %v3245
  %v3918 = vunpack.c.l.b16 %v3246
  %v3919 = vunpack.c.l.b16 %v3247
  %v3920 = vunpack.c.h.b16 %v3247
  %v3921 = vunpack.c.l.b16 %v3248
  %v3922 = vunpack.c.h.b16 %v3248
  %v3923 = vunpack.c.l.b16 %v3249
  %v3924 = vunpack.c.h.b16 %v3249
  %v3925 = vunpack.c.l.b16 %v3250
  %v3926 = vunpack.c.l.b16 %v3251
  %v3927 = vunpack.c.h.b16 %v3251
  %v3928 = vunpack.c.l.b16 %v3252
  %v3929 = vunpack.c.h.b16 %v3252
  %v3930 = vunpack.c.l.b16 %v3253
  %v3931 = vunpack.c.h.b16 %v3253
  %v3932 = vunpack.c.l.b16 %v3254
  %v3933 = vunpack.c.l.b16 %v3255
  %v3934 = vunpack.c.h.b16 %v3255
  %v3935 = vunpack.c.l.b16 %v3256
  %v3936 = vunpack.c.h.b16 %v3256
  %v3937 = vunpack.c.l.b16 %v3257
  %v3938 = vunpack.c.h.b16 %v3257
  %v3939 = vunpack.c.l.b16 %v3258
  %v3940 = vunpack.c.l.b16 %v3259
  %v3941 = vunpack.c.h.b16 %v3259
  %v3942 = vunpack.c.l.b16 %v3260
  %v3943 = vunpack.c.h.b16 %v3260
  %v3944 = vunpack.c.l.b16 %v3261
  %v3945 = vunpack.c.h.b16 %v3261
  %v3946 = vunpack.c.l.b16 %v3262
  %v3947 = vunpack.c.l.b16 %v3263
  %v3948 = vunpack.c.h.b16 %v3263
  %v3949 = vunpack.c.l.b16 %v3264
  %v3950 = vunpack.c.h.b16 %v3264
  %v3951 = vunpack.c.l.b16 %v3265
  %v3952 = vunpack.c.h.b16 %v3265
  %v3953 = vunpack.c.l.b16 %v3266
  %v3954 = vunpack.c.l.b16 %v3267
  %v3955 = vunpack.c.h.b16 %v3267
  %v3956 = vunpack.c.l.b16 %v3268
  %v3957 = vunpack.c.h.b16 %v3268
  %v3958 = vunpack.c.l.b16 %v3269
  %v3959 = vunpack.c.h.b16 %v3269
  %v3960 = vunpack.c.l.b16 %v3270
  %v3961 = vunpack.c.l.b16 %v3271
  %v3962 = vunpack.c.h.b16 %v3271
  %v3963 = vunpack.c.l.b16 %v3272
  %v3964 = vunpack.c.h.b16 %v3272
  %v3965 = vunpack.c.l.b16 %v3273
  %v3966 = vunpack.c.h.b16 %v3273
  %v3967 = vunpack.c.l.b16 %v3274
  %v3968 = vunpack.c.l.b16 %v3275
  %v3969 = vunpack.c.h.b16 %v3275
  %v3970 = vunpack.c.l.b16 %v3276
  %v3971 = vunpack.c.h.b16 %v3276
  %v3972 = vunpack.c.l.b16 %v3277
  %v3973 = vunpack.c.h.b16 %v3277
  %v3974 = vunpack.c.l.b16 %v3278
  %v3975 = vunpack.c.l.b16 %v3279
  %v3976 = vunpack.c.h.b16 %v3279
  %v3977 = vunpack.c.l.b16 %v3280
  %v3978 = vunpack.c.h.b16 %v3280
  %v3979 = vunpack.c.l.b16 %v3281
  %v3980 = vunpack.c.h.b16 %v3281
  %v3981 = vunpack.c.l.b16 %v3282
  %v3982 = vunpack.c.l.b16 %v3283
  %v3983 = vunpack.c.h.b16 %v3283
  %v3984 = vunpack.c.l.b16 %v3284
  %v3985 = vunpack.c.h.b16 %v3284
  %v3986 = vunpack.c.l.b16 %v3285
  %v3987 = vunpack.c.h.b16 %v3285
  %v3988 = vunpack.c.l.b16 %v3286
  %v3989 = vunpack.c.l.b16 %v3287
  %v3990 = vunpack.c.h.b16 %v3287
  %v3991 = vunpack.c.l.b16 %v3288
  %v3992 = vunpack.c.h.b16 %v3288
  %v3993 = vunpack.c.l.b16 %v3289
  %v3994 = vunpack.c.h.b16 %v3289
  %v3995 = vunpack.c.l.b16 %v3290
  %v3996 = vunpack.c.l.b16 %v3291
  %v3997 = vunpack.c.h.b16 %v3291
  %v3998 = vunpack.c.l.b16 %v3292
  %v3999 = vunpack.c.h.b16 %v3292
  %v4000 = vunpack.c.l.b16 %v3293
  %v4001 = vunpack.c.h.b16 %v3293
  %v4002 = vunpack.c.l.b16 %v3294
  %v4003 = vunpack.c.l.b16 %v3295
  %v4004 = vunpack.c.h.b16 %v3295
  %v4005 = vunpack.c.l.b16 %v3296
  %v4006 = vunpack.c.h.b16 %v3296
  %v4007 = vunpack.c.l.b16 %v3297
  %v4008 = vunpack.c.h.b16 %v3297
  %v4009 = vunpack.c.l.b16 %v3298
  %v4010 = vunpack.c.l.b16 %v3299
  %v4011 = vunpack.c.h.b16 %v3299
  %v4012 = vunpack.c.l.b16 %v3300
  %v4013 = vunpack.c.h.b16 %v3300
  %v4014 = vunpack.c.l.b16 %v3301
  %v4015 = vunpack.c.h.b16 %v3301
  %v4016 = vunpack.c.l.b16 %v3302
  %v4017 = vunpack.c.l.b16 %v3303
  %v4018 = vunpack.c.h.b16 %v3303
  %v4019 = vunpack.c.l.b16 %v3304
  %v4020 = vunpack.c.h.b16 %v3304
  %v4021 = vunpack.c.l.b16 %v3305
  %v4022 = vunpack.c.h.b16 %v3305
  %v4023 = vunpack.c.l.b16 %v3306
  %v4024 = vunpack.c.l.b16 %v3307
  %v4025 = vunpack.c.h.b16 %v3307
  %v4026 = vunpack.c.l.b16 %v3308
  %v4027 = vunpack.c.h.b16 %v3308
  %v4028 = vunpack.c.l.b16 %v3309
  %v4029 = vunpack.c.h.b16 %v3309
  %v4030 = vunpack.c.l.b16 %v3310
  %v4031 = vunpack.c.l.b16 %v3311
  %v4032 = vunpack.c.h.b16 %v3311
  %v4033 = vunpack.c.l.b16 %v3312
  %v4034 = vunpack.c.h.b16 %v3312
  %v4035 = vunpack.c.l.b16 %v3313
  %v4036 = vunpack.c.h.b16 %v3313
  %v4037 = vunpack.c.l.b16 %v3314
  %v4038 = vunpack.c.l.b16 %v3315
  %v4039 = vunpack.c.h.b16 %v3315
  %v4040 = vunpack.c.l.b16 %v3316
  %v4041 = vunpack.c.h.b16 %v3316
  %v4042 = vunpack.c.l.b16 %v3317
  %v4043 = vunpack.c.h.b16 %v3317
  %v4044 = vunpack.c.l.b16 %v3318
  %v4045 = vunpack.c.l.b16 %v3319
  %v4046 = vunpack.c.h.b16 %v3319
  %v4047 = vunpack.c.l.b16 %v3320
  %v4048 = vunpack.c.h.b16 %v3320
  %v4049 = vunpack.c.l.b16 %v3321
  %v4050 = vunpack.c.h.b16 %v3321
  %v4051 = vunpack.c.l.b16 %v3322
  %v4052 = vunpack.c.l.b16 %v3323
  %v4053 = vunpack.c.h.b16 %v3323
  %v4054 = vunpack.c.l.b16 %v3324
  %v4055 = vunpack.c.h.b16 %v3324
  %v4056 = vunpack.c.l.b16 %v3325
  %v4057 = vunpack.c.h.b16 %v3325
  %v4058 = vunpack.c.l.b16 %v3326
  %v4059 = vunpack.c.l.b16 %v3327
  %v4060 = vunpack.c.h.b16 %v3327
  %v4061 = vunpack.c.l.b16 %v3328
  %v4062 = vunpack.c.h.b16 %v3328
  %v4063 = vunpack.c.l.b16 %v3329
  %v4064 = vunpack.c.h.b16 %v3329
  %v4065 = vunpack.c.l.b16 %v3330
  %v4066 = vunpack.c.l.b16 %v3331
  %v4067 = vunpack.c.h.b16 %v3331
  %v4068 = vunpack.c.l.b16 %v3332
  %v4069 = vunpack.c.h.b16 %v3332
  %v4070 = vunpack.c.l.b16 %v3333
  %v4071 = vunpack.c.h.b16 %v3333
  %v4072 = vunpack.c.l.b16 %v3334
  %v4073 = vunpack.c.l.b16 %v3335
  %v4074 = vunpack.c.h.b16 %v3335
  %v4075 = vunpack.c.l.b16 %v3336
  %v4076 = vunpack.c.h.b16 %v3336
  %v4077 = vunpack.c.l.b16 %v3337
  %v4078 = vunpack.c.h.b16 %v3337
  %v4079 = vunpack.c.l.b16 %v3338
  %v4080 = vpack.c.b16 %v3639, %v3632
  %v4081 = vpack.c.b16 %v3640, %v3633
  %v4082 = vpack.c.b16 %v3641, %v3634
  %v4083 = vpack.c.b16 %v3642, %v3635
  %v4084 = vpack.c.b16 %v3643, %v3636
  %v4085 = vpack.c.b16 %v3644, %v3637
  %v4086 = vpack.c.b16 %v3645, %v3638
  %v4087 = vpack.c.b16 %v3653, %v3646
  %v4088 = vpack.c.b16 %v3654, %v3647
  %v4089 = vpack.c.b16 %v3655, %v3648
  %v4090 = vpack.c.b16 %v3656, %v3649
  %v4091 = vpack.c.b16 %v3657, %v3650
  %v4092 = vpack.c.b16 %v3658, %v3651
  %v4093 = vpack.c.b16 %v3659, %v3652
  %v4094 = vpack.c.b16 %v3667, %v3660
  %v4095 = vpack.c.b16 %v3668, %v3661
  %v4096 = vpack.c.b16 %v3669, %v3662
  %v4097 = vpack.c.b16 %v3670, %v3663
  %v4098 = vpack.c.b16 %v3671, %v3664
  %v4099 = vpack.c.b16 %v3672, %v3665
  %v4100 = vpack.c.b16 %v3673, %v3666
  %v4101 = vpack.c.b16 %v3681, %v3674
  %v4102 = vpack.c.b16 %v3682, %v3675
  %v4103 = vpack.c.b16 %v3683, %v3676
  %v4104 = vpack.c.b16 %v3684, %v3677
  %v4105 = vpack.c.b16 %v3685, %v3678
  %v4106 = vpack.c.b16 %v3686, %v3679
  %v4107 = vpack.c.b16 %v3687, %v3680
  %v4108 = vpack.c.b16 %v3695, %v3688
  %v4109 = vpack.c.b16 %v3696, %v3689
  %v4110 = vpack.c.b16 %v3697, %v3690
  %v4111 = vpack.c.b16 %v3698, %v3691
  %v4112 = vpack.c.b16 %v3699, %v3692
  %v4113 = vpack.c.b16 %v3700, %v3693
  %v4114 = vpack.c.b16 %v3701, %v3694
  %v4115 = vpack.c.b16 %v3709, %v3702
  %v4116 = vpack.c.b16 %v3710, %v3703
  %v4117 = vpack.c.b16 %v3711, %v3704
  %v4118 = vpack.c.b16 %v3712, %v3705
  %v4119 = vpack.c.b16 %v3713, %v3706
  %v4120 = vpack.c.b16 %v3714, %v3707
  %v4121 = vpack.c.b16 %v3715, %v3708
  %v4122 = vpack.c.b16 %v3723, %v3716
  %v4123 = vpack.c.b16 %v3724, %v3717
  %v4124 = vpack.c.b16 %v3725, %v3718
  %v4125 = vpack.c.b16 %v3726, %v3719
  %v4126 = vpack.c.b16 %v3727, %v3720
  %v4127 = vpack.c.b16 %v3728, %v3721
  %v4128 = vpack.c.b16 %v3729, %v3722
  %v4129 = vpack.c.b16 %v3737, %v3730
  %v4130 = vpack.c.b16 %v3738, %v3731
  %v4131 = vpack.c.b16 %v3739, %v3732
  %v4132 = vpack.c.b16 %v3740, %v3733
  %v4133 = vpack.c.b16 %v3741, %v3734
  %v4134 = vpack.c.b16 %v3742, %v3735
  %v4135 = vpack.c.b16 %v3743, %v3736
  %v4136 = vpack.c.b16 %v3751, %v3744
  %v4137 = vpack.c.b16 %v3752, %v3745
  %v4138 = vpack.c.b16 %v3753, %v3746
  %v4139 = vpack.c.b16 %v3754, %v3747
  %v4140 = vpack.c.b16 %v3755, %v3748
  %v4141 = vpack.c.b16 %v3756, %v3749
  %v4142 = vpack.c.b16 %v3757, %v3750
  %v4143 = vpack.c.b16 %v3765, %v3758
  %v4144 = vpack.c.b16 %v3766, %v3759
  %v4145 = vpack.c.b16 %v3767, %v3760
  %v4146 = vpack.c.b16 %v3768, %v3761
  %v4147 = vpack.c.b16 %v3769, %v3762
  %v4148 = vpack.c.b16 %v3770, %v3763
  %v4149 = vpack.c.b16 %v3771, %v3764
  %v4150 = vpack.c.b16 %v3779, %v3772
  %v4151 = vpack.c.b16 %v3780, %v3773
  %v4152 = vpack.c.b16 %v3781, %v3774
  %v4153 = vpack.c.b16 %v3782, %v3775
  %v4154 = vpack.c.b16 %v3783, %v3776
  %v4155 = vpack.c.b16 %v3784, %v3777
  %v4156 = vpack.c.b16 %v3785, %v3778
  %v4157 = vpack.c.b16 %v3793, %v3786
  %v4158 = vpack.c.b16 %v3794, %v3787
  %v4159 = vpack.c.b16 %v3795, %v3788
  %v4160 = vpack.c.b16 %v3796, %v3789
  %v4161 = vpack.c.b16 %v3797, %v3790
  %v4162 = vpack.c.b16 %v3798, %v3791
  %v4163 = vpack.c.b16 %v3799, %v3792
  %v4164 = vpack.c.b16 %v3807, %v3800
  %v4165 = vpack.c.b16 %v3808, %v3801
  %v4166 = vpack.c.b16 %v3809, %v3802
  %v4167 = vpack.c.b16 %v3810, %v3803
  %v4168 = vpack.c.b16 %v3811, %v3804
  %v4169 = vpack.c.b16 %v3812, %v3805
  %v4170 = vpack.c.b16 %v3813, %v3806
  %v4171 = vpack.c.b16 %v3821, %v3814
  %v4172 = vpack.c.b16 %v3822, %v3815
  %v4173 = vpack.c.b16 %v3823, %v3816
  %v4174 = vpack.c.b16 %v3824, %v3817
  %v4175 = vpack.c.b16 %v3825, %v3818
  %v4176 = vpack.c.b16 %v3826, %v3819
  %v4177 = vpack.c.b16 %v3827, %v3820
  %v4178 = vpack.c.b16 %v3835, %v3828
  %v4179 = vpack.c.b16 %v3836, %v3829
  %v4180 = vpack.c.b16 %v3837, %v3830
  %v4181 = vpack.c.b16 %v3838, %v3831
  %v4182 = vpack.c.b16 %v3839, %v3832
  %v4183 = vpack.c.b16 %v3840, %v3833
  %v4184 = vpack.c.b16 %v3841, %v3834
  %v4185 = vpack.c.b16 %v3849, %v3842
  %v4186 = vpack.c.b16 %v3850, %v3843
  %v4187 = vpack.c.b16 %v3851, %v3844
  %v4188 = vpack.c.b16 %v3852, %v3845
  %v4189 = vpack.c.b16 %v3853, %v3846
  %v4190 = vpack.c.b16 %v3854, %v3847
  %v4191 = vpack.c.b16 %v3855, %v3848
  %v4192 = vpack.c.b16 %v3863, %v3856
  %v4193 = vpack.c.b16 %v3864, %v3857
  %v4194 = vpack.c.b16 %v3865, %v3858
  %v4195 = vpack.c.b16 %v3866, %v3859
  %v4196 = vpack.c.b16 %v3867, %v3860
  %v4197 = vpack.c.b16 %v3868, %v3861
  %v4198 = vpack.c.b16 %v3869, %v3862
  %v4199 = vpack.c.b16 %v3877, %v3870
  %v4200 = vpack.c.b16 %v3878, %v3871
  %v4201 = vpack.c.b16 %v3879, %v3872
  %v4202 = vpack.c.b16 %v3880, %v3873
  %v4203 = vpack.c.b16 %v3881, %v3874
  %v4204 = vpack.c.b16 %v3882, %v3875
  %v4205 = vpack.c.b16 %v3883, %v3876
  %v4206 = vpack.c.b16 %v3891, %v3884
  %v4207 = vpack.c.b16 %v3892, %v3885
  %v4208 = vpack.c.b16 %v3893, %v3886
  %v4209 = vpack.c.b16 %v3894, %v3887
  %v4210 = vpack.c.b16 %v3895, %v3888
  %v4211 = vpack.c.b16 %v3896, %v3889
  %v4212 = vpack.c.b16 %v3897, %v3890
  %v4213 = vpack.c.b16 %v3905, %v3898
  %v4214 = vpack.c.b16 %v3906, %v3899
  %v4215 = vpack.c.b16 %v3907, %v3900
  %v4216 = vpack.c.b16 %v3908, %v3901
  %v4217 = vpack.c.b16 %v3909, %v3902
  %v4218 = vpack.c.b16 %v3910, %v3903
  %v4219 = vpack.c.b16 %v3911, %v3904
  %v4220 = vpack.c.b16 %v3919, %v3912
  %v4221 = vpack.c.b16 %v3920, %v3913
  %v4222 = vpack.c.b16 %v3921, %v3914
  %v4223 = vpack.c.b16 %v3922, %v3915
  %v4224 = vpack.c.b16 %v3923, %v3916
  %v4225 = vpack.c.b16 %v3924, %v3917
  %v4226 = vpack.c.b16 %v3925, %v3918
  %v4227 = vpack.c.b16 %v3933, %v3926
  %v4228 = vpack.c.b16 %v3934, %v3927
  %v4229 = vpack.c.b16 %v3935, %v3928
  %v4230 = vpack.c.b16 %v3936, %v3929
  %v4231 = vpack.c.b16 %v3937, %v3930
  %v4232 = vpack.c.b16 %v3938, %v3931
  %v4233 = vpack.c.b16 %v3939, %v3932
  %v4234 = vpack.c.b16 %v3947, %v3940
  %v4235 = vpack.c.b16 %v3948, %v3941
  %v4236 = vpack.c.b16 %v3949, %v3942
  %v4237 = vpack.c.b16 %v3950, %v3943
  %v4238 = vpack.c.b16 %v3951, %v3944
  %v4239 = vpack.c.b16 %v3952, %v3945
  %v4240 = vpack.c.b16 %v3953, %v3946
  %v4241 = vpack.c.b16 %v3961, %v3954
  %v4242 = vpack.c.b16 %v3962, %v3955
  %v4243 = vpack.c.b16 %v3963, %v3956
  %v4244 = vpack.c.b16 %v3964, %v3957
  %v4245 = vpack.c.b16 %v3965, %v3958
  %v4246 = vpack.c.b16 %v3966, %v3959
  %v4247 = vpack.c.b16 %v3967, %v3960
  %v4248 = vpack.c.b16 %v3975, %v3968
  %v4249 = vpack.c.b16 %v3976, %v3969
  %v4250 = vpack.c.b16 %v3977, %v3970
  %v4251 = vpack.c.b16 %v3978, %v3971
  %v4252 = vpack.c.b16 %v3979, %v3972
  %v4253 = vpack.c.b16 %v3980, %v3973
  %v4254 = vpack.c.b16 %v3981, %v3974
  %v4255 = vpack.c.b16 %v3989, %v3982
  %v4256 = vpack.c.b16 %v3990, %v3983
  %v4257 = vpack.c.b16 %v3991, %v3984
  %v4258 = vpack.c.b16 %v3992, %v3985
  %v4259 = vpack.c.b16 %v3993, %v3986
  %v4260 = vpack.c.b16 %v3994, %v3987
  %v4261 = vpack.c.b16 %v3995, %v3988
  %v4262 = vpack.c.b16 %v4003, %v3996
  %v4263 = vpack.c.b16 %v4004, %v3997
  %v4264 = vpack.c.b16 %v4005, %v3998
  %v4265 = vpack.c.b16 %v4006, %v3999
  %v4266 = vpack.c.b16 %v4007, %v4000
  %v4267 = vpack.c.b16 %v4008, %v4001
  %v4268 = vpack.c.b16 %v4009, %v4002
  %v4269 = vpack.c.b16 %v4017, %v4010
  %v4270 = vpack.c.b16 %v4018, %v4011
  %v4271 = vpack.c.b16 %v4019, %v4012
  %v4272 = vpack.c.b16 %v4020, %v4013
  %v4273 = vpack.c.b16 %v4021, %v4014
  %v4274 = vpack.c.b16 %v4022, %v4015
  %v4275 = vpack.c.b16 %v4023, %v4016
  %v4276 = vpack.c.b16 %v4031, %v4024
  %v4277 = vpack.c.b16 %v4032, %v4025
  %v4278 = vpack.c.b16 %v4033, %v4026
  %v4279 = vpack.c.b16 %v4034, %v4027
  %v4280 = vpack.c.b16 %v4035, %v4028
  %v4281 = vpack.c.b16 %v4036, %v4029
  %v4282 = vpack.c.b16 %v4037, %v4030
  %v4283 = vpack.c.b16 %v4045, %v4038
  %v4284 = vpack.c.b16 %v4046, %v4039
  %v4285 = vpack.c.b16 %v4047, %v4040
  %v4286 = vpack.c.b16 %v4048, %v4041
  %v4287 = vpack.c.b16 %v4049, %v4042
  %v4288 = vpack.c.b16 %v4050, %v4043
  %v4289 = vpack.c.b16 %v4051, %v4044
  %v4290 = vpack.c.b16 %v4059, %v4052
  %v4291 = vpack.c.b16 %v4060, %v4053
  %v4292 = vpack.c.b16 %v4061, %v4054
  %v4293 = vpack.c.b16 %v4062, %v4055
  %v4294 = vpack.c.b16 %v4063, %v4056
  %v4295 = vpack.c.b16 %v4064, %v4057
  %v4296 = vpack.c.b16 %v4065, %v4058
  %v4297 = vpack.c.b16 %v4073, %v4066
  %v4298 = vpack.c.b16 %v4074, %v4067
  %v4299 = vpack.c.b16 %v4075, %v4068
  %v4300 = vpack.c.b16 %v4076, %v4069
  %v4301 = vpack.c.b16 %v4077, %v4070
  %v4302 = vpack.c.b16 %v4078, %v4071
  %v4303 = vpack.c.b16 %v4079, %v4072
  %4528 = vmatprep.subr.bf16.mxu0 %v4081
  %4529 = vmatpush1.bf16.msra.mxu0 %v4080
  %4530 = vmatprep.subr.bf16.mxu0 %v4088
  %4531 = vmatpush1.bf16.msra.mxu0 %v4087
  %4532 = vmatprep.subr.bf16.mxu0 %v4095
  %4533 = vmatpush1.bf16.msra.mxu0 %v4094
  %4534 = vmatprep.subr.bf16.mxu0 %v4102
  %4535 = vmatpush1.bf16.msra.mxu0 %v4101
  %4536 = vmatprep.subr.bf16.mxu0 %v4109
  %4537 = vmatpush1.bf16.msra.mxu0 %v4108
  %4538 = vmatprep.subr.bf16.mxu0 %v4116
  %4539 = vmatpush1.bf16.msra.mxu0 %v4115
  %4540 = vmatprep.subr.bf16.mxu0 %v4123
  %4541 = vmatpush1.bf16.msra.mxu0 %v4122
  %4542 = vmatprep.subr.bf16.mxu0 %v4130
  %4543 = vmatpush1.bf16.msra.mxu0 %v4129
  %4544 = vmatprep.subr.bf16.mxu0 %v4137
  %4545 = vmatpush1.bf16.msra.mxu0 %v4136
  %4546 = vmatprep.subr.bf16.mxu0 %v4144
  %4547 = vmatpush1.bf16.msra.mxu0 %v4143
  %4548 = vmatprep.subr.bf16.mxu0 %v4151
  %4549 = vmatpush1.bf16.msra.mxu0 %v4150
  %4550 = vmatprep.subr.bf16.mxu0 %v4158
  %4551 = vmatpush1.bf16.msra.mxu0 %v4157
  %4552 = vmatprep.subr.bf16.mxu0 %v4165
  %4553 = vmatpush1.bf16.msra.mxu0 %v4164
  %4554 = vmatprep.subr.bf16.mxu0 %v4172
  %4555 = vmatpush1.bf16.msra.mxu0 %v4171
  %4556 = vmatprep.subr.bf16.mxu0 %v4179
  %4557 = vmatpush1.bf16.msra.mxu0 %v4178
  %4558 = vmatprep.subr.bf16.mxu0 %v4186
  %4559 = vmatpush1.bf16.msra.mxu0 %v4185
  %4560 = vmatprep.mubr.bf16.mxu0 %v3080
  %4561 = vmatmul.mubr.bf16.gmra.mrb[0].mxu0 %v3079
  %v4562 = vpop.f32.mrb[0].mxu0
  %v4563 = vadd.f32 %v3344, %v4562
  %v4564 = vpop.f32.mrb[0].mxu0
  %v4565 = vadd.f32 %v3348, %v4564
  %v4566 = vpop.f32.mrb[0].mxu0
  %v4567 = vpop.f32.mrb[0].mxu0
  %4568 = vdwg.mxu0
  %4569 = vmatprep.subr.bf16.mxu0 %v4193
  %4570 = vmatpush1.bf16.msra.mxu0 %v4192
  %4571 = vmatprep.subr.bf16.mxu0 %v4200
  %4572 = vmatpush1.bf16.msra.mxu0 %v4199
  %4573 = vmatprep.subr.bf16.mxu0 %v4207
  %4574 = vmatpush1.bf16.msra.mxu0 %v4206
  %4575 = vmatprep.subr.bf16.mxu0 %v4214
  %4576 = vmatpush1.bf16.msra.mxu0 %v4213
  %4577 = vmatprep.subr.bf16.mxu0 %v4221
  %4578 = vmatpush1.bf16.msra.mxu0 %v4220
  %4579 = vmatprep.subr.bf16.mxu0 %v4228
  %4580 = vmatpush1.bf16.msra.mxu0 %v4227
  %4581 = vmatprep.subr.bf16.mxu0 %v4235
  %4582 = vmatpush1.bf16.msra.mxu0 %v4234
  %4583 = vmatprep.subr.bf16.mxu0 %v4242
  %4584 = vmatpush1.bf16.msra.mxu0 %v4241
  %4585 = vmatprep.subr.bf16.mxu0 %v4249
  %4586 = vmatpush1.bf16.msra.mxu0 %v4248
  %4587 = vmatprep.subr.bf16.mxu0 %v4256
  %4588 = vmatpush1.bf16.msra.mxu0 %v4255
  %4589 = vmatprep.subr.bf16.mxu0 %v4263
  %4590 = vmatpush1.bf16.msra.mxu0 %v4262
  %4591 = vmatprep.subr.bf16.mxu0 %v4270
  %4592 = vmatpush1.bf16.msra.mxu0 %v4269
  %4593 = vmatprep.subr.bf16.mxu0 %v4277
  %4594 = vmatpush1.bf16.msra.mxu0 %v4276
  %4595 = vmatprep.subr.bf16.mxu0 %v4284
  %4596 = vmatpush1.bf16.msra.mxu0 %v4283
  %4597 = vmatprep.subr.bf16.mxu0 %v4291
  %4598 = vmatpush1.bf16.msra.mxu0 %v4290
  %4599 = vmatprep.subr.bf16.mxu0 %v4298
  %4600 = vmatpush1.bf16.msra.mxu0 %v4297
  %4601 = vmatprep.mubr.bf16.mxu0 %v3082
  %4602 = vmatmul.mubr.bf16.gmra.mrb[0].mxu0 %v3081
  %v4603 = vpop.f32.mrb[0].mxu0
  %v4604 = vadd.f32 %v4563, %v4603
  %v4605 = vpop.f32.mrb[0].mxu0
  %v4606 = vadd.f32 %v4565, %v4605
  %v4607 = vpop.f32.mrb[0].mxu0
  %v4608 = vpop.f32.mrb[0].mxu0
  %4609 = vdwg.mxu0
  %4610 = vmatprep.subr.bf16.mxu0 %v4083
  %4611 = vmatpush1.bf16.msra.mxu0 %v4082
  %4612 = vmatprep.subr.bf16.mxu0 %v4090
  %4613 = vmatpush1.bf16.msra.mxu0 %v4089
  %4614 = vmatprep.subr.bf16.mxu0 %v4097
  %4615 = vmatpush1.bf16.msra.mxu0 %v4096
  %4616 = vmatprep.subr.bf16.mxu0 %v4104
  %4617 = vmatpush1.bf16.msra.mxu0 %v4103
  %4618 = vmatprep.subr.bf16.mxu0 %v4111
  %4619 = vmatpush1.bf16.msra.mxu0 %v4110
  %4620 = vmatprep.subr.bf16.mxu0 %v4118
  %4621 = vmatpush1.bf16.msra.mxu0 %v4117
  %4622 = vmatprep.subr.bf16.mxu0 %v4125
  %4623 = vmatpush1.bf16.msra.mxu0 %v4124
  %4624 = vmatprep.subr.bf16.mxu0 %v4132
  %4625 = vmatpush1.bf16.msra.mxu0 %v4131
  %4626 = vmatprep.subr.bf16.mxu0 %v4139
  %4627 = vmatpush1.bf16.msra.mxu0 %v4138
  %4628 = vmatprep.subr.bf16.mxu0 %v4146
  %4629 = vmatpush1.bf16.msra.mxu0 %v4145
  %4630 = vmatprep.subr.bf16.mxu0 %v4153
  %4631 = vmatpush1.bf16.msra.mxu0 %v4152
  %4632 = vmatprep.subr.bf16.mxu0 %v4160
  %4633 = vmatpush1.bf16.msra.mxu0 %v4159
  %4634 = vmatprep.subr.bf16.mxu0 %v4167
  %4635 = vmatpush1.bf16.msra.mxu0 %v4166
  %4636 = vmatprep.subr.bf16.mxu0 %v4174
  %4637 = vmatpush1.bf16.msra.mxu0 %v4173
  %4638 = vmatprep.subr.bf16.mxu0 %v4181
  %4639 = vmatpush1.bf16.msra.mxu0 %v4180
  %4640 = vmatprep.subr.bf16.mxu0 %v4188
  %4641 = vmatpush1.bf16.msra.mxu0 %v4187
  %4642 = vmatprep.mubr.bf16.mxu0 %v3080
  %4643 = vmatmul.mubr.bf16.gmra.mrb[0].mxu0 %v3079
  %v4644 = vpop.f32.mrb[0].mxu0
  %v4645 = vadd.f32 %v3352, %v4644
  %v4646 = vpop.f32.mrb[0].mxu0
  %v4647 = vadd.f32 %v3356, %v4646
  %v4648 = vpop.f32.mrb[0].mxu0
  %v4649 = vpop.f32.mrb[0].mxu0
  %4650 = vdwg.mxu0
  %4651 = vmatprep.subr.bf16.mxu0 %v4195
  %4652 = vmatpush1.bf16.msra.mxu0 %v4194
  %4653 = vmatprep.subr.bf16.mxu0 %v4202
  %4654 = vmatpush1.bf16.msra.mxu0 %v4201
  %4655 = vmatprep.subr.bf16.mxu0 %v4209
  %4656 = vmatpush1.bf16.msra.mxu0 %v4208
  %4657 = vmatprep.subr.bf16.mxu0 %v4216
  %4658 = vmatpush1.bf16.msra.mxu0 %v4215
  %4659 = vmatprep.subr.bf16.mxu0 %v4223
  %4660 = vmatpush1.bf16.msra.mxu0 %v4222
  %4661 = vmatprep.subr.bf16.mxu0 %v4230
  %4662 = vmatpush1.bf16.msra.mxu0 %v4229
  %4663 = vmatprep.subr.bf16.mxu0 %v4237
  %4664 = vmatpush1.bf16.msra.mxu0 %v4236
  %4665 = vmatprep.subr.bf16.mxu0 %v4244
  %4666 = vmatpush1.bf16.msra.mxu0 %v4243
  %4667 = vmatprep.subr.bf16.mxu0 %v4251
  %4668 = vmatpush1.bf16.msra.mxu0 %v4250
  %4669 = vmatprep.subr.bf16.mxu0 %v4258
  %4670 = vmatpush1.bf16.msra.mxu0 %v4257
  %4671 = vmatprep.subr.bf16.mxu0 %v4265
  %4672 = vmatpush1.bf16.msra.mxu0 %v4264
  %4673 = vmatprep.subr.bf16.mxu0 %v4272
  %4674 = vmatpush1.bf16.msra.mxu0 %v4271
  %4675 = vmatprep.subr.bf16.mxu0 %v4279
  %4676 = vmatpush1.bf16.msra.mxu0 %v4278
  %4677 = vmatprep.subr.bf16.mxu0 %v4286
  %4678 = vmatpush1.bf16.msra.mxu0 %v4285
  %4679 = vmatprep.subr.bf16.mxu0 %v4293
  %4680 = vmatpush1.bf16.msra.mxu0 %v4292
  %4681 = vmatprep.subr.bf16.mxu0 %v4300
  %4682 = vmatpush1.bf16.msra.mxu0 %v4299
  %4683 = vmatprep.mubr.bf16.mxu0 %v3082
  %4684 = vmatmul.mubr.bf16.gmra.mrb[0].mxu0 %v3081
  %v4685 = vpop.f32.mrb[0].mxu0
  %v4686 = vadd.f32 %v4645, %v4685
  %v4687 = vpop.f32.mrb[0].mxu0
  %v4688 = vadd.f32 %v4647, %v4687
  %v4689 = vpop.f32.mrb[0].mxu0
  %v4690 = vpop.f32.mrb[0].mxu0
  %4691 = vdwg.mxu0
  %4692 = vmatprep.subr.bf16.mxu0 %v4085
  %4693 = vmatpush1.bf16.msra.mxu0 %v4084
  %4694 = vmatprep.subr.bf16.mxu0 %v4092
  %4695 = vmatpush1.bf16.msra.mxu0 %v4091
  %4696 = vmatprep.subr.bf16.mxu0 %v4099
  %4697 = vmatpush1.bf16.msra.mxu0 %v4098
  %4698 = vmatprep.subr.bf16.mxu0 %v4106
  %4699 = vmatpush1.bf16.msra.mxu0 %v4105
  %4700 = vmatprep.subr.bf16.mxu0 %v4113
  %4701 = vmatpush1.bf16.msra.mxu0 %v4112
  %4702 = vmatprep.subr.bf16.mxu0 %v4120
  %4703 = vmatpush1.bf16.msra.mxu0 %v4119
  %4704 = vmatprep.subr.bf16.mxu0 %v4127
  %4705 = vmatpush1.bf16.msra.mxu0 %v4126
  %4706 = vmatprep.subr.bf16.mxu0 %v4134
  %4707 = vmatpush1.bf16.msra.mxu0 %v4133
  %4708 = vmatprep.subr.bf16.mxu0 %v4141
  %4709 = vmatpush1.bf16.msra.mxu0 %v4140
  %4710 = vmatprep.subr.bf16.mxu0 %v4148
  %4711 = vmatpush1.bf16.msra.mxu0 %v4147
  %4712 = vmatprep.subr.bf16.mxu0 %v4155
  %4713 = vmatpush1.bf16.msra.mxu0 %v4154
  %4714 = vmatprep.subr.bf16.mxu0 %v4162
  %4715 = vmatpush1.bf16.msra.mxu0 %v4161
  %4716 = vmatprep.subr.bf16.mxu0 %v4169
  %4717 = vmatpush1.bf16.msra.mxu0 %v4168
  %4718 = vmatprep.subr.bf16.mxu0 %v4176
  %4719 = vmatpush1.bf16.msra.mxu0 %v4175
  %4720 = vmatprep.subr.bf16.mxu0 %v4183
  %4721 = vmatpush1.bf16.msra.mxu0 %v4182
  %4722 = vmatprep.subr.bf16.mxu0 %v4190
  %4723 = vmatpush1.bf16.msra.mxu0 %v4189
  %4724 = vmatprep.mubr.bf16.mxu0 %v3080
  %4725 = vmatmul.mubr.bf16.gmra.mrb[0].mxu0 %v3079
  %v4726 = vpop.f32.mrb[0].mxu0
  %v4727 = vadd.f32 %v3360, %v4726
  %v4728 = vpop.f32.mrb[0].mxu0
  %v4729 = vadd.f32 %v3364, %v4728
  %v4730 = vpop.f32.mrb[0].mxu0
  %v4731 = vpop.f32.mrb[0].mxu0
  %4732 = vdwg.mxu0
  %4733 = vmatprep.subr.bf16.mxu0 %v4197
  %4734 = vmatpush1.bf16.msra.mxu0 %v4196
  %4735 = vmatprep.subr.bf16.mxu0 %v4204
  %4736 = vmatpush1.bf16.msra.mxu0 %v4203
  %4737 = vmatprep.subr.bf16.mxu0 %v4211
  %4738 = vmatpush1.bf16.msra.mxu0 %v4210
  %4739 = vmatprep.subr.bf16.mxu0 %v4218
  %4740 = vmatpush1.bf16.msra.mxu0 %v4217
  %4741 = vmatprep.subr.bf16.mxu0 %v4225
  %4742 = vmatpush1.bf16.msra.mxu0 %v4224
  %4743 = vmatprep.subr.bf16.mxu0 %v4232
  %4744 = vmatpush1.bf16.msra.mxu0 %v4231
  %4745 = vmatprep.subr.bf16.mxu0 %v4239
  %4746 = vmatpush1.bf16.msra.mxu0 %v4238
  %4747 = vmatprep.subr.bf16.mxu0 %v4246
  %4748 = vmatpush1.bf16.msra.mxu0 %v4245
  %4749 = vmatprep.subr.bf16.mxu0 %v4253
  %4750 = vmatpush1.bf16.msra.mxu0 %v4252
  %4751 = vmatprep.subr.bf16.mxu0 %v4260
  %4752 = vmatpush1.bf16.msra.mxu0 %v4259
  %4753 = vmatprep.subr.bf16.mxu0 %v4267
  %4754 = vmatpush1.bf16.msra.mxu0 %v4266
  %4755 = vmatprep.subr.bf16.mxu0 %v4274
  %4756 = vmatpush1.bf16.msra.mxu0 %v4273
  %4757 = vmatprep.subr.bf16.mxu0 %v4281
  %4758 = vmatpush1.bf16.msra.mxu0 %v4280
  %4759 = vmatprep.subr.bf16.mxu0 %v4288
  %4760 = vmatpush1.bf16.msra.mxu0 %v4287
  %4761 = vmatprep.subr.bf16.mxu0 %v4295
  %4762 = vmatpush1.bf16.msra.mxu0 %v4294
  %4763 = vmatprep.subr.bf16.mxu0 %v4302
  %4764 = vmatpush1.bf16.msra.mxu0 %v4301
  %4765 = vmatprep.mubr.bf16.mxu0 %v3082
  %4766 = vmatmul.mubr.bf16.gmra.mrb[0].mxu0 %v3081
  %v4767 = vpop.f32.mrb[0].mxu0
  %v4768 = vadd.f32 %v4727, %v4767
  %v4769 = vpop.f32.mrb[0].mxu0
  %v4770 = vadd.f32 %v4729, %v4769
  %v4771 = vpop.f32.mrb[0].mxu0
  %v4772 = vpop.f32.mrb[0].mxu0
  %4773 = vdwg.mxu0
  %4774 = vmatprep.subr.bf16.mxu0 0
  %4775 = vmatpush1.bf16.msra.mxu0 %v4086
  %4776 = vmatprep.subr.bf16.mxu0 0
  %4777 = vmatpush1.bf16.msra.mxu0 %v4093
  %4778 = vmatprep.subr.bf16.mxu0 0
  %4779 = vmatpush1.bf16.msra.mxu0 %v4100
  %4780 = vmatprep.subr.bf16.mxu0 0
  %4781 = vmatpush1.bf16.msra.mxu0 %v4107
  %4782 = vmatprep.subr.bf16.mxu0 0
  %4783 = vmatpush1.bf16.msra.mxu0 %v4114
  %4784 = vmatprep.subr.bf16.mxu0 0
  %4785 = vmatpush1.bf16.msra.mxu0 %v4121
  %4786 = vmatprep.subr.bf16.mxu0 0
  %4787 = vmatpush1.bf16.msra.mxu0 %v4128
  %4788 = vmatprep.subr.bf16.mxu0 0
  %4789 = vmatpush1.bf16.msra.mxu0 %v4135
  %4790 = vmatprep.subr.bf16.mxu0 0
  %4791 = vmatpush1.bf16.msra.mxu0 %v4142
  %4792 = vmatprep.subr.bf16.mxu0 0
  %4793 = vmatpush1.bf16.msra.mxu0 %v4149
  %4794 = vmatprep.subr.bf16.mxu0 0
  %4795 = vmatpush1.bf16.msra.mxu0 %v4156
  %4796 = vmatprep.subr.bf16.mxu0 0
  %4797 = vmatpush1.bf16.msra.mxu0 %v4163
  %4798 = vmatprep.subr.bf16.mxu0 0
  %4799 = vmatpush1.bf16.msra.mxu0 %v4170
  %4800 = vmatprep.subr.bf16.mxu0 0
  %4801 = vmatpush1.bf16.msra.mxu0 %v4177
  %4802 = vmatprep.subr.bf16.mxu0 0
  %4803 = vmatpush1.bf16.msra.mxu0 %v4184
  %4804 = vmatprep.subr.bf16.mxu0 0
  %4805 = vmatpush1.bf16.msra.mxu0 %v4191
  %4806 = vmatprep.mubr.bf16.mxu0 %v3080
  %4807 = vmatmul.mubr.bf16.gmra.mrb[0].mxu0 %v3079
  %v4808 = vpop.f32.mrb[0].mxu0
  %v4809 = vadd.f32 %v3368, %v4808
  %v4810 = vpop.f32.mrb[0].mxu0
  %v4811 = vpop.f32.mrb[0].mxu0
  %v4812 = vpop.f32.mrb[0].mxu0
  %4813 = vdwg.mxu0
  %4814 = vmatprep.subr.bf16.mxu0 0
  %4815 = vmatpush1.bf16.msra.mxu0 %v4198
  %4816 = vmatprep.subr.bf16.mxu0 0
  %4817 = vmatpush1.bf16.msra.mxu0 %v4205
  %4818 = vmatprep.subr.bf16.mxu0 0
  %4819 = vmatpush1.bf16.msra.mxu0 %v4212
  %4820 = vmatprep.subr.bf16.mxu0 0
  %4821 = vmatpush1.bf16.msra.mxu0 %v4219
  %4822 = vmatprep.subr.bf16.mxu0 0
  %4823 = vmatpush1.bf16.msra.mxu0 %v4226
  %4824 = vmatprep.subr.bf16.mxu0 0
  %4825 = vmatpush1.bf16.msra.mxu0 %v4233
  %4826 = vmatprep.subr.bf16.mxu0 0
  %4827 = vmatpush1.bf16.msra.mxu0 %v4240
  %4828 = vmatprep.subr.bf16.mxu0 0
  %4829 = vmatpush1.bf16.msra.mxu0 %v4247
  %4830 = vmatprep.subr.bf16.mxu0 0
  %4831 = vmatpush1.bf16.msra.mxu0 %v4254
  %4832 = vmatprep.subr.bf16.mxu0 0
  %4833 = vmatpush1.bf16.msra.mxu0 %v4261
  %4834 = vmatprep.subr.bf16.mxu0 0
  %4835 = vmatpush1.bf16.msra.mxu0 %v4268
  %4836 = vmatprep.subr.bf16.mxu0 0
  %4837 = vmatpush1.bf16.msra.mxu0 %v4275
  %4838 = vmatprep.subr.bf16.mxu0 0
  %4839 = vmatpush1.bf16.msra.mxu0 %v4282
  %4840 = vmatprep.subr.bf16.mxu0 0
  %4841 = vmatpush1.bf16.msra.mxu0 %v4289
  %4842 = vmatprep.subr.bf16.mxu0 0
  %4843 = vmatpush1.bf16.msra.mxu0 %v4296
  %4844 = vmatprep.subr.bf16.mxu0 0
  %4845 = vmatpush1.bf16.msra.mxu0 %v4303
  %4846 = vmatprep.mubr.bf16.mxu0 %v3082
  %4847 = vmatmul.mubr.bf16.gmra.mrb[0].mxu0 %v3081
  %v4848 = vpop.f32.mrb[0].mxu0
  %v4849 = vadd.f32 %v4809, %v4848
  %v4850 = vpop.f32.mrb[0].mxu0
  %v4851 = vpop.f32.mrb[0].mxu0
  %v4852 = vpop.f32.mrb[0].mxu0
  %4853 = vdwg.mxu0
  %v4854 = vmul.f32 %v4604, 0.5
  %v4855 = vmul.f32 %v4606, 0.5
  %v4856 = vmul.f32 %v4686, 0.5
  %v4857 = vmul.f32 %v4688, 0.5
  %v4858 = vmul.f32 %v4768, 0.5
  %v4859 = vmul.f32 %v4770, 0.5
  %v4860 = vmul.f32 %v4849, 0.5
  %v4861 = vtanh.pop %v4854
  %v4862 = vtanh.pop %v4855
  %v4863 = vtanh.pop %v4856
  %v4864 = vtanh.pop %v4857
  %v4865 = vtanh.pop %v4858
  %v4866 = vtanh.pop %v4859
  %v4867 = vtanh.pop %v4860
  %v4868 = vmul.f32 %v4861, 0.5
  %v4869 = vmul.f32 %v4862, 0.5
  %v4870 = vmul.f32 %v4863, 0.5
  %v4871 = vmul.f32 %v4864, 0.5
  %v4872 = vmul.f32 %v4865, 0.5
  %v4873 = vmul.f32 %v4866, 0.5
  %v4874 = vmul.f32 %v4867, 0.5
  %v4875 = vadd.f32 %v4868, 0.5
  %v4876 = vadd.f32 %v4869, 0.5
  %v4877 = vadd.f32 %v4870, 0.5
  %v4878 = vadd.f32 %v4871, 0.5
  %v4879 = vadd.f32 %v4872, 0.5
  %v4880 = vadd.f32 %v4873, 0.5
  %v4881 = vadd.f32 %v4874, 0.5
  %4882 = vst [vmem:[%s13] sm:$0xff] %v4875
  %4883 = vst [vmem:[%s13 + $0x8] sm:$0xff] %v4876
  %4884 = vst [vmem:[%s13 + $0x10] sm:$0xff] %v4877
  %4885 = vst [vmem:[%s13 + $0x18] sm:$0xff] %v4878
  %4886 = vst [vmem:[%s13 + $0x20] sm:$0xff] %v4879
  %4887 = vst [vmem:[%s13 + $0x28] sm:$0xff] %v4880
  %4888 = vst [vmem:[%s13 + $0x30] sm:$0xff] %v4881
  // Predicated region
  $region54: #{ae_forward.1} parent=0 // pred_check
    _
  $region55: #{ae_forward.1} parent=0 // pred_check_branch
    %4890 = sbr.rel (0) target = $region57
  $region56: #{ae_forward.1} parent=0 // pred_region
    _
  $region57: #{ae_forward.1} parent=0 // pred_fallthru
    _
  // Predicated region
  $region58: #{ae_forward.1} parent=0 // pred_check
    _
  $region59: #{ae_forward.1} parent=0 // pred_check_branch
    %4892 = sbr.rel (0) target = $region61
  $region60: #{ae_forward.1} parent=0 // pred_region
    _
  $region61: #{ae_forward.1} parent=0 // pred_fallthru
    _

</llo_original>
